<compile_context>
chip_gen: v7x
topology: tpu7x:2x2x1
jax: 0.10.0
libtpu: 0.0.40
codegen_flags: <defaults>
</compile_context>

<pallas_src>
import functools

import jax
import jax.numpy as jnp
from jax.experimental import pallas as pl
from jax.experimental.pallas import tpu as pltpu


# ----------------------------------------------------------------------------
# One-time setup (hoisted out of the per-episode forward)
# ----------------------------------------------------------------------------
def make_backbone_gemm_weight(w, b, H, W):
    """Exact block-Toeplitz GEMM weight (bf16) for Conv2d(k=3, padding=1).

    w: (Cout, Cin, 3, 3) PyTorch-layout kernel, b: (Cout,) bias.
    Returns (P_pad, H*W*Cout) bf16 with
        out[(h*W+w)*Cout + co] =
            sum_{ky,kx,ci} xpad[((h+ky)*(W+2)+(w+kx))*Cin + ci] * w[co,ci,ky,kx]
    and the bias folded into row index P (the input carries a 1.0 there).
    """
    w = jnp.asarray(w, jnp.float32)
    b = jnp.asarray(b, jnp.float32)
    Cout, Cin, KH, KW = w.shape
    Dout = H * W * Cout
    P = (H + 2) * (W + 2) * Cin                      # padded-image feature count
    P_pad = ((P + 1 + 127) // 128) * 128             # +1 slot for folded bias

    h, ww, ky, kx, ci, co = jnp.meshgrid(
        jnp.arange(H), jnp.arange(W), jnp.arange(KH), jnp.arange(KW),
        jnp.arange(Cin), jnp.arange(Cout), indexing="ij")
    out_idx = ((h * W + ww) * Cout + co).reshape(-1)
    in_idx = (((h + ky) * (W + 2) + (ww + kx)) * Cin + ci).reshape(-1)
    vals = w[co.reshape(-1), ci.reshape(-1), ky.reshape(-1), kx.reshape(-1)]

    wt = jnp.zeros((P_pad, Dout), jnp.bfloat16)
    wt = wt.at[in_idx, out_idx].set(vals.astype(jnp.bfloat16))
    wt = wt.at[P, :].set(jnp.tile(b, H * W).astype(jnp.bfloat16))   # bias row
    return wt


# ----------------------------------------------------------------------------
# Fused kernel: conv-GEMM + ReLU + prototypes + squared-L2 + log_softmax
# ----------------------------------------------------------------------------
def _protonet_fused_kernel(x_ref, w_ref, onehot_ref, out_ref, dist_acc):
    # x_ref:      (M, P_pad)   bf16  padded+flattened images (+ 1.0 bias column)
    # w_ref:      (P_pad, TN)  bf16  block-Toeplitz conv weight, Dout tile j
    # onehot_ref: (K, M)       f32   one-hot(label)/count; zero for query rows
    # out_ref:    (M, K)       f32   log_softmax(-dist) for every image row
    # dist_acc:   (M, K)       f32   VMEM scratch, accumulated across Dout tiles
    j = pl.program_id(0)

    @pl.when(j == 0)
    def _():
        dist_acc[...] = jnp.zeros_like(dist_acc)

    # Backbone for this Dout tile: conv-as-GEMM (bias folded in) + ReLU.
    emb = jnp.maximum(
        jnp.dot(x_ref[...], w_ref[...], preferred_element_type=jnp.float32),
        0.0)                                                        # (M, TN) f32

    # Class prototypes for this Dout tile (1/count folded into the one-hot).
    proto = jnp.dot(onehot_ref[...], emb,
                    preferred_element_type=jnp.float32)             # (K, TN)

    # Partial squared-L2 distance over this tile: ||e||^2 + ||p||^2 - 2 e.p
    ep = jax.lax.dot_general(emb, proto, (((1,), (1,)), ((), ())),
                             preferred_element_type=jnp.float32)    # (M, K)
    e2 = jnp.sum(emb * emb, axis=-1, keepdims=True)                 # (M, 1)
    p2 = jnp.sum(proto * proto, axis=-1, keepdims=True)             # (K, 1)
    dist_acc[...] += e2 + p2.T - 2.0 * ep

    @pl.when(j == pl.num_programs(0) - 1)
    def _():
        logits = -dist_acc[...]
        m = jnp.max(logits, axis=1, keepdims=True)
        lse = jnp.log(jnp.sum(jnp.exp(logits - m), axis=1, keepdims=True)) + m
        out_ref[...] = logits - lse


def protonet_scores(x_flat_bf, w_toep_bf, onehot_mean):
    M, P_pad = x_flat_bf.shape
    _, Dout = w_toep_bf.shape
    K = onehot_mean.shape[0]

    tile_n = 1024 if (Dout % 1024 == 0) else Dout    # stream weight over Dout
    grid = (Dout // tile_n,)

    flops = 2 * M * P_pad * Dout + 4 * M * K * Dout
    bytes_accessed = (x_flat_bf.size * 2 + w_toep_bf.size * 2
                      + onehot_mean.size * 4 + M * K * 4)

    return pl.pallas_call(
        _protonet_fused_kernel,
        out_shape=jax.ShapeDtypeStruct((M, K), jnp.float32),
        grid=grid,
        in_specs=[
            pl.BlockSpec((M, P_pad), lambda j: (0, 0)),       # images: resident
            pl.BlockSpec((P_pad, tile_n), lambda j: (0, j)),  # weight: streamed
            pl.BlockSpec((K, M), lambda j: (0, 0)),           # one-hot: resident
        ],
        out_specs=pl.BlockSpec((M, K), lambda j: (0, 0)),
        scratch_shapes=[pltpu.VMEM((M, K), jnp.float32)],
        compiler_params=pltpu.CompilerParams(
            dimension_semantics=("arbitrary",)),              # Dout axis accumulates
        cost_estimate=pl.CostEstimate(
            flops=flops, transcendentals=M * K,
            bytes_accessed=bytes_accessed),
    )(x_flat_bf, w_toep_bf, onehot_mean)


# ----------------------------------------------------------------------------
# Forward pass
# ----------------------------------------------------------------------------
def _flatten_images(x_nchw, p_pad):
    """NCHW -> NHWC -> zero-pad (conv padding=1) -> flatten; append bias column."""
    N, Cin, H, W = x_nchw.shape
    x = jnp.transpose(x_nchw, (0, 2, 3, 1))
    xp = jnp.pad(x, ((0, 0), (1, 1), (1, 1), (0, 0)))
    P = (H + 2) * (W + 2) * Cin
    x_flat = xp.reshape(N, P)
    x_flat = jnp.pad(x_flat, ((0, 0), (0, p_pad - P)))
    x_flat = x_flat.at[:, P].set(1.0)      # matches the folded-bias weight row
    return x_flat


@functools.partial(jax.jit, static_argnames=("num_classes",))
def protonet_forward(support_data, query_data, support_label, w_toep_bf,
                     num_classes):
    Ns = support_data.shape[0]
    Nq = query_data.shape[0]
    N = Ns + Nq
    P_pad = w_toep_bf.shape[0]

    # One fused kernel for support + query.
    x_all = jnp.concatenate([support_data, query_data], axis=0)
    x_flat = _flatten_images(x_all, P_pad)
    M = ((N + 7) // 8) * 8                              # sublane-align row count
    x_flat = jnp.pad(x_flat, ((0, M - N), (0, 0))).astype(jnp.bfloat16)

    # TODO(synk): torch `support_label.unique()` is data-dependent; we assume
    # the episode contains classes 0..num_classes-1 (sorted-unique order).
    classes = jnp.arange(num_classes)
    onehot = (support_label[None, :] == classes[:, None]).astype(jnp.float32)
    counts = jnp.maximum(jnp.sum(onehot, axis=1, keepdims=True), 1.0)
    onehot_mean = onehot / counts                       # fold 1/count into matmul
    onehot_mean = jnp.pad(onehot_mean, ((0, 0), (0, M - Ns)))   # zero query rows

    scores_all = protonet_scores(x_flat, w_toep_bf, onehot_mean)   # (M, K)
    return scores_all[Ns:N]                                        # query rows


if __name__ == "__main__":
    key = jax.random.PRNGKey(0)
    k1, k2, k3, k4 = jax.random.split(key, 4)

    Cin, Cout, H, W = 4, 8, 16, 16
    K, shots, Nq = 5, 4, 12
    Ns = K * shots

    support_data = jax.random.normal(k1, (Ns, Cin, H, W), jnp.float32)
    query_data = jax.random.normal(k2, (Nq, Cin, H, W), jnp.float32)
    support_label = jnp.repeat(jnp.arange(K, dtype=jnp.int32), shots)

    # Deterministic backbone params (Conv2d(Cin, Cout, 3, padding=1) + ReLU).
    w = jax.random.normal(k3, (Cout, Cin, 3, 3), jnp.float32) * 0.1
    b = jax.random.normal(k4, (Cout,), jnp.float32) * 0.1

    # Hoisted one-time setup: block-Toeplitz GEMM weight, built directly in bf16.
    w_toep_bf = jax.block_until_ready(make_backbone_gemm_weight(w, b, H, W))

    scores = protonet_forward(support_data, query_data, support_label,
                              w_toep_bf, num_classes=K)
    jax.block_until_ready(scores)

    assert scores.shape == (Nq, K)
    # rows of log_softmax must exp-sum to 1
    assert jnp.allclose(jnp.sum(jnp.exp(scores), axis=1), 1.0, atol=1e-3)
    print("KERNEL_OK")
</pallas_src>

<mosaic_0001>
module attributes {stable_mosaic.version = 11 : i64} {
  func.func @_protonet_fused_kernel(%arg0: i32, %arg1: memref<32x1408xbf16, #tpu.memory_space<vmem>>, %arg2: memref<1408x1024xbf16, #tpu.memory_space<vmem>>, %arg3: memref<5x32xf32, #tpu.memory_space<vmem>>, %arg4: memref<32x5xf32, #tpu.memory_space<vmem>>, %arg5: memref<32x5xf32, #tpu.memory_space<vmem>>) attributes {dimension_semantics = [#tpu.dimension_semantics<arbitrary>], iteration_bounds = array<i64: 2>, scalar_prefetch = 0 : i64, scratch_operands = 1 : i64, tpu.core_type = #tpu.core_type<tc>, window_params = [{pipeline_mode = #tpu.pipeline_mode<synchronous>, transform_indices = @transform_0, window_bounds = array<i64: 32, 1408>}, {transform_indices = @transform_1, window_bounds = array<i64: 1408, 1024>}, {pipeline_mode = #tpu.pipeline_mode<synchronous>, transform_indices = @transform_2, window_bounds = array<i64: 5, 32>}, {pipeline_mode = #tpu.pipeline_mode<synchronous>, transform_indices = @transform_3, window_bounds = array<i64: 32, 5>}]} {
    %c0_i32 = arith.constant 0 : i32
    %0 = arith.cmpi eq, %arg0, %c0_i32 : i32
    %1 = arith.extui %0 : i1 to i32
    %c0_i32_0 = arith.constant 0 : i32
    %2 = arith.cmpi ne, %1, %c0_i32_0 : i32
    scf.if %2 {
      %cst_17 = arith.constant 0.000000e+00 : f32
      %30 = vector.broadcast %cst_17 : f32 to vector<32x5xf32>
      %c0_18 = arith.constant 0 : index
      %c0_19 = arith.constant 0 : index
      %31 = vector.load %arg5[%c0_18, %c0_19] : memref<32x5xf32, #tpu.memory_space<vmem>>, vector<32x5xf32>
      tpu.vector_store %arg5[%c0_18, %c0_19], %30 {strides = array<i32>} : memref<32x5xf32, #tpu.memory_space<vmem>>, vector<32x5xf32>,
    } else {
    }
    %c0 = arith.constant 0 : index
    %c0_1 = arith.constant 0 : index
    %3 = vector.load %arg1[%c0, %c0_1] : memref<32x1408xbf16, #tpu.memory_space<vmem>>, vector<32x1408xbf16>
    %c0_2 = arith.constant 0 : index
    %c0_3 = arith.constant 0 : index
    %4 = vector.load %arg2[%c0_2, %c0_3] : memref<1408x1024xbf16, #tpu.memory_space<vmem>>, vector<1408x1024xbf16>
    %cst = arith.constant dense<0.000000e+00> : vector<32x1024xf32>
    %5 = tpu.matmul %3, %4, %cst {dimension_numbers = #tpu.dot_dimension_numbers<[1], [0], [0], [1], [0, 0, 1, 1], [], []>} : vector<32x1408xbf16>, vector<1408x1024xbf16>, vector<32x1024xf32> -> vector<32x1024xf32>
    %cst_4 = arith.constant 0.000000e+00 : f32
    %6 = vector.broadcast %cst_4 : f32 to vector<32x1024xf32>
    %7 = arith.maximumf %5, %6 : vector<32x1024xf32>
    %c0_5 = arith.constant 0 : index
    %c0_6 = arith.constant 0 : index
    %8 = vector.load %arg3[%c0_5, %c0_6] : memref<5x32xf32, #tpu.memory_space<vmem>>, vector<5x32xf32>
    %cst_7 = arith.constant dense<0.000000e+00> : vector<5x1024xf32>
    %9 = tpu.matmul %8, %7, %cst_7 {dimension_numbers = #tpu.dot_dimension_numbers<[1], [0], [0], [1], [0, 0, 1, 1], [], []>} : vector<5x32xf32>, vector<32x1024xf32>, vector<5x1024xf32> -> vector<5x1024xf32>
    %cst_8 = arith.constant dense<0.000000e+00> : vector<32x5xf32>
    %10 = tpu.matmul %7, %9, %cst_8 {dimension_numbers = #tpu.dot_dimension_numbers<[1], [1], [0], [0], [0, 0, 1, 0], [], []>} : vector<32x1024xf32>, vector<5x1024xf32>, vector<32x5xf32> -> vector<32x5xf32>
    %11 = arith.mulf %7, %7 : vector<32x1024xf32>
    %cst_9 = arith.constant dense<0.000000e+00> : vector<32xf32>
    %12 = vector.multi_reduction <add>, %11, %cst_9 [1] : vector<32x1024xf32> to vector<32xf32>
    %13 = vector.shape_cast %12 : vector<32xf32> to vector<32x1xf32>
    %14 = arith.mulf %9, %9 : vector<5x1024xf32>
    %cst_10 = arith.constant dense<0.000000e+00> : vector<5xf32>
    %15 = vector.multi_reduction <add>, %14, %cst_10 [1] : vector<5x1024xf32> to vector<5xf32>
    %16 = vector.shape_cast %15 : vector<5xf32> to vector<5x1xf32>
    %c0_11 = arith.constant 0 : index
    %c0_12 = arith.constant 0 : index
    %17 = vector.load %arg5[%c0_11, %c0_12] : memref<32x5xf32, #tpu.memory_space<vmem>>, vector<32x5xf32>
    %18 = tpu.transpose %16, [1, 0] : vector<5x1xf32> -> vector<1x5xf32>
    %19 = vector.broadcast %13 : vector<32x1xf32> to vector<32x5xf32>
    %20 = vector.broadcast %18 : vector<1x5xf32> to vector<32x5xf32>
    %21 = arith.addf %19, %20 : vector<32x5xf32>
    %cst_13 = arith.constant 2.000000e+00 : f32
    %22 = vector.broadcast %cst_13 : f32 to vector<32x5xf32>
    %23 = arith.mulf %22, %10 : vector<32x5xf32>
    %24 = arith.subf %21, %23 : vector<32x5xf32>
    %25 = arith.addf %17, %24 : vector<32x5xf32>
    %c0_14 = arith.constant 0 : index
    %c0_15 = arith.constant 0 : index
    %26 = vector.load %arg5[%c0_14, %c0_15] : memref<32x5xf32, #tpu.memory_space<vmem>>, vector<32x5xf32>
    tpu.vector_store %arg5[%c0_14, %c0_15], %25 {strides = array<i32>} : memref<32x5xf32, #tpu.memory_space<vmem>>, vector<32x5xf32>,
    %c1_i32 = arith.constant 1 : i32
    %27 = arith.cmpi eq, %arg0, %c1_i32 : i32
    %28 = arith.extui %27 : i1 to i32
    %c0_i32_16 = arith.constant 0 : i32
    %29 = arith.cmpi ne, %28, %c0_i32_16 : i32
    scf.if %29 {
      %c0_17 = arith.constant 0 : index
      %c0_18 = arith.constant 0 : index
      %30 = vector.load %arg5[%c0_17, %c0_18] : memref<32x5xf32, #tpu.memory_space<vmem>>, vector<32x5xf32>
      %cst_19 = arith.constant 0.000000e+00 : f32
      %31 = vector.broadcast %cst_19 : f32 to vector<32x5xf32>
      %32 = arith.subf %31, %30 : vector<32x5xf32>
      %cst_20 = arith.constant dense<0xFF800000> : vector<32xf32>
      %33 = vector.multi_reduction <maximumf>, %32, %cst_20 [1] : vector<32x5xf32> to vector<32xf32>
      %34 = vector.shape_cast %33 : vector<32xf32> to vector<32x1xf32>
      %35 = vector.broadcast %34 : vector<32x1xf32> to vector<32x5xf32>
      %36 = arith.subf %32, %35 : vector<32x5xf32>
      %37 = math.exp %36 : vector<32x5xf32>
      %cst_21 = arith.constant dense<0.000000e+00> : vector<32xf32>
      %38 = vector.multi_reduction <add>, %37, %cst_21 [1] : vector<32x5xf32> to vector<32xf32>
      %39 = vector.shape_cast %38 : vector<32xf32> to vector<32x1xf32>
      %40 = math.log %39 : vector<32x1xf32>
      %41 = arith.addf %40, %34 : vector<32x1xf32>
      %42 = vector.broadcast %41 : vector<32x1xf32> to vector<32x5xf32>
      %43 = arith.subf %32, %42 : vector<32x5xf32>
      %c0_22 = arith.constant 0 : index
      %c0_23 = arith.constant 0 : index
      %44 = vector.load %arg4[%c0_22, %c0_23] : memref<32x5xf32, #tpu.memory_space<vmem>>, vector<32x5xf32>
      tpu.vector_store %arg4[%c0_22, %c0_23], %43 {strides = array<i32>} : memref<32x5xf32, #tpu.memory_space<vmem>>, vector<32x5xf32>,
    } else {
    }
    return
  }
  func.func @transform_0(%arg0: i32) -> (i32, i32) {
    %c0_i32 = arith.constant 0 : i32
    %c0_i32_0 = arith.constant 0 : i32
    %c0_i32_1 = arith.constant 0 : i32
    return %c0_i32, %c0_i32_0 : i32, i32
  }
  func.func @transform_1(%arg0: i32) -> (i32, i32) {
    %c0_i32 = arith.constant 0 : i32
    %c0_i32_0 = arith.constant 0 : i32
    return %c0_i32, %arg0 : i32, i32
  }
  func.func @transform_2(%arg0: i32) -> (i32, i32) {
    %c0_i32 = arith.constant 0 : i32
    %c0_i32_0 = arith.constant 0 : i32
    %c0_i32_1 = arith.constant 0 : i32
    return %c0_i32, %c0_i32_0 : i32, i32
  }
  func.func @transform_3(%arg0: i32) -> (i32, i32) {
    %c0_i32 = arith.constant 0 : i32
    %c0_i32_0 = arith.constant 0 : i32
    %c0_i32_1 = arith.constant 0 : i32
    return %c0_i32, %c0_i32_0 : i32, i32
  }
}

</mosaic_0001>

<llo_original>
// kernel: protonet_forward.1
$region0: #{protonet_forward.1}
  #allocation0 [shape = 'u32[]', space=smem, size = 0x4, offset = 0x4, fixed_abs, tag = 'smem constant byte address 0x4 - core index']
  #allocation1 [shape = 'u32[144,128]{1,0:T(1,128)}', space=vmem, size = 0x12000, scoped, tag = 'internal scratch']
  #allocation2 [shape = 'f32[32,5]{1,0:T(8,128)}', space=vmem, size = 0x4000, scoped, tag = 'scratch operand']
  %s0 = inlined_call_operand.vmem [shape: bf16[32,1408], index: 0, kind: input, shape index: {}]
  %s1 = inlined_call_operand.hbm [shape: bf16[1408,2048], index: 1, kind: input, shape index: {}]
  %s2 = inlined_call_operand.vmem [shape: f32[5,32], index: 2, kind: input, shape index: {}]
  %s3 = inlined_call_operand.vmem [shape: f32[32,5], index: 3, kind: output, shape index: {}]
  %s4 = sld [smem:[#allocation0]]
  $region57: #{protonet_forward.1} parent=0
    _
  %s6 = ssub.s32 1, %s4
  %s7 = scalar_select 0, %s6, %s4
  $region1: #{protonet_forward.1} parent=0
    #allocation3 [shape = 'u8[5767168]{0}', space=vmem, size = 0x580000, scoped, tag = 'input window, operand 1']
    #allocation4 [shape = 's32[2]{0}', space=sflag, size = 0x8, scoped, tag = 'scoped memory for protonet_forward.1']
    %8 = vsyncpa [#allocation4], 0
    %s9 = scalar_lea.sflag [#allocation4], 1
    %10 = vsyncpa %s9, 0
    loop: start=0, step=1, limit=4
    $region2: #{protonet_forward.1} parent=1 // loop_pre_header
      _
    $region3: #{protonet_forward.1} parent=1 // loop_header
      %s12 = sphi 0, %s16
      %p13 = scmp.ge.s32.totalorder %s12, 4
      %s20 = sphi 0, %s20
      %s22 = sphi 0, %s20
      %s23 = sphi 0, %s22
      %s37 = sphi 0, %s23
      %s43 = sphi 0, %s45
      %s46 = sphi 0, %s43
      %s47 = sphi 0, %s46
      %s63 = sphi 0, %s47
      %s67 = sphi 0, %s67
      %s69 = sphi 0, %s67
      %s70 = sphi 0, %s69
      %s84 = sphi 0, %s70
      %s88 = sphi 0, %s88
      %s90 = sphi 0, %s88
      %s91 = sphi 0, %s90
      %s105 = sphi 0, %s91
    $region4: #{protonet_forward.1} parent=1 // loop_header_branch
      %15 = sbr.rel (%p13) target = $region8
    $region5: #{protonet_forward.1} parent=1 // loop_body
      %s17 = ssub.s32 %s12, 1
      %s18 = ssub.s32 %s12, 2
      %s19 = sadd.s32 %s12, 1
      %s21 = sadd.s32 %s20, 1
      %p24 = scmp.eq.s32.totalorder %s12, 1
      %p25 = scmp.ne.s32.totalorder %s20, %s22
      %p26 = scmp.eq.s32.totalorder %s12, 0
      %p27 = por %p25, %p26
      %p28 = scmp.ne.s32.totalorder %s20, %s22
      %p29 = scmp.eq.s32.totalorder %s17, 1
      %p30 = por %p28, %p29
      %p31 = scmp.ne.s32.totalorder %s22, %s23
      %p32 = scmp.eq.s32.totalorder %s17, 0
      %p33 = por %p31, %p32
      %p34 = scmp.ne.s32.totalorder %s22, %s23
      %p35 = scmp.eq.s32.totalorder %s18, 1
      %p36 = por %p34, %p35
      %p38 = scmp.ne.s32.totalorder %s23, %s37
      %p39 = scmp.eq.s32.totalorder %s18, 0
      %p40 = por %p38, %p39
      %s41 = ssub.s32 %s12, %s19
      %p42 = scmp.eq.s32.totalorder %s41, 0
      %s44 = sadd.s32 %s43, 1
      %s45 = scalar_select %p42, %s43, %s44
      %p48 = pneg %p42
      %p49 = scmp.eq.s32.totalorder %s12, 1
      %p50 = por %p48, %p49
      %p51 = scmp.ne.s32.totalorder %s43, %s46
      %p52 = scmp.eq.s32.totalorder %s12, 0
      %p53 = por %p51, %p52
      %p54 = scmp.ne.s32.totalorder %s43, %s46
      %p55 = scmp.eq.s32.totalorder %s17, 1
      %p56 = por %p54, %p55
      %p57 = scmp.ne.s32.totalorder %s46, %s47
      %p58 = scmp.eq.s32.totalorder %s17, 0
      %p59 = por %p57, %p58
      %p60 = scmp.ne.s32.totalorder %s46, %s47
      %p61 = scmp.eq.s32.totalorder %s18, 1
      %p62 = por %p60, %p61
      %p64 = scmp.ne.s32.totalorder %s47, %s63
      %p65 = scmp.eq.s32.totalorder %s18, 0
      %p66 = por %p64, %p65
      %s68 = sadd.s32 %s67, 1
      %p71 = scmp.eq.s32.totalorder %s12, 1
      %p72 = scmp.ne.s32.totalorder %s67, %s69
      %p73 = scmp.eq.s32.totalorder %s12, 0
      %p74 = por %p72, %p73
      %p75 = scmp.ne.s32.totalorder %s67, %s69
      %p76 = scmp.eq.s32.totalorder %s17, 1
      %p77 = por %p75, %p76
      %p78 = scmp.ne.s32.totalorder %s69, %s70
      %p79 = scmp.eq.s32.totalorder %s17, 0
      %p80 = por %p78, %p79
      %p81 = scmp.ne.s32.totalorder %s69, %s70
      %p82 = scmp.eq.s32.totalorder %s18, 1
      %p83 = por %p81, %p82
      %p85 = scmp.ne.s32.totalorder %s70, %s84
      %p86 = scmp.eq.s32.totalorder %s18, 0
      %p87 = por %p85, %p86
      %s89 = sadd.s32 %s88, 1
      %p92 = scmp.eq.s32.totalorder %s12, 1
      %p93 = scmp.ne.s32.totalorder %s88, %s90
      %p94 = scmp.eq.s32.totalorder %s12, 0
      %p95 = por %p93, %p94
      %p96 = scmp.ne.s32.totalorder %s88, %s90
      %p97 = scmp.eq.s32.totalorder %s17, 1
      %p98 = por %p96, %p97
      %p99 = scmp.ne.s32.totalorder %s90, %s91
      %p100 = scmp.eq.s32.totalorder %s17, 0
      %p101 = por %p99, %p100
      %p102 = scmp.ne.s32.totalorder %s90, %s91
      %p103 = scmp.eq.s32.totalorder %s18, 1
      %p104 = por %p102, %p103
      %p106 = scmp.ne.s32.totalorder %s91, %s105
      %p107 = scmp.eq.s32.totalorder %s18, 0
      %p108 = por %p106, %p107
      %p109 = scmp.le.s32.totalorder 1, %s12
      %p110 = scmp.lt.s32.totalorder %s12, 3
      %p111 = pnand %p109, %p110
      %p112 = pneg %p111
      // Predicated region
      $region9: #{protonet_forward.1} parent=5 // pred_check
        _
      $region10: #{protonet_forward.1} parent=5 // pred_check_branch
        %114 = sbr.rel (%p111) target = $region12
      $region11: #{protonet_forward.1} parent=5 // pred_region
        %s115 = ssub.s32 %s12, 1
        // Predicated region
        $region13: #{protonet_forward.1} parent=11 // pred_check
          %p116 = pneg %p33
        $region14: #{protonet_forward.1} parent=11 // pred_check_branch
          %118 = sbr.rel (%p116) target = $region16
        $region15: #{protonet_forward.1} parent=11 // pred_region
          _
        $region16: #{protonet_forward.1} parent=11 // pred_fallthru
          _
        // Predicated region
        $region17: #{protonet_forward.1} parent=11 // pred_check
          %p119 = pneg %p80
        $region18: #{protonet_forward.1} parent=11 // pred_check_branch
          %121 = sbr.rel (%p119) target = $region20
        $region19: #{protonet_forward.1} parent=11 // pred_region
          _
        $region20: #{protonet_forward.1} parent=11 // pred_fallthru
          _
      $region12: #{protonet_forward.1} parent=5 // pred_fallthru
        _
      %p122 = scmp.lt.s32.totalorder %s12, 2
      // Predicated region
      $region21: #{protonet_forward.1} parent=5 // pred_check
        %p123 = pneg %p122
      $region22: #{protonet_forward.1} parent=5 // pred_check_branch
        %125 = sbr.rel (%p123) target = $region24
      $region23: #{protonet_forward.1} parent=5 // pred_region
        // Predicated region
        $region25: #{protonet_forward.1} parent=23 // pred_check
          %p126 = pneg %p53
        $region26: #{protonet_forward.1} parent=23 // pred_check_branch
          %128 = sbr.rel (%p126) target = $region28
        $region27: #{protonet_forward.1} parent=23 // pred_region
          %s129 = sand.u32 %s43, 1
          %s130 = scalar_lea.sflag [#allocation4], %s129
          %s131 = sand.u32 %s43, 1
          %s132 = smul.addr %s131, 5632
          %s133 = scalar_lea.vmem [#allocation3], %s132
          %s134 = smul.u32 8, %s12
          %s136 = ssub.s32 90112, 90112
          %137 = vsyncadd %s130, %s136
          %s138 = smul.addr %s134, 64
          %s139 = scalar_lea.hbm %s1, %s138
          %s140 = sshll.u32 %s133, 4
          %s141 = int_to_ptr.vmem [resolvable:$true] %s140
          %146 = dma.hbm_to_vmem [thread:$0]  %s139, 90112, %s141, %s130, 1024, 512, 32
        $region28: #{protonet_forward.1} parent=23 // pred_fallthru
          _
      $region24: #{protonet_forward.1} parent=5 // pred_fallthru
        _
      %p147 = scmp.le.s32.totalorder 1, %s12
      %p148 = scmp.lt.s32.totalorder %s12, 3
      %p149 = pnand %p147, %p148
      %p150 = pneg %p149
      // Predicated region
      $region29: #{protonet_forward.1} parent=5 // pred_check
        _
      $region30: #{protonet_forward.1} parent=5 // pred_check_branch
        %152 = sbr.rel (%p149) target = $region32
      $region31: #{protonet_forward.1} parent=5 // pred_region
        %s153 = ssub.s32 %s12, 1
        %s154 = sand.u32 %s46, 1
        %s155 = scalar_lea.sflag [#allocation4], %s154
        %s156 = sand.u32 %s46, 1
        %s157 = smul.addr %s156, 5632
        %s158 = scalar_lea.vmem [#allocation3], %s157
        // Predicated region
        $region33: #{protonet_forward.1} parent=31 // pred_check
          %p159 = pneg %p59
        $region34: #{protonet_forward.1} parent=31 // pred_check_branch
          %161 = sbr.rel (%p159) target = $region36
        $region35: #{protonet_forward.1} parent=31 // pred_region
          %162 = dma.done %s155, 90112
        $region36: #{protonet_forward.1} parent=31 // pred_fallthru
          _
        %p163 = pneg %p33
        %p164 = pneg %p30
        %s165 = sand.u32 %s46, 1
        %s166 = scalar_lea.sflag [#allocation4], %s165
        %s167 = sand.u32 %s46, 1
        %s168 = smul.addr %s167, 5632
        %s169 = scalar_lea.vmem [#allocation3], %s168
        %p170 = pneg %p59
        %p171 = pneg %p56
        %p172 = pneg %p80
        %p173 = pneg %p77
        %p174 = pneg %p101
        %p175 = pneg %p98
        %s176 = smul.u32 8, %s17
        %p178 = scmp.eq.s32.totalorder %s17, 0
        // Predicated region
        $region37: #{protonet_forward.1} parent=31 // pred_check
          %p179 = pneg %p178
        $region38: #{protonet_forward.1} parent=31 // pred_check_branch
          %181 = sbr.rel (%p179) target = $region40
        $region39: #{protonet_forward.1} parent=31 // pred_region
          %vm182 = vcmask 39936
          %183 = vst.msk [vmem:[#allocation2] sm:$0xff] %vm182, 0.0
          %184 = vst.msk [vmem:[#allocation2 + $0x8] sm:$0xff] %vm182, 0.0
          %185 = vst.msk [vmem:[#allocation2 + $0x10] sm:$0xff] %vm182, 0.0
          %186 = vst.msk [vmem:[#allocation2 + $0x18] sm:$0xff] %vm182, 0.0
        $region40: #{protonet_forward.1} parent=31 // pred_fallthru
          _
        %v187 = vld [vmem:[%s0] sm:$0xff]
        %v188 = vld [vmem:[%s0 + $0x8] sm:$0xff]
        %v189 = vld [vmem:[%s0 + $0x10] sm:$0xff]
        %v190 = vld [vmem:[%s0 + $0x18] sm:$0xff]
        %v191 = vld [vmem:[%s0 + $0x20] sm:$0xff]
        %v192 = vld [vmem:[%s0 + $0x28] sm:$0xf]
        %v193 = vld [vmem:[%s0 + $0x2c] sm:$0xff]
        %v194 = vld [vmem:[%s0 + $0x34] sm:$0xff]
        %v195 = vld [vmem:[%s0 + $0x3c] sm:$0xff]
        %v196 = vld [vmem:[%s0 + $0x44] sm:$0xff]
        %v197 = vld [vmem:[%s0 + $0x4c] sm:$0xff]
        %v198 = vld [vmem:[%s0 + $0x54] sm:$0xf]
        %v199 = vld [vmem:[%s0 + $0x58] sm:$0xff]
        %v200 = vld [vmem:[%s0 + $0x60] sm:$0xff]
        %v201 = vld [vmem:[%s0 + $0x68] sm:$0xff]
        %v202 = vld [vmem:[%s0 + $0x70] sm:$0xff]
        %v203 = vld [vmem:[%s0 + $0x78] sm:$0xff]
        %v204 = vld [vmem:[%s0 + $0x80] sm:$0xf]
        %v205 = vld [vmem:[%s0 + $0x84] sm:$0xff]
        %v206 = vld [vmem:[%s0 + $0x8c] sm:$0xff]
        %v207 = vld [vmem:[%s0 + $0x94] sm:$0xff]
        %v208 = vld [vmem:[%s0 + $0x9c] sm:$0xff]
        %v209 = vld [vmem:[%s0 + $0xa4] sm:$0xff]
        %v210 = vld [vmem:[%s0 + $0xac] sm:$0xf]
        %v211 = vld [vmem:[%s158] sm:$0xff]
        %v212 = vld [vmem:[%s158 + $0x8] sm:$0xff]
        %v213 = vld [vmem:[%s158 + $0x10] sm:$0xff]
        %v214 = vld [vmem:[%s158 + $0x18] sm:$0xff]
        %v215 = vld [vmem:[%s158 + $0x20] sm:$0xff]
        %v216 = vld [vmem:[%s158 + $0x28] sm:$0xff]
        %v217 = vld [vmem:[%s158 + $0x30] sm:$0xff]
        %v218 = vld [vmem:[%s158 + $0x38] sm:$0xff]
        %v219 = vld [vmem:[%s158 + $0x40] sm:$0xff]
        %v220 = vld [vmem:[%s158 + $0x48] sm:$0xff]
        %v221 = vld [vmem:[%s158 + $0x50] sm:$0xff]
        %v222 = vld [vmem:[%s158 + $0x58] sm:$0xff]
        %v223 = vld [vmem:[%s158 + $0x60] sm:$0xff]
        %v224 = vld [vmem:[%s158 + $0x68] sm:$0xff]
        %v225 = vld [vmem:[%s158 + $0x70] sm:$0xff]
        %v226 = vld [vmem:[%s158 + $0x78] sm:$0xff]
        %v227 = vld [vmem:[%s158 + $0x80] sm:$0xff]
        %v228 = vld [vmem:[%s158 + $0x88] sm:$0xff]
        %v229 = vld [vmem:[%s158 + $0x90] sm:$0xff]
        %v230 = vld [vmem:[%s158 + $0x98] sm:$0xff]
        %v231 = vld [vmem:[%s158 + $0xa0] sm:$0xff]
        %v232 = vld [vmem:[%s158 + $0xa8] sm:$0xff]
        %v233 = vld [vmem:[%s158 + $0xb0] sm:$0xff]
        %v234 = vld [vmem:[%s158 + $0xb8] sm:$0xff]
        %v235 = vld [vmem:[%s158 + $0xc0] sm:$0xff]
        %v236 = vld [vmem:[%s158 + $0xc8] sm:$0xff]
        %v237 = vld [vmem:[%s158 + $0xd0] sm:$0xff]
        %v238 = vld [vmem:[%s158 + $0xd8] sm:$0xff]
        %v239 = vld [vmem:[%s158 + $0xe0] sm:$0xff]
        %v240 = vld [vmem:[%s158 + $0xe8] sm:$0xff]
        %v241 = vld [vmem:[%s158 + $0xf0] sm:$0xff]
        %v242 = vld [vmem:[%s158 + $0xf8] sm:$0xff]
        %v243 = vld [vmem:[%s158 + $0x100] sm:$0xff]
        %v244 = vld [vmem:[%s158 + $0x108] sm:$0xff]
        %v245 = vld [vmem:[%s158 + $0x110] sm:$0xff]
        %v246 = vld [vmem:[%s158 + $0x118] sm:$0xff]
        %v247 = vld [vmem:[%s158 + $0x120] sm:$0xff]
        %v248 = vld [vmem:[%s158 + $0x128] sm:$0xff]
        %v249 = vld [vmem:[%s158 + $0x130] sm:$0xff]
        %v250 = vld [vmem:[%s158 + $0x138] sm:$0xff]
        %v251 = vld [vmem:[%s158 + $0x140] sm:$0xff]
        %v252 = vld [vmem:[%s158 + $0x148] sm:$0xff]
        %v253 = vld [vmem:[%s158 + $0x150] sm:$0xff]
        %v254 = vld [vmem:[%s158 + $0x158] sm:$0xff]
        %v255 = vld [vmem:[%s158 + $0x160] sm:$0xff]
        %v256 = vld [vmem:[%s158 + $0x168] sm:$0xff]
        %v257 = vld [vmem:[%s158 + $0x170] sm:$0xff]
        %v258 = vld [vmem:[%s158 + $0x178] sm:$0xff]
        %v259 = vld [vmem:[%s158 + $0x180] sm:$0xff]
        %v260 = vld [vmem:[%s158 + $0x188] sm:$0xff]
        %v261 = vld [vmem:[%s158 + $0x190] sm:$0xff]
        %v262 = vld [vmem:[%s158 + $0x198] sm:$0xff]
        %v263 = vld [vmem:[%s158 + $0x1a0] sm:$0xff]
        %v264 = vld [vmem:[%s158 + $0x1a8] sm:$0xff]
        %v265 = vld [vmem:[%s158 + $0x1b0] sm:$0xff]
        %v266 = vld [vmem:[%s158 + $0x1b8] sm:$0xff]
        %v267 = vld [vmem:[%s158 + $0x1c0] sm:$0xff]
        %v268 = vld [vmem:[%s158 + $0x1c8] sm:$0xff]
        %v269 = vld [vmem:[%s158 + $0x1d0] sm:$0xff]
        %v270 = vld [vmem:[%s158 + $0x1d8] sm:$0xff]
        %v271 = vld [vmem:[%s158 + $0x1e0] sm:$0xff]
        %v272 = vld [vmem:[%s158 + $0x1e8] sm:$0xff]
        %v273 = vld [vmem:[%s158 + $0x1f0] sm:$0xff]
        %v274 = vld [vmem:[%s158 + $0x1f8] sm:$0xff]
        %v275 = vld [vmem:[%s158 + $0x200] sm:$0xff]
        %v276 = vld [vmem:[%s158 + $0x208] sm:$0xff]
        %v277 = vld [vmem:[%s158 + $0x210] sm:$0xff]
        %v278 = vld [vmem:[%s158 + $0x218] sm:$0xff]
        %v279 = vld [vmem:[%s158 + $0x220] sm:$0xff]
        %v280 = vld [vmem:[%s158 + $0x228] sm:$0xff]
        %v281 = vld [vmem:[%s158 + $0x230] sm:$0xff]
        %v282 = vld [vmem:[%s158 + $0x238] sm:$0xff]
        %v283 = vld [vmem:[%s158 + $0x240] sm:$0xff]
        %v284 = vld [vmem:[%s158 + $0x248] sm:$0xff]
        %v285 = vld [vmem:[%s158 + $0x250] sm:$0xff]
        %v286 = vld [vmem:[%s158 + $0x258] sm:$0xff]
        %v287 = vld [vmem:[%s158 + $0x260] sm:$0xff]
        %v288 = vld [vmem:[%s158 + $0x268] sm:$0xff]
        %v289 = vld [vmem:[%s158 + $0x270] sm:$0xff]
        %v290 = vld [vmem:[%s158 + $0x278] sm:$0xff]
        %v291 = vld [vmem:[%s158 + $0x280] sm:$0xff]
        %v292 = vld [vmem:[%s158 + $0x288] sm:$0xff]
        %v293 = vld [vmem:[%s158 + $0x290] sm:$0xff]
        %v294 = vld [vmem:[%s158 + $0x298] sm:$0xff]
        %v295 = vld [vmem:[%s158 + $0x2a0] sm:$0xff]
        %v296 = vld [vmem:[%s158 + $0x2a8] sm:$0xff]
        %v297 = vld [vmem:[%s158 + $0x2b0] sm:$0xff]
        %v298 = vld [vmem:[%s158 + $0x2b8] sm:$0xff]
        %v299 = vld [vmem:[%s158 + $0x2c0] sm:$0xff]
        %v300 = vld [vmem:[%s158 + $0x2c8] sm:$0xff]
        %v301 = vld [vmem:[%s158 + $0x2d0] sm:$0xff]
        %v302 = vld [vmem:[%s158 + $0x2d8] sm:$0xff]
        %v303 = vld [vmem:[%s158 + $0x2e0] sm:$0xff]
        %v304 = vld [vmem:[%s158 + $0x2e8] sm:$0xff]
        %v305 = vld [vmem:[%s158 + $0x2f0] sm:$0xff]
        %v306 = vld [vmem:[%s158 + $0x2f8] sm:$0xff]
        %v307 = vld [vmem:[%s158 + $0x300] sm:$0xff]
        %v308 = vld [vmem:[%s158 + $0x308] sm:$0xff]
        %v309 = vld [vmem:[%s158 + $0x310] sm:$0xff]
        %v310 = vld [vmem:[%s158 + $0x318] sm:$0xff]
        %v311 = vld [vmem:[%s158 + $0x320] sm:$0xff]
        %v312 = vld [vmem:[%s158 + $0x328] sm:$0xff]
        %v313 = vld [vmem:[%s158 + $0x330] sm:$0xff]
        %v314 = vld [vmem:[%s158 + $0x338] sm:$0xff]
        %v315 = vld [vmem:[%s158 + $0x340] sm:$0xff]
        %v316 = vld [vmem:[%s158 + $0x348] sm:$0xff]
        %v317 = vld [vmem:[%s158 + $0x350] sm:$0xff]
        %v318 = vld [vmem:[%s158 + $0x358] sm:$0xff]
        %v319 = vld [vmem:[%s158 + $0x360] sm:$0xff]
        %v320 = vld [vmem:[%s158 + $0x368] sm:$0xff]
        %v321 = vld [vmem:[%s158 + $0x370] sm:$0xff]
        %v322 = vld [vmem:[%s158 + $0x378] sm:$0xff]
        %v323 = vld [vmem:[%s158 + $0x380] sm:$0xff]
        %v324 = vld [vmem:[%s158 + $0x388] sm:$0xff]
        %v325 = vld [vmem:[%s158 + $0x390] sm:$0xff]
        %v326 = vld [vmem:[%s158 + $0x398] sm:$0xff]
        %v327 = vld [vmem:[%s158 + $0x3a0] sm:$0xff]
        %v328 = vld [vmem:[%s158 + $0x3a8] sm:$0xff]
        %v329 = vld [vmem:[%s158 + $0x3b0] sm:$0xff]
        %v330 = vld [vmem:[%s158 + $0x3b8] sm:$0xff]
        %v331 = vld [vmem:[%s158 + $0x3c0] sm:$0xff]
        %v332 = vld [vmem:[%s158 + $0x3c8] sm:$0xff]
        %v333 = vld [vmem:[%s158 + $0x3d0] sm:$0xff]
        %v334 = vld [vmem:[%s158 + $0x3d8] sm:$0xff]
        %v335 = vld [vmem:[%s158 + $0x3e0] sm:$0xff]
        %v336 = vld [vmem:[%s158 + $0x3e8] sm:$0xff]
        %v337 = vld [vmem:[%s158 + $0x3f0] sm:$0xff]
        %v338 = vld [vmem:[%s158 + $0x3f8] sm:$0xff]
        %v339 = vld [vmem:[%s158 + $0x400] sm:$0xff]
        %v340 = vld [vmem:[%s158 + $0x408] sm:$0xff]
        %v341 = vld [vmem:[%s158 + $0x410] sm:$0xff]
        %v342 = vld [vmem:[%s158 + $0x418] sm:$0xff]
        %v343 = vld [vmem:[%s158 + $0x420] sm:$0xff]
        %v344 = vld [vmem:[%s158 + $0x428] sm:$0xff]
        %v345 = vld [vmem:[%s158 + $0x430] sm:$0xff]
        %v346 = vld [vmem:[%s158 + $0x438] sm:$0xff]
        %v347 = vld [vmem:[%s158 + $0x440] sm:$0xff]
        %v348 = vld [vmem:[%s158 + $0x448] sm:$0xff]
        %v349 = vld [vmem:[%s158 + $0x450] sm:$0xff]
        %v350 = vld [vmem:[%s158 + $0x458] sm:$0xff]
        %v351 = vld [vmem:[%s158 + $0x460] sm:$0xff]
        %v352 = vld [vmem:[%s158 + $0x468] sm:$0xff]
        %v353 = vld [vmem:[%s158 + $0x470] sm:$0xff]
        %v354 = vld [vmem:[%s158 + $0x478] sm:$0xff]
        %v355 = vld [vmem:[%s158 + $0x480] sm:$0xff]
        %v356 = vld [vmem:[%s158 + $0x488] sm:$0xff]
        %v357 = vld [vmem:[%s158 + $0x490] sm:$0xff]
        %v358 = vld [vmem:[%s158 + $0x498] sm:$0xff]
        %v359 = vld [vmem:[%s158 + $0x4a0] sm:$0xff]
        %v360 = vld [vmem:[%s158 + $0x4a8] sm:$0xff]
        %v361 = vld [vmem:[%s158 + $0x4b0] sm:$0xff]
        %v362 = vld [vmem:[%s158 + $0x4b8] sm:$0xff]
        %v363 = vld [vmem:[%s158 + $0x4c0] sm:$0xff]
        %v364 = vld [vmem:[%s158 + $0x4c8] sm:$0xff]
        %v365 = vld [vmem:[%s158 + $0x4d0] sm:$0xff]
        %v366 = vld [vmem:[%s158 + $0x4d8] sm:$0xff]
        %v367 = vld [vmem:[%s158 + $0x4e0] sm:$0xff]
        %v368 = vld [vmem:[%s158 + $0x4e8] sm:$0xff]
        %v369 = vld [vmem:[%s158 + $0x4f0] sm:$0xff]
        %v370 = vld [vmem:[%s158 + $0x4f8] sm:$0xff]
        %v371 = vld [vmem:[%s158 + $0x500] sm:$0xff]
        %v372 = vld [vmem:[%s158 + $0x508] sm:$0xff]
        %v373 = vld [vmem:[%s158 + $0x510] sm:$0xff]
        %v374 = vld [vmem:[%s158 + $0x518] sm:$0xff]
        %v375 = vld [vmem:[%s158 + $0x520] sm:$0xff]
        %v376 = vld [vmem:[%s158 + $0x528] sm:$0xff]
        %v377 = vld [vmem:[%s158 + $0x530] sm:$0xff]
        %v378 = vld [vmem:[%s158 + $0x538] sm:$0xff]
        %v379 = vld [vmem:[%s158 + $0x540] sm:$0xff]
        %v380 = vld [vmem:[%s158 + $0x548] sm:$0xff]
        %v381 = vld [vmem:[%s158 + $0x550] sm:$0xff]
        %v382 = vld [vmem:[%s158 + $0x558] sm:$0xff]
        %v383 = vld [vmem:[%s158 + $0x560] sm:$0xff]
        %v384 = vld [vmem:[%s158 + $0x568] sm:$0xff]
        %v385 = vld [vmem:[%s158 + $0x570] sm:$0xff]
        %v386 = vld [vmem:[%s158 + $0x578] sm:$0xff]
        %v387 = vld [vmem:[%s158 + $0x580] sm:$0xff]
        %v388 = vld [vmem:[%s158 + $0x588] sm:$0xff]
        %v389 = vld [vmem:[%s158 + $0x590] sm:$0xff]
        %v390 = vld [vmem:[%s158 + $0x598] sm:$0xff]
        %v391 = vld [vmem:[%s158 + $0x5a0] sm:$0xff]
        %v392 = vld [vmem:[%s158 + $0x5a8] sm:$0xff]
        %v393 = vld [vmem:[%s158 + $0x5b0] sm:$0xff]
        %v394 = vld [vmem:[%s158 + $0x5b8] sm:$0xff]
        %v395 = vld [vmem:[%s158 + $0x5c0] sm:$0xff]
        %v396 = vld [vmem:[%s158 + $0x5c8] sm:$0xff]
        %v397 = vld [vmem:[%s158 + $0x5d0] sm:$0xff]
        %v398 = vld [vmem:[%s158 + $0x5d8] sm:$0xff]
        %v399 = vld [vmem:[%s158 + $0x5e0] sm:$0xff]
        %v400 = vld [vmem:[%s158 + $0x5e8] sm:$0xff]
        %v401 = vld [vmem:[%s158 + $0x5f0] sm:$0xff]
        %v402 = vld [vmem:[%s158 + $0x5f8] sm:$0xff]
        %v403 = vld [vmem:[%s158 + $0x600] sm:$0xff]
        %v404 = vld [vmem:[%s158 + $0x608] sm:$0xff]
        %v405 = vld [vmem:[%s158 + $0x610] sm:$0xff]
        %v406 = vld [vmem:[%s158 + $0x618] sm:$0xff]
        %v407 = vld [vmem:[%s158 + $0x620] sm:$0xff]
        %v408 = vld [vmem:[%s158 + $0x628] sm:$0xff]
        %v409 = vld [vmem:[%s158 + $0x630] sm:$0xff]
        %v410 = vld [vmem:[%s158 + $0x638] sm:$0xff]
        %v411 = vld [vmem:[%s158 + $0x640] sm:$0xff]
        %v412 = vld [vmem:[%s158 + $0x648] sm:$0xff]
        %v413 = vld [vmem:[%s158 + $0x650] sm:$0xff]
        %v414 = vld [vmem:[%s158 + $0x658] sm:$0xff]
        %v415 = vld [vmem:[%s158 + $0x660] sm:$0xff]
        %v416 = vld [vmem:[%s158 + $0x668] sm:$0xff]
        %v417 = vld [vmem:[%s158 + $0x670] sm:$0xff]
        %v418 = vld [vmem:[%s158 + $0x678] sm:$0xff]
        %v419 = vld [vmem:[%s158 + $0x680] sm:$0xff]
        %v420 = vld [vmem:[%s158 + $0x688] sm:$0xff]
        %v421 = vld [vmem:[%s158 + $0x690] sm:$0xff]
        %v422 = vld [vmem:[%s158 + $0x698] sm:$0xff]
        %v423 = vld [vmem:[%s158 + $0x6a0] sm:$0xff]
        %v424 = vld [vmem:[%s158 + $0x6a8] sm:$0xff]
        %v425 = vld [vmem:[%s158 + $0x6b0] sm:$0xff]
        %v426 = vld [vmem:[%s158 + $0x6b8] sm:$0xff]
        %v427 = vld [vmem:[%s158 + $0x6c0] sm:$0xff]
        %v428 = vld [vmem:[%s158 + $0x6c8] sm:$0xff]
        %v429 = vld [vmem:[%s158 + $0x6d0] sm:$0xff]
        %v430 = vld [vmem:[%s158 + $0x6d8] sm:$0xff]
        %v431 = vld [vmem:[%s158 + $0x6e0] sm:$0xff]
        %v432 = vld [vmem:[%s158 + $0x6e8] sm:$0xff]
        %v433 = vld [vmem:[%s158 + $0x6f0] sm:$0xff]
        %v434 = vld [vmem:[%s158 + $0x6f8] sm:$0xff]
        %v435 = vld [vmem:[%s158 + $0x700] sm:$0xff]
        %v436 = vld [vmem:[%s158 + $0x708] sm:$0xff]
        %v437 = vld [vmem:[%s158 + $0x710] sm:$0xff]
        %v438 = vld [vmem:[%s158 + $0x718] sm:$0xff]
        %v439 = vld [vmem:[%s158 + $0x720] sm:$0xff]
        %v440 = vld [vmem:[%s158 + $0x728] sm:$0xff]
        %v441 = vld [vmem:[%s158 + $0x730] sm:$0xff]
        %v442 = vld [vmem:[%s158 + $0x738] sm:$0xff]
        %v443 = vld [vmem:[%s158 + $0x740] sm:$0xff]
        %v444 = vld [vmem:[%s158 + $0x748] sm:$0xff]
        %v445 = vld [vmem:[%s158 + $0x750] sm:$0xff]
        %v446 = vld [vmem:[%s158 + $0x758] sm:$0xff]
        %v447 = vld [vmem:[%s158 + $0x760] sm:$0xff]
        %v448 = vld [vmem:[%s158 + $0x768] sm:$0xff]
        %v449 = vld [vmem:[%s158 + $0x770] sm:$0xff]
        %v450 = vld [vmem:[%s158 + $0x778] sm:$0xff]
        %v451 = vld [vmem:[%s158 + $0x780] sm:$0xff]
        %v452 = vld [vmem:[%s158 + $0x788] sm:$0xff]
        %v453 = vld [vmem:[%s158 + $0x790] sm:$0xff]
        %v454 = vld [vmem:[%s158 + $0x798] sm:$0xff]
        %v455 = vld [vmem:[%s158 + $0x7a0] sm:$0xff]
        %v456 = vld [vmem:[%s158 + $0x7a8] sm:$0xff]
        %v457 = vld [vmem:[%s158 + $0x7b0] sm:$0xff]
        %v458 = vld [vmem:[%s158 + $0x7b8] sm:$0xff]
        %v459 = vld [vmem:[%s158 + $0x7c0] sm:$0xff]
        %v460 = vld [vmem:[%s158 + $0x7c8] sm:$0xff]
        %v461 = vld [vmem:[%s158 + $0x7d0] sm:$0xff]
        %v462 = vld [vmem:[%s158 + $0x7d8] sm:$0xff]
        %v463 = vld [vmem:[%s158 + $0x7e0] sm:$0xff]
        %v464 = vld [vmem:[%s158 + $0x7e8] sm:$0xff]
        %v465 = vld [vmem:[%s158 + $0x7f0] sm:$0xff]
        %v466 = vld [vmem:[%s158 + $0x7f8] sm:$0xff]
        %v467 = vld [vmem:[%s158 + $0x800] sm:$0xff]
        %v468 = vld [vmem:[%s158 + $0x808] sm:$0xff]
        %v469 = vld [vmem:[%s158 + $0x810] sm:$0xff]
        %v470 = vld [vmem:[%s158 + $0x818] sm:$0xff]
        %v471 = vld [vmem:[%s158 + $0x820] sm:$0xff]
        %v472 = vld [vmem:[%s158 + $0x828] sm:$0xff]
        %v473 = vld [vmem:[%s158 + $0x830] sm:$0xff]
        %v474 = vld [vmem:[%s158 + $0x838] sm:$0xff]
        %v475 = vld [vmem:[%s158 + $0x840] sm:$0xff]
        %v476 = vld [vmem:[%s158 + $0x848] sm:$0xff]
        %v477 = vld [vmem:[%s158 + $0x850] sm:$0xff]
        %v478 = vld [vmem:[%s158 + $0x858] sm:$0xff]
        %v479 = vld [vmem:[%s158 + $0x860] sm:$0xff]
        %v480 = vld [vmem:[%s158 + $0x868] sm:$0xff]
        %v481 = vld [vmem:[%s158 + $0x870] sm:$0xff]
        %v482 = vld [vmem:[%s158 + $0x878] sm:$0xff]
        %v483 = vld [vmem:[%s158 + $0x880] sm:$0xff]
        %v484 = vld [vmem:[%s158 + $0x888] sm:$0xff]
        %v485 = vld [vmem:[%s158 + $0x890] sm:$0xff]
        %v486 = vld [vmem:[%s158 + $0x898] sm:$0xff]
        %v487 = vld [vmem:[%s158 + $0x8a0] sm:$0xff]
        %v488 = vld [vmem:[%s158 + $0x8a8] sm:$0xff]
        %v489 = vld [vmem:[%s158 + $0x8b0] sm:$0xff]
        %v490 = vld [vmem:[%s158 + $0x8b8] sm:$0xff]
        %v491 = vld [vmem:[%s158 + $0x8c0] sm:$0xff]
        %v492 = vld [vmem:[%s158 + $0x8c8] sm:$0xff]
        %v493 = vld [vmem:[%s158 + $0x8d0] sm:$0xff]
        %v494 = vld [vmem:[%s158 + $0x8d8] sm:$0xff]
        %v495 = vld [vmem:[%s158 + $0x8e0] sm:$0xff]
        %v496 = vld [vmem:[%s158 + $0x8e8] sm:$0xff]
        %v497 = vld [vmem:[%s158 + $0x8f0] sm:$0xff]
        %v498 = vld [vmem:[%s158 + $0x8f8] sm:$0xff]
        %v499 = vld [vmem:[%s158 + $0x900] sm:$0xff]
        %v500 = vld [vmem:[%s158 + $0x908] sm:$0xff]
        %v501 = vld [vmem:[%s158 + $0x910] sm:$0xff]
        %v502 = vld [vmem:[%s158 + $0x918] sm:$0xff]
        %v503 = vld [vmem:[%s158 + $0x920] sm:$0xff]
        %v504 = vld [vmem:[%s158 + $0x928] sm:$0xff]
        %v505 = vld [vmem:[%s158 + $0x930] sm:$0xff]
        %v506 = vld [vmem:[%s158 + $0x938] sm:$0xff]
        %v507 = vld [vmem:[%s158 + $0x940] sm:$0xff]
        %v508 = vld [vmem:[%s158 + $0x948] sm:$0xff]
        %v509 = vld [vmem:[%s158 + $0x950] sm:$0xff]
        %v510 = vld [vmem:[%s158 + $0x958] sm:$0xff]
        %v511 = vld [vmem:[%s158 + $0x960] sm:$0xff]
        %v512 = vld [vmem:[%s158 + $0x968] sm:$0xff]
        %v513 = vld [vmem:[%s158 + $0x970] sm:$0xff]
        %v514 = vld [vmem:[%s158 + $0x978] sm:$0xff]
        %v515 = vld [vmem:[%s158 + $0x980] sm:$0xff]
        %v516 = vld [vmem:[%s158 + $0x988] sm:$0xff]
        %v517 = vld [vmem:[%s158 + $0x990] sm:$0xff]
        %v518 = vld [vmem:[%s158 + $0x998] sm:$0xff]
        %v519 = vld [vmem:[%s158 + $0x9a0] sm:$0xff]
        %v520 = vld [vmem:[%s158 + $0x9a8] sm:$0xff]
        %v521 = vld [vmem:[%s158 + $0x9b0] sm:$0xff]
        %v522 = vld [vmem:[%s158 + $0x9b8] sm:$0xff]
        %v523 = vld [vmem:[%s158 + $0x9c0] sm:$0xff]
        %v524 = vld [vmem:[%s158 + $0x9c8] sm:$0xff]
        %v525 = vld [vmem:[%s158 + $0x9d0] sm:$0xff]
        %v526 = vld [vmem:[%s158 + $0x9d8] sm:$0xff]
        %v527 = vld [vmem:[%s158 + $0x9e0] sm:$0xff]
        %v528 = vld [vmem:[%s158 + $0x9e8] sm:$0xff]
        %v529 = vld [vmem:[%s158 + $0x9f0] sm:$0xff]
        %v530 = vld [vmem:[%s158 + $0x9f8] sm:$0xff]
        %v531 = vld [vmem:[%s158 + $0xa00] sm:$0xff]
        %v532 = vld [vmem:[%s158 + $0xa08] sm:$0xff]
        %v533 = vld [vmem:[%s158 + $0xa10] sm:$0xff]
        %v534 = vld [vmem:[%s158 + $0xa18] sm:$0xff]
        %v535 = vld [vmem:[%s158 + $0xa20] sm:$0xff]
        %v536 = vld [vmem:[%s158 + $0xa28] sm:$0xff]
        %v537 = vld [vmem:[%s158 + $0xa30] sm:$0xff]
        %v538 = vld [vmem:[%s158 + $0xa38] sm:$0xff]
        %v539 = vld [vmem:[%s158 + $0xa40] sm:$0xff]
        %v540 = vld [vmem:[%s158 + $0xa48] sm:$0xff]
        %v541 = vld [vmem:[%s158 + $0xa50] sm:$0xff]
        %v542 = vld [vmem:[%s158 + $0xa58] sm:$0xff]
        %v543 = vld [vmem:[%s158 + $0xa60] sm:$0xff]
        %v544 = vld [vmem:[%s158 + $0xa68] sm:$0xff]
        %v545 = vld [vmem:[%s158 + $0xa70] sm:$0xff]
        %v546 = vld [vmem:[%s158 + $0xa78] sm:$0xff]
        %v547 = vld [vmem:[%s158 + $0xa80] sm:$0xff]
        %v548 = vld [vmem:[%s158 + $0xa88] sm:$0xff]
        %v549 = vld [vmem:[%s158 + $0xa90] sm:$0xff]
        %v550 = vld [vmem:[%s158 + $0xa98] sm:$0xff]
        %v551 = vld [vmem:[%s158 + $0xaa0] sm:$0xff]
        %v552 = vld [vmem:[%s158 + $0xaa8] sm:$0xff]
        %v553 = vld [vmem:[%s158 + $0xab0] sm:$0xff]
        %v554 = vld [vmem:[%s158 + $0xab8] sm:$0xff]
        %v555 = vld [vmem:[%s158 + $0xac0] sm:$0xff]
        %v556 = vld [vmem:[%s158 + $0xac8] sm:$0xff]
        %v557 = vld [vmem:[%s158 + $0xad0] sm:$0xff]
        %v558 = vld [vmem:[%s158 + $0xad8] sm:$0xff]
        %v559 = vld [vmem:[%s158 + $0xae0] sm:$0xff]
        %v560 = vld [vmem:[%s158 + $0xae8] sm:$0xff]
        %v561 = vld [vmem:[%s158 + $0xaf0] sm:$0xff]
        %v562 = vld [vmem:[%s158 + $0xaf8] sm:$0xff]
        %v563 = vld [vmem:[%s158 + $0xb00] sm:$0xff]
        %v564 = vld [vmem:[%s158 + $0xb08] sm:$0xff]
        %v565 = vld [vmem:[%s158 + $0xb10] sm:$0xff]
        %v566 = vld [vmem:[%s158 + $0xb18] sm:$0xff]
        %v567 = vld [vmem:[%s158 + $0xb20] sm:$0xff]
        %v568 = vld [vmem:[%s158 + $0xb28] sm:$0xff]
        %v569 = vld [vmem:[%s158 + $0xb30] sm:$0xff]
        %v570 = vld [vmem:[%s158 + $0xb38] sm:$0xff]
        %v571 = vld [vmem:[%s158 + $0xb40] sm:$0xff]
        %v572 = vld [vmem:[%s158 + $0xb48] sm:$0xff]
        %v573 = vld [vmem:[%s158 + $0xb50] sm:$0xff]
        %v574 = vld [vmem:[%s158 + $0xb58] sm:$0xff]
        %v575 = vld [vmem:[%s158 + $0xb60] sm:$0xff]
        %v576 = vld [vmem:[%s158 + $0xb68] sm:$0xff]
        %v577 = vld [vmem:[%s158 + $0xb70] sm:$0xff]
        %v578 = vld [vmem:[%s158 + $0xb78] sm:$0xff]
        %v579 = vld [vmem:[%s158 + $0xb80] sm:$0xff]
        %v580 = vld [vmem:[%s158 + $0xb88] sm:$0xff]
        %v581 = vld [vmem:[%s158 + $0xb90] sm:$0xff]
        %v582 = vld [vmem:[%s158 + $0xb98] sm:$0xff]
        %v583 = vld [vmem:[%s158 + $0xba0] sm:$0xff]
        %v584 = vld [vmem:[%s158 + $0xba8] sm:$0xff]
        %v585 = vld [vmem:[%s158 + $0xbb0] sm:$0xff]
        %v586 = vld [vmem:[%s158 + $0xbb8] sm:$0xff]
        %v587 = vld [vmem:[%s158 + $0xbc0] sm:$0xff]
        %v588 = vld [vmem:[%s158 + $0xbc8] sm:$0xff]
        %v589 = vld [vmem:[%s158 + $0xbd0] sm:$0xff]
        %v590 = vld [vmem:[%s158 + $0xbd8] sm:$0xff]
        %v591 = vld [vmem:[%s158 + $0xbe0] sm:$0xff]
        %v592 = vld [vmem:[%s158 + $0xbe8] sm:$0xff]
        %v593 = vld [vmem:[%s158 + $0xbf0] sm:$0xff]
        %v594 = vld [vmem:[%s158 + $0xbf8] sm:$0xff]
        %v595 = vld [vmem:[%s158 + $0xc00] sm:$0xff]
        %v596 = vld [vmem:[%s158 + $0xc08] sm:$0xff]
        %v597 = vld [vmem:[%s158 + $0xc10] sm:$0xff]
        %v598 = vld [vmem:[%s158 + $0xc18] sm:$0xff]
        %v599 = vld [vmem:[%s158 + $0xc20] sm:$0xff]
        %v600 = vld [vmem:[%s158 + $0xc28] sm:$0xff]
        %v601 = vld [vmem:[%s158 + $0xc30] sm:$0xff]
        %v602 = vld [vmem:[%s158 + $0xc38] sm:$0xff]
        %v603 = vld [vmem:[%s158 + $0xc40] sm:$0xff]
        %v604 = vld [vmem:[%s158 + $0xc48] sm:$0xff]
        %v605 = vld [vmem:[%s158 + $0xc50] sm:$0xff]
        %v606 = vld [vmem:[%s158 + $0xc58] sm:$0xff]
        %v607 = vld [vmem:[%s158 + $0xc60] sm:$0xff]
        %v608 = vld [vmem:[%s158 + $0xc68] sm:$0xff]
        %v609 = vld [vmem:[%s158 + $0xc70] sm:$0xff]
        %v610 = vld [vmem:[%s158 + $0xc78] sm:$0xff]
        %v611 = vld [vmem:[%s158 + $0xc80] sm:$0xff]
        %v612 = vld [vmem:[%s158 + $0xc88] sm:$0xff]
        %v613 = vld [vmem:[%s158 + $0xc90] sm:$0xff]
        %v614 = vld [vmem:[%s158 + $0xc98] sm:$0xff]
        %v615 = vld [vmem:[%s158 + $0xca0] sm:$0xff]
        %v616 = vld [vmem:[%s158 + $0xca8] sm:$0xff]
        %v617 = vld [vmem:[%s158 + $0xcb0] sm:$0xff]
        %v618 = vld [vmem:[%s158 + $0xcb8] sm:$0xff]
        %v619 = vld [vmem:[%s158 + $0xcc0] sm:$0xff]
        %v620 = vld [vmem:[%s158 + $0xcc8] sm:$0xff]
        %v621 = vld [vmem:[%s158 + $0xcd0] sm:$0xff]
        %v622 = vld [vmem:[%s158 + $0xcd8] sm:$0xff]
        %v623 = vld [vmem:[%s158 + $0xce0] sm:$0xff]
        %v624 = vld [vmem:[%s158 + $0xce8] sm:$0xff]
        %v625 = vld [vmem:[%s158 + $0xcf0] sm:$0xff]
        %v626 = vld [vmem:[%s158 + $0xcf8] sm:$0xff]
        %v627 = vld [vmem:[%s158 + $0xd00] sm:$0xff]
        %v628 = vld [vmem:[%s158 + $0xd08] sm:$0xff]
        %v629 = vld [vmem:[%s158 + $0xd10] sm:$0xff]
        %v630 = vld [vmem:[%s158 + $0xd18] sm:$0xff]
        %v631 = vld [vmem:[%s158 + $0xd20] sm:$0xff]
        %v632 = vld [vmem:[%s158 + $0xd28] sm:$0xff]
        %v633 = vld [vmem:[%s158 + $0xd30] sm:$0xff]
        %v634 = vld [vmem:[%s158 + $0xd38] sm:$0xff]
        %v635 = vld [vmem:[%s158 + $0xd40] sm:$0xff]
        %v636 = vld [vmem:[%s158 + $0xd48] sm:$0xff]
        %v637 = vld [vmem:[%s158 + $0xd50] sm:$0xff]
        %v638 = vld [vmem:[%s158 + $0xd58] sm:$0xff]
        %v639 = vld [vmem:[%s158 + $0xd60] sm:$0xff]
        %v640 = vld [vmem:[%s158 + $0xd68] sm:$0xff]
        %v641 = vld [vmem:[%s158 + $0xd70] sm:$0xff]
        %v642 = vld [vmem:[%s158 + $0xd78] sm:$0xff]
        %v643 = vld [vmem:[%s158 + $0xd80] sm:$0xff]
        %v644 = vld [vmem:[%s158 + $0xd88] sm:$0xff]
        %v645 = vld [vmem:[%s158 + $0xd90] sm:$0xff]
        %v646 = vld [vmem:[%s158 + $0xd98] sm:$0xff]
        %v647 = vld [vmem:[%s158 + $0xda0] sm:$0xff]
        %v648 = vld [vmem:[%s158 + $0xda8] sm:$0xff]
        %v649 = vld [vmem:[%s158 + $0xdb0] sm:$0xff]
        %v650 = vld [vmem:[%s158 + $0xdb8] sm:$0xff]
        %v651 = vld [vmem:[%s158 + $0xdc0] sm:$0xff]
        %v652 = vld [vmem:[%s158 + $0xdc8] sm:$0xff]
        %v653 = vld [vmem:[%s158 + $0xdd0] sm:$0xff]
        %v654 = vld [vmem:[%s158 + $0xdd8] sm:$0xff]
        %v655 = vld [vmem:[%s158 + $0xde0] sm:$0xff]
        %v656 = vld [vmem:[%s158 + $0xde8] sm:$0xff]
        %v657 = vld [vmem:[%s158 + $0xdf0] sm:$0xff]
        %v658 = vld [vmem:[%s158 + $0xdf8] sm:$0xff]
        %v659 = vld [vmem:[%s158 + $0xe00] sm:$0xff]
        %v660 = vld [vmem:[%s158 + $0xe08] sm:$0xff]
        %v661 = vld [vmem:[%s158 + $0xe10] sm:$0xff]
        %v662 = vld [vmem:[%s158 + $0xe18] sm:$0xff]
        %v663 = vld [vmem:[%s158 + $0xe20] sm:$0xff]
        %v664 = vld [vmem:[%s158 + $0xe28] sm:$0xff]
        %v665 = vld [vmem:[%s158 + $0xe30] sm:$0xff]
        %v666 = vld [vmem:[%s158 + $0xe38] sm:$0xff]
        %v667 = vld [vmem:[%s158 + $0xe40] sm:$0xff]
        %v668 = vld [vmem:[%s158 + $0xe48] sm:$0xff]
        %v669 = vld [vmem:[%s158 + $0xe50] sm:$0xff]
        %v670 = vld [vmem:[%s158 + $0xe58] sm:$0xff]
        %v671 = vld [vmem:[%s158 + $0xe60] sm:$0xff]
        %v672 = vld [vmem:[%s158 + $0xe68] sm:$0xff]
        %v673 = vld [vmem:[%s158 + $0xe70] sm:$0xff]
        %v674 = vld [vmem:[%s158 + $0xe78] sm:$0xff]
        %v675 = vld [vmem:[%s158 + $0xe80] sm:$0xff]
        %v676 = vld [vmem:[%s158 + $0xe88] sm:$0xff]
        %v677 = vld [vmem:[%s158 + $0xe90] sm:$0xff]
        %v678 = vld [vmem:[%s158 + $0xe98] sm:$0xff]
        %v679 = vld [vmem:[%s158 + $0xea0] sm:$0xff]
        %v680 = vld [vmem:[%s158 + $0xea8] sm:$0xff]
        %v681 = vld [vmem:[%s158 + $0xeb0] sm:$0xff]
        %v682 = vld [vmem:[%s158 + $0xeb8] sm:$0xff]
        %v683 = vld [vmem:[%s158 + $0xec0] sm:$0xff]
        %v684 = vld [vmem:[%s158 + $0xec8] sm:$0xff]
        %v685 = vld [vmem:[%s158 + $0xed0] sm:$0xff]
        %v686 = vld [vmem:[%s158 + $0xed8] sm:$0xff]
        %v687 = vld [vmem:[%s158 + $0xee0] sm:$0xff]
        %v688 = vld [vmem:[%s158 + $0xee8] sm:$0xff]
        %v689 = vld [vmem:[%s158 + $0xef0] sm:$0xff]
        %v690 = vld [vmem:[%s158 + $0xef8] sm:$0xff]
        %v691 = vld [vmem:[%s158 + $0xf00] sm:$0xff]
        %v692 = vld [vmem:[%s158 + $0xf08] sm:$0xff]
        %v693 = vld [vmem:[%s158 + $0xf10] sm:$0xff]
        %v694 = vld [vmem:[%s158 + $0xf18] sm:$0xff]
        %v695 = vld [vmem:[%s158 + $0xf20] sm:$0xff]
        %v696 = vld [vmem:[%s158 + $0xf28] sm:$0xff]
        %v697 = vld [vmem:[%s158 + $0xf30] sm:$0xff]
        %v698 = vld [vmem:[%s158 + $0xf38] sm:$0xff]
        %v699 = vld [vmem:[%s158 + $0xf40] sm:$0xff]
        %v700 = vld [vmem:[%s158 + $0xf48] sm:$0xff]
        %v701 = vld [vmem:[%s158 + $0xf50] sm:$0xff]
        %v702 = vld [vmem:[%s158 + $0xf58] sm:$0xff]
        %v703 = vld [vmem:[%s158 + $0xf60] sm:$0xff]
        %v704 = vld [vmem:[%s158 + $0xf68] sm:$0xff]
        %v705 = vld [vmem:[%s158 + $0xf70] sm:$0xff]
        %v706 = vld [vmem:[%s158 + $0xf78] sm:$0xff]
        %v707 = vld [vmem:[%s158 + $0xf80] sm:$0xff]
        %v708 = vld [vmem:[%s158 + $0xf88] sm:$0xff]
        %v709 = vld [vmem:[%s158 + $0xf90] sm:$0xff]
        %v710 = vld [vmem:[%s158 + $0xf98] sm:$0xff]
        %v711 = vld [vmem:[%s158 + $0xfa0] sm:$0xff]
        %v712 = vld [vmem:[%s158 + $0xfa8] sm:$0xff]
        %v713 = vld [vmem:[%s158 + $0xfb0] sm:$0xff]
        %v714 = vld [vmem:[%s158 + $0xfb8] sm:$0xff]
        %v715 = vld [vmem:[%s158 + $0xfc0] sm:$0xff]
        %v716 = vld [vmem:[%s158 + $0xfc8] sm:$0xff]
        %v717 = vld [vmem:[%s158 + $0xfd0] sm:$0xff]
        %v718 = vld [vmem:[%s158 + $0xfd8] sm:$0xff]
        %v719 = vld [vmem:[%s158 + $0xfe0] sm:$0xff]
        %v720 = vld [vmem:[%s158 + $0xfe8] sm:$0xff]
        %v721 = vld [vmem:[%s158 + $0xff0] sm:$0xff]
        %v722 = vld [vmem:[%s158 + $0xff8] sm:$0xff]
        %v723 = vld [vmem:[%s158 + $0x1000] sm:$0xff]
        %v724 = vld [vmem:[%s158 + $0x1008] sm:$0xff]
        %v725 = vld [vmem:[%s158 + $0x1010] sm:$0xff]
        %v726 = vld [vmem:[%s158 + $0x1018] sm:$0xff]
        %v727 = vld [vmem:[%s158 + $0x1020] sm:$0xff]
        %v728 = vld [vmem:[%s158 + $0x1028] sm:$0xff]
        %v729 = vld [vmem:[%s158 + $0x1030] sm:$0xff]
        %v730 = vld [vmem:[%s158 + $0x1038] sm:$0xff]
        %v731 = vld [vmem:[%s158 + $0x1040] sm:$0xff]
        %v732 = vld [vmem:[%s158 + $0x1048] sm:$0xff]
        %v733 = vld [vmem:[%s158 + $0x1050] sm:$0xff]
        %v734 = vld [vmem:[%s158 + $0x1058] sm:$0xff]
        %v735 = vld [vmem:[%s158 + $0x1060] sm:$0xff]
        %v736 = vld [vmem:[%s158 + $0x1068] sm:$0xff]
        %v737 = vld [vmem:[%s158 + $0x1070] sm:$0xff]
        %v738 = vld [vmem:[%s158 + $0x1078] sm:$0xff]
        %v739 = vld [vmem:[%s158 + $0x1080] sm:$0xff]
        %v740 = vld [vmem:[%s158 + $0x1088] sm:$0xff]
        %v741 = vld [vmem:[%s158 + $0x1090] sm:$0xff]
        %v742 = vld [vmem:[%s158 + $0x1098] sm:$0xff]
        %v743 = vld [vmem:[%s158 + $0x10a0] sm:$0xff]
        %v744 = vld [vmem:[%s158 + $0x10a8] sm:$0xff]
        %v745 = vld [vmem:[%s158 + $0x10b0] sm:$0xff]
        %v746 = vld [vmem:[%s158 + $0x10b8] sm:$0xff]
        %v747 = vld [vmem:[%s158 + $0x10c0] sm:$0xff]
        %v748 = vld [vmem:[%s158 + $0x10c8] sm:$0xff]
        %v749 = vld [vmem:[%s158 + $0x10d0] sm:$0xff]
        %v750 = vld [vmem:[%s158 + $0x10d8] sm:$0xff]
        %v751 = vld [vmem:[%s158 + $0x10e0] sm:$0xff]
        %v752 = vld [vmem:[%s158 + $0x10e8] sm:$0xff]
        %v753 = vld [vmem:[%s158 + $0x10f0] sm:$0xff]
        %v754 = vld [vmem:[%s158 + $0x10f8] sm:$0xff]
        %v755 = vld [vmem:[%s158 + $0x1100] sm:$0xff]
        %v756 = vld [vmem:[%s158 + $0x1108] sm:$0xff]
        %v757 = vld [vmem:[%s158 + $0x1110] sm:$0xff]
        %v758 = vld [vmem:[%s158 + $0x1118] sm:$0xff]
        %v759 = vld [vmem:[%s158 + $0x1120] sm:$0xff]
        %v760 = vld [vmem:[%s158 + $0x1128] sm:$0xff]
        %v761 = vld [vmem:[%s158 + $0x1130] sm:$0xff]
        %v762 = vld [vmem:[%s158 + $0x1138] sm:$0xff]
        %v763 = vld [vmem:[%s158 + $0x1140] sm:$0xff]
        %v764 = vld [vmem:[%s158 + $0x1148] sm:$0xff]
        %v765 = vld [vmem:[%s158 + $0x1150] sm:$0xff]
        %v766 = vld [vmem:[%s158 + $0x1158] sm:$0xff]
        %v767 = vld [vmem:[%s158 + $0x1160] sm:$0xff]
        %v768 = vld [vmem:[%s158 + $0x1168] sm:$0xff]
        %v769 = vld [vmem:[%s158 + $0x1170] sm:$0xff]
        %v770 = vld [vmem:[%s158 + $0x1178] sm:$0xff]
        %v771 = vld [vmem:[%s158 + $0x1180] sm:$0xff]
        %v772 = vld [vmem:[%s158 + $0x1188] sm:$0xff]
        %v773 = vld [vmem:[%s158 + $0x1190] sm:$0xff]
        %v774 = vld [vmem:[%s158 + $0x1198] sm:$0xff]
        %v775 = vld [vmem:[%s158 + $0x11a0] sm:$0xff]
        %v776 = vld [vmem:[%s158 + $0x11a8] sm:$0xff]
        %v777 = vld [vmem:[%s158 + $0x11b0] sm:$0xff]
        %v778 = vld [vmem:[%s158 + $0x11b8] sm:$0xff]
        %v779 = vld [vmem:[%s158 + $0x11c0] sm:$0xff]
        %v780 = vld [vmem:[%s158 + $0x11c8] sm:$0xff]
        %v781 = vld [vmem:[%s158 + $0x11d0] sm:$0xff]
        %v782 = vld [vmem:[%s158 + $0x11d8] sm:$0xff]
        %v783 = vld [vmem:[%s158 + $0x11e0] sm:$0xff]
        %v784 = vld [vmem:[%s158 + $0x11e8] sm:$0xff]
        %v785 = vld [vmem:[%s158 + $0x11f0] sm:$0xff]
        %v786 = vld [vmem:[%s158 + $0x11f8] sm:$0xff]
        %v787 = vld [vmem:[%s158 + $0x1200] sm:$0xff]
        %v788 = vld [vmem:[%s158 + $0x1208] sm:$0xff]
        %v789 = vld [vmem:[%s158 + $0x1210] sm:$0xff]
        %v790 = vld [vmem:[%s158 + $0x1218] sm:$0xff]
        %v791 = vld [vmem:[%s158 + $0x1220] sm:$0xff]
        %v792 = vld [vmem:[%s158 + $0x1228] sm:$0xff]
        %v793 = vld [vmem:[%s158 + $0x1230] sm:$0xff]
        %v794 = vld [vmem:[%s158 + $0x1238] sm:$0xff]
        %v795 = vld [vmem:[%s158 + $0x1240] sm:$0xff]
        %v796 = vld [vmem:[%s158 + $0x1248] sm:$0xff]
        %v797 = vld [vmem:[%s158 + $0x1250] sm:$0xff]
        %v798 = vld [vmem:[%s158 + $0x1258] sm:$0xff]
        %v799 = vld [vmem:[%s158 + $0x1260] sm:$0xff]
        %v800 = vld [vmem:[%s158 + $0x1268] sm:$0xff]
        %v801 = vld [vmem:[%s158 + $0x1270] sm:$0xff]
        %v802 = vld [vmem:[%s158 + $0x1278] sm:$0xff]
        %v803 = vld [vmem:[%s158 + $0x1280] sm:$0xff]
        %v804 = vld [vmem:[%s158 + $0x1288] sm:$0xff]
        %v805 = vld [vmem:[%s158 + $0x1290] sm:$0xff]
        %v806 = vld [vmem:[%s158 + $0x1298] sm:$0xff]
        %v807 = vld [vmem:[%s158 + $0x12a0] sm:$0xff]
        %v808 = vld [vmem:[%s158 + $0x12a8] sm:$0xff]
        %v809 = vld [vmem:[%s158 + $0x12b0] sm:$0xff]
        %v810 = vld [vmem:[%s158 + $0x12b8] sm:$0xff]
        %v811 = vld [vmem:[%s158 + $0x12c0] sm:$0xff]
        %v812 = vld [vmem:[%s158 + $0x12c8] sm:$0xff]
        %v813 = vld [vmem:[%s158 + $0x12d0] sm:$0xff]
        %v814 = vld [vmem:[%s158 + $0x12d8] sm:$0xff]
        %v815 = vld [vmem:[%s158 + $0x12e0] sm:$0xff]
        %v816 = vld [vmem:[%s158 + $0x12e8] sm:$0xff]
        %v817 = vld [vmem:[%s158 + $0x12f0] sm:$0xff]
        %v818 = vld [vmem:[%s158 + $0x12f8] sm:$0xff]
        %v819 = vld [vmem:[%s158 + $0x1300] sm:$0xff]
        %v820 = vld [vmem:[%s158 + $0x1308] sm:$0xff]
        %v821 = vld [vmem:[%s158 + $0x1310] sm:$0xff]
        %v822 = vld [vmem:[%s158 + $0x1318] sm:$0xff]
        %v823 = vld [vmem:[%s158 + $0x1320] sm:$0xff]
        %v824 = vld [vmem:[%s158 + $0x1328] sm:$0xff]
        %v825 = vld [vmem:[%s158 + $0x1330] sm:$0xff]
        %v826 = vld [vmem:[%s158 + $0x1338] sm:$0xff]
        %v827 = vld [vmem:[%s158 + $0x1340] sm:$0xff]
        %v828 = vld [vmem:[%s158 + $0x1348] sm:$0xff]
        %v829 = vld [vmem:[%s158 + $0x1350] sm:$0xff]
        %v830 = vld [vmem:[%s158 + $0x1358] sm:$0xff]
        %v831 = vld [vmem:[%s158 + $0x1360] sm:$0xff]
        %v832 = vld [vmem:[%s158 + $0x1368] sm:$0xff]
        %v833 = vld [vmem:[%s158 + $0x1370] sm:$0xff]
        %v834 = vld [vmem:[%s158 + $0x1378] sm:$0xff]
        %v835 = vld [vmem:[%s158 + $0x1380] sm:$0xff]
        %v836 = vld [vmem:[%s158 + $0x1388] sm:$0xff]
        %v837 = vld [vmem:[%s158 + $0x1390] sm:$0xff]
        %v838 = vld [vmem:[%s158 + $0x1398] sm:$0xff]
        %v839 = vld [vmem:[%s158 + $0x13a0] sm:$0xff]
        %v840 = vld [vmem:[%s158 + $0x13a8] sm:$0xff]
        %v841 = vld [vmem:[%s158 + $0x13b0] sm:$0xff]
        %v842 = vld [vmem:[%s158 + $0x13b8] sm:$0xff]
        %v843 = vld [vmem:[%s158 + $0x13c0] sm:$0xff]
        %v844 = vld [vmem:[%s158 + $0x13c8] sm:$0xff]
        %v845 = vld [vmem:[%s158 + $0x13d0] sm:$0xff]
        %v846 = vld [vmem:[%s158 + $0x13d8] sm:$0xff]
        %v847 = vld [vmem:[%s158 + $0x13e0] sm:$0xff]
        %v848 = vld [vmem:[%s158 + $0x13e8] sm:$0xff]
        %v849 = vld [vmem:[%s158 + $0x13f0] sm:$0xff]
        %v850 = vld [vmem:[%s158 + $0x13f8] sm:$0xff]
        %v851 = vld [vmem:[%s158 + $0x1400] sm:$0xff]
        %v852 = vld [vmem:[%s158 + $0x1408] sm:$0xff]
        %v853 = vld [vmem:[%s158 + $0x1410] sm:$0xff]
        %v854 = vld [vmem:[%s158 + $0x1418] sm:$0xff]
        %v855 = vld [vmem:[%s158 + $0x1420] sm:$0xff]
        %v856 = vld [vmem:[%s158 + $0x1428] sm:$0xff]
        %v857 = vld [vmem:[%s158 + $0x1430] sm:$0xff]
        %v858 = vld [vmem:[%s158 + $0x1438] sm:$0xff]
        %v859 = vld [vmem:[%s158 + $0x1440] sm:$0xff]
        %v860 = vld [vmem:[%s158 + $0x1448] sm:$0xff]
        %v861 = vld [vmem:[%s158 + $0x1450] sm:$0xff]
        %v862 = vld [vmem:[%s158 + $0x1458] sm:$0xff]
        %v863 = vld [vmem:[%s158 + $0x1460] sm:$0xff]
        %v864 = vld [vmem:[%s158 + $0x1468] sm:$0xff]
        %v865 = vld [vmem:[%s158 + $0x1470] sm:$0xff]
        %v866 = vld [vmem:[%s158 + $0x1478] sm:$0xff]
        %v867 = vld [vmem:[%s158 + $0x1480] sm:$0xff]
        %v868 = vld [vmem:[%s158 + $0x1488] sm:$0xff]
        %v869 = vld [vmem:[%s158 + $0x1490] sm:$0xff]
        %v870 = vld [vmem:[%s158 + $0x1498] sm:$0xff]
        %v871 = vld [vmem:[%s158 + $0x14a0] sm:$0xff]
        %v872 = vld [vmem:[%s158 + $0x14a8] sm:$0xff]
        %v873 = vld [vmem:[%s158 + $0x14b0] sm:$0xff]
        %v874 = vld [vmem:[%s158 + $0x14b8] sm:$0xff]
        %v875 = vld [vmem:[%s158 + $0x14c0] sm:$0xff]
        %v876 = vld [vmem:[%s158 + $0x14c8] sm:$0xff]
        %v877 = vld [vmem:[%s158 + $0x14d0] sm:$0xff]
        %v878 = vld [vmem:[%s158 + $0x14d8] sm:$0xff]
        %v879 = vld [vmem:[%s158 + $0x14e0] sm:$0xff]
        %v880 = vld [vmem:[%s158 + $0x14e8] sm:$0xff]
        %v881 = vld [vmem:[%s158 + $0x14f0] sm:$0xff]
        %v882 = vld [vmem:[%s158 + $0x14f8] sm:$0xff]
        %v883 = vld [vmem:[%s158 + $0x1500] sm:$0xff]
        %v884 = vld [vmem:[%s158 + $0x1508] sm:$0xff]
        %v885 = vld [vmem:[%s158 + $0x1510] sm:$0xff]
        %v886 = vld [vmem:[%s158 + $0x1518] sm:$0xff]
        %v887 = vld [vmem:[%s158 + $0x1520] sm:$0xff]
        %v888 = vld [vmem:[%s158 + $0x1528] sm:$0xff]
        %v889 = vld [vmem:[%s158 + $0x1530] sm:$0xff]
        %v890 = vld [vmem:[%s158 + $0x1538] sm:$0xff]
        %v891 = vld [vmem:[%s158 + $0x1540] sm:$0xff]
        %v892 = vld [vmem:[%s158 + $0x1548] sm:$0xff]
        %v893 = vld [vmem:[%s158 + $0x1550] sm:$0xff]
        %v894 = vld [vmem:[%s158 + $0x1558] sm:$0xff]
        %v895 = vld [vmem:[%s158 + $0x1560] sm:$0xff]
        %v896 = vld [vmem:[%s158 + $0x1568] sm:$0xff]
        %v897 = vld [vmem:[%s158 + $0x1570] sm:$0xff]
        %v898 = vld [vmem:[%s158 + $0x1578] sm:$0xff]
        %v899 = vld [vmem:[%s158 + $0x1580] sm:$0xff]
        %v900 = vld [vmem:[%s158 + $0x1588] sm:$0xff]
        %v901 = vld [vmem:[%s158 + $0x1590] sm:$0xff]
        %v902 = vld [vmem:[%s158 + $0x1598] sm:$0xff]
        %v903 = vld [vmem:[%s158 + $0x15a0] sm:$0xff]
        %v904 = vld [vmem:[%s158 + $0x15a8] sm:$0xff]
        %v905 = vld [vmem:[%s158 + $0x15b0] sm:$0xff]
        %v906 = vld [vmem:[%s158 + $0x15b8] sm:$0xff]
        %v907 = vld [vmem:[%s158 + $0x15c0] sm:$0xff]
        %v908 = vld [vmem:[%s158 + $0x15c8] sm:$0xff]
        %v909 = vld [vmem:[%s158 + $0x15d0] sm:$0xff]
        %v910 = vld [vmem:[%s158 + $0x15d8] sm:$0xff]
        %v911 = vld [vmem:[%s158 + $0x15e0] sm:$0xff]
        %v912 = vld [vmem:[%s158 + $0x15e8] sm:$0xff]
        %v913 = vld [vmem:[%s158 + $0x15f0] sm:$0xff]
        %v914 = vld [vmem:[%s158 + $0x15f8] sm:$0xff]
        %v939 = vunpack.c.l.b16 %v187
        %v940 = vunpack.c.h.b16 %v187
        %v941 = vunpack.c.l.b16 %v188
        %v942 = vunpack.c.h.b16 %v188
        %v943 = vunpack.c.l.b16 %v189
        %v944 = vunpack.c.h.b16 %v189
        %v945 = vunpack.c.l.b16 %v190
        %v946 = vunpack.c.h.b16 %v190
        %v947 = vunpack.c.l.b16 %v191
        %v948 = vunpack.c.h.b16 %v191
        %v949 = vunpack.c.l.b16 %v192
        %v950 = vunpack.c.l.b16 %v193
        %v951 = vunpack.c.h.b16 %v193
        %v952 = vunpack.c.l.b16 %v194
        %v953 = vunpack.c.h.b16 %v194
        %v954 = vunpack.c.l.b16 %v195
        %v955 = vunpack.c.h.b16 %v195
        %v956 = vunpack.c.l.b16 %v196
        %v957 = vunpack.c.h.b16 %v196
        %v958 = vunpack.c.l.b16 %v197
        %v959 = vunpack.c.h.b16 %v197
        %v960 = vunpack.c.l.b16 %v198
        %v961 = vunpack.c.l.b16 %v199
        %v962 = vunpack.c.h.b16 %v199
        %v963 = vunpack.c.l.b16 %v200
        %v964 = vunpack.c.h.b16 %v200
        %v965 = vunpack.c.l.b16 %v201
        %v966 = vunpack.c.h.b16 %v201
        %v967 = vunpack.c.l.b16 %v202
        %v968 = vunpack.c.h.b16 %v202
        %v969 = vunpack.c.l.b16 %v203
        %v970 = vunpack.c.h.b16 %v203
        %v971 = vunpack.c.l.b16 %v204
        %v972 = vunpack.c.l.b16 %v205
        %v973 = vunpack.c.h.b16 %v205
        %v974 = vunpack.c.l.b16 %v206
        %v975 = vunpack.c.h.b16 %v206
        %v976 = vunpack.c.l.b16 %v207
        %v977 = vunpack.c.h.b16 %v207
        %v978 = vunpack.c.l.b16 %v208
        %v979 = vunpack.c.h.b16 %v208
        %v980 = vunpack.c.l.b16 %v209
        %v981 = vunpack.c.h.b16 %v209
        %v982 = vunpack.c.l.b16 %v210
        %v983 = vpack.c.b16 %v950, %v939
        %v984 = vpack.c.b16 %v951, %v940
        %v985 = vpack.c.b16 %v952, %v941
        %v986 = vpack.c.b16 %v953, %v942
        %v987 = vpack.c.b16 %v954, %v943
        %v988 = vpack.c.b16 %v955, %v944
        %v989 = vpack.c.b16 %v956, %v945
        %v990 = vpack.c.b16 %v957, %v946
        %v991 = vpack.c.b16 %v958, %v947
        %v992 = vpack.c.b16 %v959, %v948
        %v993 = vpack.c.b16 %v960, %v949
        %v994 = vpack.c.b16 %v972, %v961
        %v995 = vpack.c.b16 %v973, %v962
        %v996 = vpack.c.b16 %v974, %v963
        %v997 = vpack.c.b16 %v975, %v964
        %v998 = vpack.c.b16 %v976, %v965
        %v999 = vpack.c.b16 %v977, %v966
        %v1000 = vpack.c.b16 %v978, %v967
        %v1001 = vpack.c.b16 %v979, %v968
        %v1002 = vpack.c.b16 %v980, %v969
        %v1003 = vpack.c.b16 %v981, %v970
        %v1004 = vpack.c.b16 %v982, %v971
        %v1731 = vunpack.c.l.b16 %v211
        %v1732 = vunpack.c.h.b16 %v211
        %v1733 = vunpack.c.l.b16 %v212
        %v1734 = vunpack.c.h.b16 %v212
        %v1735 = vunpack.c.l.b16 %v213
        %v1736 = vunpack.c.h.b16 %v213
        %v1737 = vunpack.c.l.b16 %v214
        %v1738 = vunpack.c.h.b16 %v214
        %v1739 = vunpack.c.l.b16 %v215
        %v1740 = vunpack.c.h.b16 %v215
        %v1741 = vunpack.c.l.b16 %v216
        %v1742 = vunpack.c.h.b16 %v216
        %v1743 = vunpack.c.l.b16 %v217
        %v1744 = vunpack.c.h.b16 %v217
        %v1745 = vunpack.c.l.b16 %v218
        %v1746 = vunpack.c.h.b16 %v218
        %v1747 = vunpack.c.l.b16 %v219
        %v1748 = vunpack.c.h.b16 %v219
        %v1749 = vunpack.c.l.b16 %v220
        %v1750 = vunpack.c.h.b16 %v220
        %v1751 = vunpack.c.l.b16 %v221
        %v1752 = vunpack.c.h.b16 %v221
        %v1753 = vunpack.c.l.b16 %v222
        %v1754 = vunpack.c.h.b16 %v222
        %v1755 = vunpack.c.l.b16 %v223
        %v1756 = vunpack.c.h.b16 %v223
        %v1757 = vunpack.c.l.b16 %v224
        %v1758 = vunpack.c.h.b16 %v224
        %v1759 = vunpack.c.l.b16 %v225
        %v1760 = vunpack.c.h.b16 %v225
        %v1761 = vunpack.c.l.b16 %v226
        %v1762 = vunpack.c.h.b16 %v226
        %v1763 = vunpack.c.l.b16 %v227
        %v1764 = vunpack.c.h.b16 %v227
        %v1765 = vunpack.c.l.b16 %v228
        %v1766 = vunpack.c.h.b16 %v228
        %v1767 = vunpack.c.l.b16 %v229
        %v1768 = vunpack.c.h.b16 %v229
        %v1769 = vunpack.c.l.b16 %v230
        %v1770 = vunpack.c.h.b16 %v230
        %v1771 = vunpack.c.l.b16 %v231
        %v1772 = vunpack.c.h.b16 %v231
        %v1773 = vunpack.c.l.b16 %v232
        %v1774 = vunpack.c.h.b16 %v232
        %v1775 = vunpack.c.l.b16 %v233
        %v1776 = vunpack.c.h.b16 %v233
        %v1777 = vunpack.c.l.b16 %v234
        %v1778 = vunpack.c.h.b16 %v234
        %v1779 = vunpack.c.l.b16 %v235
        %v1780 = vunpack.c.h.b16 %v235
        %v1781 = vunpack.c.l.b16 %v236
        %v1782 = vunpack.c.h.b16 %v236
        %v1783 = vunpack.c.l.b16 %v237
        %v1784 = vunpack.c.h.b16 %v237
        %v1785 = vunpack.c.l.b16 %v238
        %v1786 = vunpack.c.h.b16 %v238
        %v1787 = vunpack.c.l.b16 %v239
        %v1788 = vunpack.c.h.b16 %v239
        %v1789 = vunpack.c.l.b16 %v240
        %v1790 = vunpack.c.h.b16 %v240
        %v1791 = vunpack.c.l.b16 %v241
        %v1792 = vunpack.c.h.b16 %v241
        %v1793 = vunpack.c.l.b16 %v242
        %v1794 = vunpack.c.h.b16 %v242
        %v1795 = vunpack.c.l.b16 %v243
        %v1796 = vunpack.c.h.b16 %v243
        %v1797 = vunpack.c.l.b16 %v244
        %v1798 = vunpack.c.h.b16 %v244
        %v1799 = vunpack.c.l.b16 %v245
        %v1800 = vunpack.c.h.b16 %v245
        %v1801 = vunpack.c.l.b16 %v246
        %v1802 = vunpack.c.h.b16 %v246
        %v1803 = vunpack.c.l.b16 %v247
        %v1804 = vunpack.c.h.b16 %v247
        %v1805 = vunpack.c.l.b16 %v248
        %v1806 = vunpack.c.h.b16 %v248
        %v1807 = vunpack.c.l.b16 %v249
        %v1808 = vunpack.c.h.b16 %v249
        %v1809 = vunpack.c.l.b16 %v250
        %v1810 = vunpack.c.h.b16 %v250
        %v1811 = vunpack.c.l.b16 %v251
        %v1812 = vunpack.c.h.b16 %v251
        %v1813 = vunpack.c.l.b16 %v252
        %v1814 = vunpack.c.h.b16 %v252
        %v1815 = vunpack.c.l.b16 %v253
        %v1816 = vunpack.c.h.b16 %v253
        %v1817 = vunpack.c.l.b16 %v254
        %v1818 = vunpack.c.h.b16 %v254
        %v1819 = vunpack.c.l.b16 %v255
        %v1820 = vunpack.c.h.b16 %v255
        %v1821 = vunpack.c.l.b16 %v256
        %v1822 = vunpack.c.h.b16 %v256
        %v1823 = vunpack.c.l.b16 %v257
        %v1824 = vunpack.c.h.b16 %v257
        %v1825 = vunpack.c.l.b16 %v258
        %v1826 = vunpack.c.h.b16 %v258
        %v1827 = vunpack.c.l.b16 %v259
        %v1828 = vunpack.c.h.b16 %v259
        %v1829 = vunpack.c.l.b16 %v260
        %v1830 = vunpack.c.h.b16 %v260
        %v1831 = vunpack.c.l.b16 %v261
        %v1832 = vunpack.c.h.b16 %v261
        %v1833 = vunpack.c.l.b16 %v262
        %v1834 = vunpack.c.h.b16 %v262
        %v1835 = vunpack.c.l.b16 %v263
        %v1836 = vunpack.c.h.b16 %v263
        %v1837 = vunpack.c.l.b16 %v264
        %v1838 = vunpack.c.h.b16 %v264
        %v1839 = vunpack.c.l.b16 %v265
        %v1840 = vunpack.c.h.b16 %v265
        %v1841 = vunpack.c.l.b16 %v266
        %v1842 = vunpack.c.h.b16 %v266
        %v1843 = vunpack.c.l.b16 %v267
        %v1844 = vunpack.c.h.b16 %v267
        %v1845 = vunpack.c.l.b16 %v268
        %v1846 = vunpack.c.h.b16 %v268
        %v1847 = vunpack.c.l.b16 %v269
        %v1848 = vunpack.c.h.b16 %v269
        %v1849 = vunpack.c.l.b16 %v270
        %v1850 = vunpack.c.h.b16 %v270
        %v1851 = vunpack.c.l.b16 %v271
        %v1852 = vunpack.c.h.b16 %v271
        %v1853 = vunpack.c.l.b16 %v272
        %v1854 = vunpack.c.h.b16 %v272
        %v1855 = vunpack.c.l.b16 %v273
        %v1856 = vunpack.c.h.b16 %v273
        %v1857 = vunpack.c.l.b16 %v274
        %v1858 = vunpack.c.h.b16 %v274
        %v1859 = vunpack.c.l.b16 %v275
        %v1860 = vunpack.c.h.b16 %v275
        %v1861 = vunpack.c.l.b16 %v276
        %v1862 = vunpack.c.h.b16 %v276
        %v1863 = vunpack.c.l.b16 %v277
        %v1864 = vunpack.c.h.b16 %v277
        %v1865 = vunpack.c.l.b16 %v278
        %v1866 = vunpack.c.h.b16 %v278
        %v1867 = vunpack.c.l.b16 %v279
        %v1868 = vunpack.c.h.b16 %v279
        %v1869 = vunpack.c.l.b16 %v280
        %v1870 = vunpack.c.h.b16 %v280
        %v1871 = vunpack.c.l.b16 %v281
        %v1872 = vunpack.c.h.b16 %v281
        %v1873 = vunpack.c.l.b16 %v282
        %v1874 = vunpack.c.h.b16 %v282
        %v1875 = vunpack.c.l.b16 %v283
        %v1876 = vunpack.c.h.b16 %v283
        %v1877 = vunpack.c.l.b16 %v284
        %v1878 = vunpack.c.h.b16 %v284
        %v1879 = vunpack.c.l.b16 %v285
        %v1880 = vunpack.c.h.b16 %v285
        %v1881 = vunpack.c.l.b16 %v286
        %v1882 = vunpack.c.h.b16 %v286
        %v1883 = vunpack.c.l.b16 %v287
        %v1884 = vunpack.c.h.b16 %v287
        %v1885 = vunpack.c.l.b16 %v288
        %v1886 = vunpack.c.h.b16 %v288
        %v1887 = vunpack.c.l.b16 %v289
        %v1888 = vunpack.c.h.b16 %v289
        %v1889 = vunpack.c.l.b16 %v290
        %v1890 = vunpack.c.h.b16 %v290
        %v1891 = vunpack.c.l.b16 %v291
        %v1892 = vunpack.c.h.b16 %v291
        %v1893 = vunpack.c.l.b16 %v292
        %v1894 = vunpack.c.h.b16 %v292
        %v1895 = vunpack.c.l.b16 %v293
        %v1896 = vunpack.c.h.b16 %v293
        %v1897 = vunpack.c.l.b16 %v294
        %v1898 = vunpack.c.h.b16 %v294
        %v1899 = vunpack.c.l.b16 %v295
        %v1900 = vunpack.c.h.b16 %v295
        %v1901 = vunpack.c.l.b16 %v296
        %v1902 = vunpack.c.h.b16 %v296
        %v1903 = vunpack.c.l.b16 %v297
        %v1904 = vunpack.c.h.b16 %v297
        %v1905 = vunpack.c.l.b16 %v298
        %v1906 = vunpack.c.h.b16 %v298
        %v1907 = vunpack.c.l.b16 %v299
        %v1908 = vunpack.c.h.b16 %v299
        %v1909 = vunpack.c.l.b16 %v300
        %v1910 = vunpack.c.h.b16 %v300
        %v1911 = vunpack.c.l.b16 %v301
        %v1912 = vunpack.c.h.b16 %v301
        %v1913 = vunpack.c.l.b16 %v302
        %v1914 = vunpack.c.h.b16 %v302
        %v1915 = vunpack.c.l.b16 %v303
        %v1916 = vunpack.c.h.b16 %v303
        %v1917 = vunpack.c.l.b16 %v304
        %v1918 = vunpack.c.h.b16 %v304
        %v1919 = vunpack.c.l.b16 %v305
        %v1920 = vunpack.c.h.b16 %v305
        %v1921 = vunpack.c.l.b16 %v306
        %v1922 = vunpack.c.h.b16 %v306
        %v1923 = vunpack.c.l.b16 %v307
        %v1924 = vunpack.c.h.b16 %v307
        %v1925 = vunpack.c.l.b16 %v308
        %v1926 = vunpack.c.h.b16 %v308
        %v1927 = vunpack.c.l.b16 %v309
        %v1928 = vunpack.c.h.b16 %v309
        %v1929 = vunpack.c.l.b16 %v310
        %v1930 = vunpack.c.h.b16 %v310
        %v1931 = vunpack.c.l.b16 %v311
        %v1932 = vunpack.c.h.b16 %v311
        %v1933 = vunpack.c.l.b16 %v312
        %v1934 = vunpack.c.h.b16 %v312
        %v1935 = vunpack.c.l.b16 %v313
        %v1936 = vunpack.c.h.b16 %v313
        %v1937 = vunpack.c.l.b16 %v314
        %v1938 = vunpack.c.h.b16 %v314
        %v1939 = vunpack.c.l.b16 %v315
        %v1940 = vunpack.c.h.b16 %v315
        %v1941 = vunpack.c.l.b16 %v316
        %v1942 = vunpack.c.h.b16 %v316
        %v1943 = vunpack.c.l.b16 %v317
        %v1944 = vunpack.c.h.b16 %v317
        %v1945 = vunpack.c.l.b16 %v318
        %v1946 = vunpack.c.h.b16 %v318
        %v1947 = vunpack.c.l.b16 %v319
        %v1948 = vunpack.c.h.b16 %v319
        %v1949 = vunpack.c.l.b16 %v320
        %v1950 = vunpack.c.h.b16 %v320
        %v1951 = vunpack.c.l.b16 %v321
        %v1952 = vunpack.c.h.b16 %v321
        %v1953 = vunpack.c.l.b16 %v322
        %v1954 = vunpack.c.h.b16 %v322
        %v1955 = vunpack.c.l.b16 %v323
        %v1956 = vunpack.c.h.b16 %v323
        %v1957 = vunpack.c.l.b16 %v324
        %v1958 = vunpack.c.h.b16 %v324
        %v1959 = vunpack.c.l.b16 %v325
        %v1960 = vunpack.c.h.b16 %v325
        %v1961 = vunpack.c.l.b16 %v326
        %v1962 = vunpack.c.h.b16 %v326
        %v1963 = vunpack.c.l.b16 %v327
        %v1964 = vunpack.c.h.b16 %v327
        %v1965 = vunpack.c.l.b16 %v328
        %v1966 = vunpack.c.h.b16 %v328
        %v1967 = vunpack.c.l.b16 %v329
        %v1968 = vunpack.c.h.b16 %v329
        %v1969 = vunpack.c.l.b16 %v330
        %v1970 = vunpack.c.h.b16 %v330
        %v1971 = vunpack.c.l.b16 %v331
        %v1972 = vunpack.c.h.b16 %v331
        %v1973 = vunpack.c.l.b16 %v332
        %v1974 = vunpack.c.h.b16 %v332
        %v1975 = vunpack.c.l.b16 %v333
        %v1976 = vunpack.c.h.b16 %v333
        %v1977 = vunpack.c.l.b16 %v334
        %v1978 = vunpack.c.h.b16 %v334
        %v1979 = vunpack.c.l.b16 %v335
        %v1980 = vunpack.c.h.b16 %v335
        %v1981 = vunpack.c.l.b16 %v336
        %v1982 = vunpack.c.h.b16 %v336
        %v1983 = vunpack.c.l.b16 %v337
        %v1984 = vunpack.c.h.b16 %v337
        %v1985 = vunpack.c.l.b16 %v338
        %v1986 = vunpack.c.h.b16 %v338
        %v1987 = vunpack.c.l.b16 %v339
        %v1988 = vunpack.c.h.b16 %v339
        %v1989 = vunpack.c.l.b16 %v340
        %v1990 = vunpack.c.h.b16 %v340
        %v1991 = vunpack.c.l.b16 %v341
        %v1992 = vunpack.c.h.b16 %v341
        %v1993 = vunpack.c.l.b16 %v342
        %v1994 = vunpack.c.h.b16 %v342
        %v1995 = vunpack.c.l.b16 %v343
        %v1996 = vunpack.c.h.b16 %v343
        %v1997 = vunpack.c.l.b16 %v344
        %v1998 = vunpack.c.h.b16 %v344
        %v1999 = vunpack.c.l.b16 %v345
        %v2000 = vunpack.c.h.b16 %v345
        %v2001 = vunpack.c.l.b16 %v346
        %v2002 = vunpack.c.h.b16 %v346
        %v2003 = vunpack.c.l.b16 %v347
        %v2004 = vunpack.c.h.b16 %v347
        %v2005 = vunpack.c.l.b16 %v348
        %v2006 = vunpack.c.h.b16 %v348
        %v2007 = vunpack.c.l.b16 %v349
        %v2008 = vunpack.c.h.b16 %v349
        %v2009 = vunpack.c.l.b16 %v350
        %v2010 = vunpack.c.h.b16 %v350
        %v2011 = vunpack.c.l.b16 %v351
        %v2012 = vunpack.c.h.b16 %v351
        %v2013 = vunpack.c.l.b16 %v352
        %v2014 = vunpack.c.h.b16 %v352
        %v2015 = vunpack.c.l.b16 %v353
        %v2016 = vunpack.c.h.b16 %v353
        %v2017 = vunpack.c.l.b16 %v354
        %v2018 = vunpack.c.h.b16 %v354
        %v2019 = vunpack.c.l.b16 %v355
        %v2020 = vunpack.c.h.b16 %v355
        %v2021 = vunpack.c.l.b16 %v356
        %v2022 = vunpack.c.h.b16 %v356
        %v2023 = vunpack.c.l.b16 %v357
        %v2024 = vunpack.c.h.b16 %v357
        %v2025 = vunpack.c.l.b16 %v358
        %v2026 = vunpack.c.h.b16 %v358
        %v2027 = vunpack.c.l.b16 %v359
        %v2028 = vunpack.c.h.b16 %v359
        %v2029 = vunpack.c.l.b16 %v360
        %v2030 = vunpack.c.h.b16 %v360
        %v2031 = vunpack.c.l.b16 %v361
        %v2032 = vunpack.c.h.b16 %v361
        %v2033 = vunpack.c.l.b16 %v362
        %v2034 = vunpack.c.h.b16 %v362
        %v2035 = vunpack.c.l.b16 %v363
        %v2036 = vunpack.c.h.b16 %v363
        %v2037 = vunpack.c.l.b16 %v364
        %v2038 = vunpack.c.h.b16 %v364
        %v2039 = vunpack.c.l.b16 %v365
        %v2040 = vunpack.c.h.b16 %v365
        %v2041 = vunpack.c.l.b16 %v366
        %v2042 = vunpack.c.h.b16 %v366
        %v2043 = vunpack.c.l.b16 %v367
        %v2044 = vunpack.c.h.b16 %v367
        %v2045 = vunpack.c.l.b16 %v368
        %v2046 = vunpack.c.h.b16 %v368
        %v2047 = vunpack.c.l.b16 %v369
        %v2048 = vunpack.c.h.b16 %v369
        %v2049 = vunpack.c.l.b16 %v370
        %v2050 = vunpack.c.h.b16 %v370
        %v2051 = vunpack.c.l.b16 %v371
        %v2052 = vunpack.c.h.b16 %v371
        %v2053 = vunpack.c.l.b16 %v372
        %v2054 = vunpack.c.h.b16 %v372
        %v2055 = vunpack.c.l.b16 %v373
        %v2056 = vunpack.c.h.b16 %v373
        %v2057 = vunpack.c.l.b16 %v374
        %v2058 = vunpack.c.h.b16 %v374
        %v2059 = vunpack.c.l.b16 %v375
        %v2060 = vunpack.c.h.b16 %v375
        %v2061 = vunpack.c.l.b16 %v376
        %v2062 = vunpack.c.h.b16 %v376
        %v2063 = vunpack.c.l.b16 %v377
        %v2064 = vunpack.c.h.b16 %v377
        %v2065 = vunpack.c.l.b16 %v378
        %v2066 = vunpack.c.h.b16 %v378
        %v2067 = vunpack.c.l.b16 %v379
        %v2068 = vunpack.c.h.b16 %v379
        %v2069 = vunpack.c.l.b16 %v380
        %v2070 = vunpack.c.h.b16 %v380
        %v2071 = vunpack.c.l.b16 %v381
        %v2072 = vunpack.c.h.b16 %v381
        %v2073 = vunpack.c.l.b16 %v382
        %v2074 = vunpack.c.h.b16 %v382
        %v2075 = vunpack.c.l.b16 %v383
        %v2076 = vunpack.c.h.b16 %v383
        %v2077 = vunpack.c.l.b16 %v384
        %v2078 = vunpack.c.h.b16 %v384
        %v2079 = vunpack.c.l.b16 %v385
        %v2080 = vunpack.c.h.b16 %v385
        %v2081 = vunpack.c.l.b16 %v386
        %v2082 = vunpack.c.h.b16 %v386
        %v2083 = vunpack.c.l.b16 %v387
        %v2084 = vunpack.c.h.b16 %v387
        %v2085 = vunpack.c.l.b16 %v388
        %v2086 = vunpack.c.h.b16 %v388
        %v2087 = vunpack.c.l.b16 %v389
        %v2088 = vunpack.c.h.b16 %v389
        %v2089 = vunpack.c.l.b16 %v390
        %v2090 = vunpack.c.h.b16 %v390
        %v2091 = vunpack.c.l.b16 %v391
        %v2092 = vunpack.c.h.b16 %v391
        %v2093 = vunpack.c.l.b16 %v392
        %v2094 = vunpack.c.h.b16 %v392
        %v2095 = vunpack.c.l.b16 %v393
        %v2096 = vunpack.c.h.b16 %v393
        %v2097 = vunpack.c.l.b16 %v394
        %v2098 = vunpack.c.h.b16 %v394
        %v2099 = vunpack.c.l.b16 %v395
        %v2100 = vunpack.c.h.b16 %v395
        %v2101 = vunpack.c.l.b16 %v396
        %v2102 = vunpack.c.h.b16 %v396
        %v2103 = vunpack.c.l.b16 %v397
        %v2104 = vunpack.c.h.b16 %v397
        %v2105 = vunpack.c.l.b16 %v398
        %v2106 = vunpack.c.h.b16 %v398
        %v2107 = vunpack.c.l.b16 %v399
        %v2108 = vunpack.c.h.b16 %v399
        %v2109 = vunpack.c.l.b16 %v400
        %v2110 = vunpack.c.h.b16 %v400
        %v2111 = vunpack.c.l.b16 %v401
        %v2112 = vunpack.c.h.b16 %v401
        %v2113 = vunpack.c.l.b16 %v402
        %v2114 = vunpack.c.h.b16 %v402
        %v2115 = vunpack.c.l.b16 %v403
        %v2116 = vunpack.c.h.b16 %v403
        %v2117 = vunpack.c.l.b16 %v404
        %v2118 = vunpack.c.h.b16 %v404
        %v2119 = vunpack.c.l.b16 %v405
        %v2120 = vunpack.c.h.b16 %v405
        %v2121 = vunpack.c.l.b16 %v406
        %v2122 = vunpack.c.h.b16 %v406
        %v2123 = vunpack.c.l.b16 %v407
        %v2124 = vunpack.c.h.b16 %v407
        %v2125 = vunpack.c.l.b16 %v408
        %v2126 = vunpack.c.h.b16 %v408
        %v2127 = vunpack.c.l.b16 %v409
        %v2128 = vunpack.c.h.b16 %v409
        %v2129 = vunpack.c.l.b16 %v410
        %v2130 = vunpack.c.h.b16 %v410
        %v2131 = vunpack.c.l.b16 %v411
        %v2132 = vunpack.c.h.b16 %v411
        %v2133 = vunpack.c.l.b16 %v412
        %v2134 = vunpack.c.h.b16 %v412
        %v2135 = vunpack.c.l.b16 %v413
        %v2136 = vunpack.c.h.b16 %v413
        %v2137 = vunpack.c.l.b16 %v414
        %v2138 = vunpack.c.h.b16 %v414
        %v2139 = vunpack.c.l.b16 %v415
        %v2140 = vunpack.c.h.b16 %v415
        %v2141 = vunpack.c.l.b16 %v416
        %v2142 = vunpack.c.h.b16 %v416
        %v2143 = vunpack.c.l.b16 %v417
        %v2144 = vunpack.c.h.b16 %v417
        %v2145 = vunpack.c.l.b16 %v418
        %v2146 = vunpack.c.h.b16 %v418
        %v2147 = vunpack.c.l.b16 %v419
        %v2148 = vunpack.c.h.b16 %v419
        %v2149 = vunpack.c.l.b16 %v420
        %v2150 = vunpack.c.h.b16 %v420
        %v2151 = vunpack.c.l.b16 %v421
        %v2152 = vunpack.c.h.b16 %v421
        %v2153 = vunpack.c.l.b16 %v422
        %v2154 = vunpack.c.h.b16 %v422
        %v2155 = vunpack.c.l.b16 %v423
        %v2156 = vunpack.c.h.b16 %v423
        %v2157 = vunpack.c.l.b16 %v424
        %v2158 = vunpack.c.h.b16 %v424
        %v2159 = vunpack.c.l.b16 %v425
        %v2160 = vunpack.c.h.b16 %v425
        %v2161 = vunpack.c.l.b16 %v426
        %v2162 = vunpack.c.h.b16 %v426
        %v2163 = vunpack.c.l.b16 %v427
        %v2164 = vunpack.c.h.b16 %v427
        %v2165 = vunpack.c.l.b16 %v428
        %v2166 = vunpack.c.h.b16 %v428
        %v2167 = vunpack.c.l.b16 %v429
        %v2168 = vunpack.c.h.b16 %v429
        %v2169 = vunpack.c.l.b16 %v430
        %v2170 = vunpack.c.h.b16 %v430
        %v2171 = vunpack.c.l.b16 %v431
        %v2172 = vunpack.c.h.b16 %v431
        %v2173 = vunpack.c.l.b16 %v432
        %v2174 = vunpack.c.h.b16 %v432
        %v2175 = vunpack.c.l.b16 %v433
        %v2176 = vunpack.c.h.b16 %v433
        %v2177 = vunpack.c.l.b16 %v434
        %v2178 = vunpack.c.h.b16 %v434
        %v2179 = vunpack.c.l.b16 %v435
        %v2180 = vunpack.c.h.b16 %v435
        %v2181 = vunpack.c.l.b16 %v436
        %v2182 = vunpack.c.h.b16 %v436
        %v2183 = vunpack.c.l.b16 %v437
        %v2184 = vunpack.c.h.b16 %v437
        %v2185 = vunpack.c.l.b16 %v438
        %v2186 = vunpack.c.h.b16 %v438
        %v2187 = vunpack.c.l.b16 %v439
        %v2188 = vunpack.c.h.b16 %v439
        %v2189 = vunpack.c.l.b16 %v440
        %v2190 = vunpack.c.h.b16 %v440
        %v2191 = vunpack.c.l.b16 %v441
        %v2192 = vunpack.c.h.b16 %v441
        %v2193 = vunpack.c.l.b16 %v442
        %v2194 = vunpack.c.h.b16 %v442
        %v2195 = vunpack.c.l.b16 %v443
        %v2196 = vunpack.c.h.b16 %v443
        %v2197 = vunpack.c.l.b16 %v444
        %v2198 = vunpack.c.h.b16 %v444
        %v2199 = vunpack.c.l.b16 %v445
        %v2200 = vunpack.c.h.b16 %v445
        %v2201 = vunpack.c.l.b16 %v446
        %v2202 = vunpack.c.h.b16 %v446
        %v2203 = vunpack.c.l.b16 %v447
        %v2204 = vunpack.c.h.b16 %v447
        %v2205 = vunpack.c.l.b16 %v448
        %v2206 = vunpack.c.h.b16 %v448
        %v2207 = vunpack.c.l.b16 %v449
        %v2208 = vunpack.c.h.b16 %v449
        %v2209 = vunpack.c.l.b16 %v450
        %v2210 = vunpack.c.h.b16 %v450
        %v2211 = vunpack.c.l.b16 %v451
        %v2212 = vunpack.c.h.b16 %v451
        %v2213 = vunpack.c.l.b16 %v452
        %v2214 = vunpack.c.h.b16 %v452
        %v2215 = vunpack.c.l.b16 %v453
        %v2216 = vunpack.c.h.b16 %v453
        %v2217 = vunpack.c.l.b16 %v454
        %v2218 = vunpack.c.h.b16 %v454
        %v2219 = vunpack.c.l.b16 %v455
        %v2220 = vunpack.c.h.b16 %v455
        %v2221 = vunpack.c.l.b16 %v456
        %v2222 = vunpack.c.h.b16 %v456
        %v2223 = vunpack.c.l.b16 %v457
        %v2224 = vunpack.c.h.b16 %v457
        %v2225 = vunpack.c.l.b16 %v458
        %v2226 = vunpack.c.h.b16 %v458
        %v2227 = vunpack.c.l.b16 %v459
        %v2228 = vunpack.c.h.b16 %v459
        %v2229 = vunpack.c.l.b16 %v460
        %v2230 = vunpack.c.h.b16 %v460
        %v2231 = vunpack.c.l.b16 %v461
        %v2232 = vunpack.c.h.b16 %v461
        %v2233 = vunpack.c.l.b16 %v462
        %v2234 = vunpack.c.h.b16 %v462
        %v2235 = vunpack.c.l.b16 %v463
        %v2236 = vunpack.c.h.b16 %v463
        %v2237 = vunpack.c.l.b16 %v464
        %v2238 = vunpack.c.h.b16 %v464
        %v2239 = vunpack.c.l.b16 %v465
        %v2240 = vunpack.c.h.b16 %v465
        %v2241 = vunpack.c.l.b16 %v466
        %v2242 = vunpack.c.h.b16 %v466
        %v2243 = vunpack.c.l.b16 %v467
        %v2244 = vunpack.c.h.b16 %v467
        %v2245 = vunpack.c.l.b16 %v468
        %v2246 = vunpack.c.h.b16 %v468
        %v2247 = vunpack.c.l.b16 %v469
        %v2248 = vunpack.c.h.b16 %v469
        %v2249 = vunpack.c.l.b16 %v470
        %v2250 = vunpack.c.h.b16 %v470
        %v2251 = vunpack.c.l.b16 %v471
        %v2252 = vunpack.c.h.b16 %v471
        %v2253 = vunpack.c.l.b16 %v472
        %v2254 = vunpack.c.h.b16 %v472
        %v2255 = vunpack.c.l.b16 %v473
        %v2256 = vunpack.c.h.b16 %v473
        %v2257 = vunpack.c.l.b16 %v474
        %v2258 = vunpack.c.h.b16 %v474
        %v2259 = vunpack.c.l.b16 %v475
        %v2260 = vunpack.c.h.b16 %v475
        %v2261 = vunpack.c.l.b16 %v476
        %v2262 = vunpack.c.h.b16 %v476
        %v2263 = vunpack.c.l.b16 %v477
        %v2264 = vunpack.c.h.b16 %v477
        %v2265 = vunpack.c.l.b16 %v478
        %v2266 = vunpack.c.h.b16 %v478
        %v2267 = vunpack.c.l.b16 %v479
        %v2268 = vunpack.c.h.b16 %v479
        %v2269 = vunpack.c.l.b16 %v480
        %v2270 = vunpack.c.h.b16 %v480
        %v2271 = vunpack.c.l.b16 %v481
        %v2272 = vunpack.c.h.b16 %v481
        %v2273 = vunpack.c.l.b16 %v482
        %v2274 = vunpack.c.h.b16 %v482
        %v2275 = vunpack.c.l.b16 %v483
        %v2276 = vunpack.c.h.b16 %v483
        %v2277 = vunpack.c.l.b16 %v484
        %v2278 = vunpack.c.h.b16 %v484
        %v2279 = vunpack.c.l.b16 %v485
        %v2280 = vunpack.c.h.b16 %v485
        %v2281 = vunpack.c.l.b16 %v486
        %v2282 = vunpack.c.h.b16 %v486
        %v2283 = vunpack.c.l.b16 %v487
        %v2284 = vunpack.c.h.b16 %v487
        %v2285 = vunpack.c.l.b16 %v488
        %v2286 = vunpack.c.h.b16 %v488
        %v2287 = vunpack.c.l.b16 %v489
        %v2288 = vunpack.c.h.b16 %v489
        %v2289 = vunpack.c.l.b16 %v490
        %v2290 = vunpack.c.h.b16 %v490
        %v2291 = vunpack.c.l.b16 %v491
        %v2292 = vunpack.c.h.b16 %v491
        %v2293 = vunpack.c.l.b16 %v492
        %v2294 = vunpack.c.h.b16 %v492
        %v2295 = vunpack.c.l.b16 %v493
        %v2296 = vunpack.c.h.b16 %v493
        %v2297 = vunpack.c.l.b16 %v494
        %v2298 = vunpack.c.h.b16 %v494
        %v2299 = vunpack.c.l.b16 %v495
        %v2300 = vunpack.c.h.b16 %v495
        %v2301 = vunpack.c.l.b16 %v496
        %v2302 = vunpack.c.h.b16 %v496
        %v2303 = vunpack.c.l.b16 %v497
        %v2304 = vunpack.c.h.b16 %v497
        %v2305 = vunpack.c.l.b16 %v498
        %v2306 = vunpack.c.h.b16 %v498
        %v2307 = vunpack.c.l.b16 %v499
        %v2308 = vunpack.c.h.b16 %v499
        %v2309 = vunpack.c.l.b16 %v500
        %v2310 = vunpack.c.h.b16 %v500
        %v2311 = vunpack.c.l.b16 %v501
        %v2312 = vunpack.c.h.b16 %v501
        %v2313 = vunpack.c.l.b16 %v502
        %v2314 = vunpack.c.h.b16 %v502
        %v2315 = vunpack.c.l.b16 %v503
        %v2316 = vunpack.c.h.b16 %v503
        %v2317 = vunpack.c.l.b16 %v504
        %v2318 = vunpack.c.h.b16 %v504
        %v2319 = vunpack.c.l.b16 %v505
        %v2320 = vunpack.c.h.b16 %v505
        %v2321 = vunpack.c.l.b16 %v506
        %v2322 = vunpack.c.h.b16 %v506
        %v2323 = vunpack.c.l.b16 %v507
        %v2324 = vunpack.c.h.b16 %v507
        %v2325 = vunpack.c.l.b16 %v508
        %v2326 = vunpack.c.h.b16 %v508
        %v2327 = vunpack.c.l.b16 %v509
        %v2328 = vunpack.c.h.b16 %v509
        %v2329 = vunpack.c.l.b16 %v510
        %v2330 = vunpack.c.h.b16 %v510
        %v2331 = vunpack.c.l.b16 %v511
        %v2332 = vunpack.c.h.b16 %v511
        %v2333 = vunpack.c.l.b16 %v512
        %v2334 = vunpack.c.h.b16 %v512
        %v2335 = vunpack.c.l.b16 %v513
        %v2336 = vunpack.c.h.b16 %v513
        %v2337 = vunpack.c.l.b16 %v514
        %v2338 = vunpack.c.h.b16 %v514
        %v2339 = vunpack.c.l.b16 %v515
        %v2340 = vunpack.c.h.b16 %v515
        %v2341 = vunpack.c.l.b16 %v516
        %v2342 = vunpack.c.h.b16 %v516
        %v2343 = vunpack.c.l.b16 %v517
        %v2344 = vunpack.c.h.b16 %v517
        %v2345 = vunpack.c.l.b16 %v518
        %v2346 = vunpack.c.h.b16 %v518
        %v2347 = vunpack.c.l.b16 %v519
        %v2348 = vunpack.c.h.b16 %v519
        %v2349 = vunpack.c.l.b16 %v520
        %v2350 = vunpack.c.h.b16 %v520
        %v2351 = vunpack.c.l.b16 %v521
        %v2352 = vunpack.c.h.b16 %v521
        %v2353 = vunpack.c.l.b16 %v522
        %v2354 = vunpack.c.h.b16 %v522
        %v2355 = vunpack.c.l.b16 %v523
        %v2356 = vunpack.c.h.b16 %v523
        %v2357 = vunpack.c.l.b16 %v524
        %v2358 = vunpack.c.h.b16 %v524
        %v2359 = vunpack.c.l.b16 %v525
        %v2360 = vunpack.c.h.b16 %v525
        %v2361 = vunpack.c.l.b16 %v526
        %v2362 = vunpack.c.h.b16 %v526
        %v2363 = vunpack.c.l.b16 %v527
        %v2364 = vunpack.c.h.b16 %v527
        %v2365 = vunpack.c.l.b16 %v528
        %v2366 = vunpack.c.h.b16 %v528
        %v2367 = vunpack.c.l.b16 %v529
        %v2368 = vunpack.c.h.b16 %v529
        %v2369 = vunpack.c.l.b16 %v530
        %v2370 = vunpack.c.h.b16 %v530
        %v2371 = vunpack.c.l.b16 %v531
        %v2372 = vunpack.c.h.b16 %v531
        %v2373 = vunpack.c.l.b16 %v532
        %v2374 = vunpack.c.h.b16 %v532
        %v2375 = vunpack.c.l.b16 %v533
        %v2376 = vunpack.c.h.b16 %v533
        %v2377 = vunpack.c.l.b16 %v534
        %v2378 = vunpack.c.h.b16 %v534
        %v2379 = vunpack.c.l.b16 %v535
        %v2380 = vunpack.c.h.b16 %v535
        %v2381 = vunpack.c.l.b16 %v536
        %v2382 = vunpack.c.h.b16 %v536
        %v2383 = vunpack.c.l.b16 %v537
        %v2384 = vunpack.c.h.b16 %v537
        %v2385 = vunpack.c.l.b16 %v538
        %v2386 = vunpack.c.h.b16 %v538
        %v2387 = vunpack.c.l.b16 %v539
        %v2388 = vunpack.c.h.b16 %v539
        %v2389 = vunpack.c.l.b16 %v540
        %v2390 = vunpack.c.h.b16 %v540
        %v2391 = vunpack.c.l.b16 %v541
        %v2392 = vunpack.c.h.b16 %v541
        %v2393 = vunpack.c.l.b16 %v542
        %v2394 = vunpack.c.h.b16 %v542
        %v2395 = vunpack.c.l.b16 %v543
        %v2396 = vunpack.c.h.b16 %v543
        %v2397 = vunpack.c.l.b16 %v544
        %v2398 = vunpack.c.h.b16 %v544
        %v2399 = vunpack.c.l.b16 %v545
        %v2400 = vunpack.c.h.b16 %v545
        %v2401 = vunpack.c.l.b16 %v546
        %v2402 = vunpack.c.h.b16 %v546
        %v2403 = vunpack.c.l.b16 %v547
        %v2404 = vunpack.c.h.b16 %v547
        %v2405 = vunpack.c.l.b16 %v548
        %v2406 = vunpack.c.h.b16 %v548
        %v2407 = vunpack.c.l.b16 %v549
        %v2408 = vunpack.c.h.b16 %v549
        %v2409 = vunpack.c.l.b16 %v550
        %v2410 = vunpack.c.h.b16 %v550
        %v2411 = vunpack.c.l.b16 %v551
        %v2412 = vunpack.c.h.b16 %v551
        %v2413 = vunpack.c.l.b16 %v552
        %v2414 = vunpack.c.h.b16 %v552
        %v2415 = vunpack.c.l.b16 %v553
        %v2416 = vunpack.c.h.b16 %v553
        %v2417 = vunpack.c.l.b16 %v554
        %v2418 = vunpack.c.h.b16 %v554
        %v2419 = vunpack.c.l.b16 %v555
        %v2420 = vunpack.c.h.b16 %v555
        %v2421 = vunpack.c.l.b16 %v556
        %v2422 = vunpack.c.h.b16 %v556
        %v2423 = vunpack.c.l.b16 %v557
        %v2424 = vunpack.c.h.b16 %v557
        %v2425 = vunpack.c.l.b16 %v558
        %v2426 = vunpack.c.h.b16 %v558
        %v2427 = vunpack.c.l.b16 %v559
        %v2428 = vunpack.c.h.b16 %v559
        %v2429 = vunpack.c.l.b16 %v560
        %v2430 = vunpack.c.h.b16 %v560
        %v2431 = vunpack.c.l.b16 %v561
        %v2432 = vunpack.c.h.b16 %v561
        %v2433 = vunpack.c.l.b16 %v562
        %v2434 = vunpack.c.h.b16 %v562
        %v2435 = vunpack.c.l.b16 %v563
        %v2436 = vunpack.c.h.b16 %v563
        %v2437 = vunpack.c.l.b16 %v564
        %v2438 = vunpack.c.h.b16 %v564
        %v2439 = vunpack.c.l.b16 %v565
        %v2440 = vunpack.c.h.b16 %v565
        %v2441 = vunpack.c.l.b16 %v566
        %v2442 = vunpack.c.h.b16 %v566
        %v2443 = vunpack.c.l.b16 %v567
        %v2444 = vunpack.c.h.b16 %v567
        %v2445 = vunpack.c.l.b16 %v568
        %v2446 = vunpack.c.h.b16 %v568
        %v2447 = vunpack.c.l.b16 %v569
        %v2448 = vunpack.c.h.b16 %v569
        %v2449 = vunpack.c.l.b16 %v570
        %v2450 = vunpack.c.h.b16 %v570
        %v2451 = vunpack.c.l.b16 %v571
        %v2452 = vunpack.c.h.b16 %v571
        %v2453 = vunpack.c.l.b16 %v572
        %v2454 = vunpack.c.h.b16 %v572
        %v2455 = vunpack.c.l.b16 %v573
        %v2456 = vunpack.c.h.b16 %v573
        %v2457 = vunpack.c.l.b16 %v574
        %v2458 = vunpack.c.h.b16 %v574
        %v2459 = vunpack.c.l.b16 %v575
        %v2460 = vunpack.c.h.b16 %v575
        %v2461 = vunpack.c.l.b16 %v576
        %v2462 = vunpack.c.h.b16 %v576
        %v2463 = vunpack.c.l.b16 %v577
        %v2464 = vunpack.c.h.b16 %v577
        %v2465 = vunpack.c.l.b16 %v578
        %v2466 = vunpack.c.h.b16 %v578
        %v2467 = vunpack.c.l.b16 %v579
        %v2468 = vunpack.c.h.b16 %v579
        %v2469 = vunpack.c.l.b16 %v580
        %v2470 = vunpack.c.h.b16 %v580
        %v2471 = vunpack.c.l.b16 %v581
        %v2472 = vunpack.c.h.b16 %v581
        %v2473 = vunpack.c.l.b16 %v582
        %v2474 = vunpack.c.h.b16 %v582
        %v2475 = vunpack.c.l.b16 %v583
        %v2476 = vunpack.c.h.b16 %v583
        %v2477 = vunpack.c.l.b16 %v584
        %v2478 = vunpack.c.h.b16 %v584
        %v2479 = vunpack.c.l.b16 %v585
        %v2480 = vunpack.c.h.b16 %v585
        %v2481 = vunpack.c.l.b16 %v586
        %v2482 = vunpack.c.h.b16 %v586
        %v2483 = vunpack.c.l.b16 %v587
        %v2484 = vunpack.c.h.b16 %v587
        %v2485 = vunpack.c.l.b16 %v588
        %v2486 = vunpack.c.h.b16 %v588
        %v2487 = vunpack.c.l.b16 %v589
        %v2488 = vunpack.c.h.b16 %v589
        %v2489 = vunpack.c.l.b16 %v590
        %v2490 = vunpack.c.h.b16 %v590
        %v2491 = vunpack.c.l.b16 %v591
        %v2492 = vunpack.c.h.b16 %v591
        %v2493 = vunpack.c.l.b16 %v592
        %v2494 = vunpack.c.h.b16 %v592
        %v2495 = vunpack.c.l.b16 %v593
        %v2496 = vunpack.c.h.b16 %v593
        %v2497 = vunpack.c.l.b16 %v594
        %v2498 = vunpack.c.h.b16 %v594
        %v2499 = vunpack.c.l.b16 %v595
        %v2500 = vunpack.c.h.b16 %v595
        %v2501 = vunpack.c.l.b16 %v596
        %v2502 = vunpack.c.h.b16 %v596
        %v2503 = vunpack.c.l.b16 %v597
        %v2504 = vunpack.c.h.b16 %v597
        %v2505 = vunpack.c.l.b16 %v598
        %v2506 = vunpack.c.h.b16 %v598
        %v2507 = vunpack.c.l.b16 %v599
        %v2508 = vunpack.c.h.b16 %v599
        %v2509 = vunpack.c.l.b16 %v600
        %v2510 = vunpack.c.h.b16 %v600
        %v2511 = vunpack.c.l.b16 %v601
        %v2512 = vunpack.c.h.b16 %v601
        %v2513 = vunpack.c.l.b16 %v602
        %v2514 = vunpack.c.h.b16 %v602
        %v2515 = vunpack.c.l.b16 %v603
        %v2516 = vunpack.c.h.b16 %v603
        %v2517 = vunpack.c.l.b16 %v604
        %v2518 = vunpack.c.h.b16 %v604
        %v2519 = vunpack.c.l.b16 %v605
        %v2520 = vunpack.c.h.b16 %v605
        %v2521 = vunpack.c.l.b16 %v606
        %v2522 = vunpack.c.h.b16 %v606
        %v2523 = vunpack.c.l.b16 %v607
        %v2524 = vunpack.c.h.b16 %v607
        %v2525 = vunpack.c.l.b16 %v608
        %v2526 = vunpack.c.h.b16 %v608
        %v2527 = vunpack.c.l.b16 %v609
        %v2528 = vunpack.c.h.b16 %v609
        %v2529 = vunpack.c.l.b16 %v610
        %v2530 = vunpack.c.h.b16 %v610
        %v2531 = vunpack.c.l.b16 %v611
        %v2532 = vunpack.c.h.b16 %v611
        %v2533 = vunpack.c.l.b16 %v612
        %v2534 = vunpack.c.h.b16 %v612
        %v2535 = vunpack.c.l.b16 %v613
        %v2536 = vunpack.c.h.b16 %v613
        %v2537 = vunpack.c.l.b16 %v614
        %v2538 = vunpack.c.h.b16 %v614
        %v2539 = vunpack.c.l.b16 %v615
        %v2540 = vunpack.c.h.b16 %v615
        %v2541 = vunpack.c.l.b16 %v616
        %v2542 = vunpack.c.h.b16 %v616
        %v2543 = vunpack.c.l.b16 %v617
        %v2544 = vunpack.c.h.b16 %v617
        %v2545 = vunpack.c.l.b16 %v618
        %v2546 = vunpack.c.h.b16 %v618
        %v2547 = vunpack.c.l.b16 %v619
        %v2548 = vunpack.c.h.b16 %v619
        %v2549 = vunpack.c.l.b16 %v620
        %v2550 = vunpack.c.h.b16 %v620
        %v2551 = vunpack.c.l.b16 %v621
        %v2552 = vunpack.c.h.b16 %v621
        %v2553 = vunpack.c.l.b16 %v622
        %v2554 = vunpack.c.h.b16 %v622
        %v2555 = vunpack.c.l.b16 %v623
        %v2556 = vunpack.c.h.b16 %v623
        %v2557 = vunpack.c.l.b16 %v624
        %v2558 = vunpack.c.h.b16 %v624
        %v2559 = vunpack.c.l.b16 %v625
        %v2560 = vunpack.c.h.b16 %v625
        %v2561 = vunpack.c.l.b16 %v626
        %v2562 = vunpack.c.h.b16 %v626
        %v2563 = vunpack.c.l.b16 %v627
        %v2564 = vunpack.c.h.b16 %v627
        %v2565 = vunpack.c.l.b16 %v628
        %v2566 = vunpack.c.h.b16 %v628
        %v2567 = vunpack.c.l.b16 %v629
        %v2568 = vunpack.c.h.b16 %v629
        %v2569 = vunpack.c.l.b16 %v630
        %v2570 = vunpack.c.h.b16 %v630
        %v2571 = vunpack.c.l.b16 %v631
        %v2572 = vunpack.c.h.b16 %v631
        %v2573 = vunpack.c.l.b16 %v632
        %v2574 = vunpack.c.h.b16 %v632
        %v2575 = vunpack.c.l.b16 %v633
        %v2576 = vunpack.c.h.b16 %v633
        %v2577 = vunpack.c.l.b16 %v634
        %v2578 = vunpack.c.h.b16 %v634
        %v2579 = vunpack.c.l.b16 %v635
        %v2580 = vunpack.c.h.b16 %v635
        %v2581 = vunpack.c.l.b16 %v636
        %v2582 = vunpack.c.h.b16 %v636
        %v2583 = vunpack.c.l.b16 %v637
        %v2584 = vunpack.c.h.b16 %v637
        %v2585 = vunpack.c.l.b16 %v638
        %v2586 = vunpack.c.h.b16 %v638
        %v2587 = vunpack.c.l.b16 %v639
        %v2588 = vunpack.c.h.b16 %v639
        %v2589 = vunpack.c.l.b16 %v640
        %v2590 = vunpack.c.h.b16 %v640
        %v2591 = vunpack.c.l.b16 %v641
        %v2592 = vunpack.c.h.b16 %v641
        %v2593 = vunpack.c.l.b16 %v642
        %v2594 = vunpack.c.h.b16 %v642
        %v2595 = vunpack.c.l.b16 %v643
        %v2596 = vunpack.c.h.b16 %v643
        %v2597 = vunpack.c.l.b16 %v644
        %v2598 = vunpack.c.h.b16 %v644
        %v2599 = vunpack.c.l.b16 %v645
        %v2600 = vunpack.c.h.b16 %v645
        %v2601 = vunpack.c.l.b16 %v646
        %v2602 = vunpack.c.h.b16 %v646
        %v2603 = vunpack.c.l.b16 %v647
        %v2604 = vunpack.c.h.b16 %v647
        %v2605 = vunpack.c.l.b16 %v648
        %v2606 = vunpack.c.h.b16 %v648
        %v2607 = vunpack.c.l.b16 %v649
        %v2608 = vunpack.c.h.b16 %v649
        %v2609 = vunpack.c.l.b16 %v650
        %v2610 = vunpack.c.h.b16 %v650
        %v2611 = vunpack.c.l.b16 %v651
        %v2612 = vunpack.c.h.b16 %v651
        %v2613 = vunpack.c.l.b16 %v652
        %v2614 = vunpack.c.h.b16 %v652
        %v2615 = vunpack.c.l.b16 %v653
        %v2616 = vunpack.c.h.b16 %v653
        %v2617 = vunpack.c.l.b16 %v654
        %v2618 = vunpack.c.h.b16 %v654
        %v2619 = vunpack.c.l.b16 %v655
        %v2620 = vunpack.c.h.b16 %v655
        %v2621 = vunpack.c.l.b16 %v656
        %v2622 = vunpack.c.h.b16 %v656
        %v2623 = vunpack.c.l.b16 %v657
        %v2624 = vunpack.c.h.b16 %v657
        %v2625 = vunpack.c.l.b16 %v658
        %v2626 = vunpack.c.h.b16 %v658
        %v2627 = vunpack.c.l.b16 %v659
        %v2628 = vunpack.c.h.b16 %v659
        %v2629 = vunpack.c.l.b16 %v660
        %v2630 = vunpack.c.h.b16 %v660
        %v2631 = vunpack.c.l.b16 %v661
        %v2632 = vunpack.c.h.b16 %v661
        %v2633 = vunpack.c.l.b16 %v662
        %v2634 = vunpack.c.h.b16 %v662
        %v2635 = vunpack.c.l.b16 %v663
        %v2636 = vunpack.c.h.b16 %v663
        %v2637 = vunpack.c.l.b16 %v664
        %v2638 = vunpack.c.h.b16 %v664
        %v2639 = vunpack.c.l.b16 %v665
        %v2640 = vunpack.c.h.b16 %v665
        %v2641 = vunpack.c.l.b16 %v666
        %v2642 = vunpack.c.h.b16 %v666
        %v2643 = vunpack.c.l.b16 %v667
        %v2644 = vunpack.c.h.b16 %v667
        %v2645 = vunpack.c.l.b16 %v668
        %v2646 = vunpack.c.h.b16 %v668
        %v2647 = vunpack.c.l.b16 %v669
        %v2648 = vunpack.c.h.b16 %v669
        %v2649 = vunpack.c.l.b16 %v670
        %v2650 = vunpack.c.h.b16 %v670
        %v2651 = vunpack.c.l.b16 %v671
        %v2652 = vunpack.c.h.b16 %v671
        %v2653 = vunpack.c.l.b16 %v672
        %v2654 = vunpack.c.h.b16 %v672
        %v2655 = vunpack.c.l.b16 %v673
        %v2656 = vunpack.c.h.b16 %v673
        %v2657 = vunpack.c.l.b16 %v674
        %v2658 = vunpack.c.h.b16 %v674
        %v2659 = vunpack.c.l.b16 %v675
        %v2660 = vunpack.c.h.b16 %v675
        %v2661 = vunpack.c.l.b16 %v676
        %v2662 = vunpack.c.h.b16 %v676
        %v2663 = vunpack.c.l.b16 %v677
        %v2664 = vunpack.c.h.b16 %v677
        %v2665 = vunpack.c.l.b16 %v678
        %v2666 = vunpack.c.h.b16 %v678
        %v2667 = vunpack.c.l.b16 %v679
        %v2668 = vunpack.c.h.b16 %v679
        %v2669 = vunpack.c.l.b16 %v680
        %v2670 = vunpack.c.h.b16 %v680
        %v2671 = vunpack.c.l.b16 %v681
        %v2672 = vunpack.c.h.b16 %v681
        %v2673 = vunpack.c.l.b16 %v682
        %v2674 = vunpack.c.h.b16 %v682
        %v2675 = vunpack.c.l.b16 %v683
        %v2676 = vunpack.c.h.b16 %v683
        %v2677 = vunpack.c.l.b16 %v684
        %v2678 = vunpack.c.h.b16 %v684
        %v2679 = vunpack.c.l.b16 %v685
        %v2680 = vunpack.c.h.b16 %v685
        %v2681 = vunpack.c.l.b16 %v686
        %v2682 = vunpack.c.h.b16 %v686
        %v2683 = vunpack.c.l.b16 %v687
        %v2684 = vunpack.c.h.b16 %v687
        %v2685 = vunpack.c.l.b16 %v688
        %v2686 = vunpack.c.h.b16 %v688
        %v2687 = vunpack.c.l.b16 %v689
        %v2688 = vunpack.c.h.b16 %v689
        %v2689 = vunpack.c.l.b16 %v690
        %v2690 = vunpack.c.h.b16 %v690
        %v2691 = vunpack.c.l.b16 %v691
        %v2692 = vunpack.c.h.b16 %v691
        %v2693 = vunpack.c.l.b16 %v692
        %v2694 = vunpack.c.h.b16 %v692
        %v2695 = vunpack.c.l.b16 %v693
        %v2696 = vunpack.c.h.b16 %v693
        %v2697 = vunpack.c.l.b16 %v694
        %v2698 = vunpack.c.h.b16 %v694
        %v2699 = vunpack.c.l.b16 %v695
        %v2700 = vunpack.c.h.b16 %v695
        %v2701 = vunpack.c.l.b16 %v696
        %v2702 = vunpack.c.h.b16 %v696
        %v2703 = vunpack.c.l.b16 %v697
        %v2704 = vunpack.c.h.b16 %v697
        %v2705 = vunpack.c.l.b16 %v698
        %v2706 = vunpack.c.h.b16 %v698
        %v2707 = vunpack.c.l.b16 %v699
        %v2708 = vunpack.c.h.b16 %v699
        %v2709 = vunpack.c.l.b16 %v700
        %v2710 = vunpack.c.h.b16 %v700
        %v2711 = vunpack.c.l.b16 %v701
        %v2712 = vunpack.c.h.b16 %v701
        %v2713 = vunpack.c.l.b16 %v702
        %v2714 = vunpack.c.h.b16 %v702
        %v2715 = vunpack.c.l.b16 %v703
        %v2716 = vunpack.c.h.b16 %v703
        %v2717 = vunpack.c.l.b16 %v704
        %v2718 = vunpack.c.h.b16 %v704
        %v2719 = vunpack.c.l.b16 %v705
        %v2720 = vunpack.c.h.b16 %v705
        %v2721 = vunpack.c.l.b16 %v706
        %v2722 = vunpack.c.h.b16 %v706
        %v2723 = vunpack.c.l.b16 %v707
        %v2724 = vunpack.c.h.b16 %v707
        %v2725 = vunpack.c.l.b16 %v708
        %v2726 = vunpack.c.h.b16 %v708
        %v2727 = vunpack.c.l.b16 %v709
        %v2728 = vunpack.c.h.b16 %v709
        %v2729 = vunpack.c.l.b16 %v710
        %v2730 = vunpack.c.h.b16 %v710
        %v2731 = vunpack.c.l.b16 %v711
        %v2732 = vunpack.c.h.b16 %v711
        %v2733 = vunpack.c.l.b16 %v712
        %v2734 = vunpack.c.h.b16 %v712
        %v2735 = vunpack.c.l.b16 %v713
        %v2736 = vunpack.c.h.b16 %v713
        %v2737 = vunpack.c.l.b16 %v714
        %v2738 = vunpack.c.h.b16 %v714
        %v2739 = vunpack.c.l.b16 %v715
        %v2740 = vunpack.c.h.b16 %v715
        %v2741 = vunpack.c.l.b16 %v716
        %v2742 = vunpack.c.h.b16 %v716
        %v2743 = vunpack.c.l.b16 %v717
        %v2744 = vunpack.c.h.b16 %v717
        %v2745 = vunpack.c.l.b16 %v718
        %v2746 = vunpack.c.h.b16 %v718
        %v2747 = vunpack.c.l.b16 %v719
        %v2748 = vunpack.c.h.b16 %v719
        %v2749 = vunpack.c.l.b16 %v720
        %v2750 = vunpack.c.h.b16 %v720
        %v2751 = vunpack.c.l.b16 %v721
        %v2752 = vunpack.c.h.b16 %v721
        %v2753 = vunpack.c.l.b16 %v722
        %v2754 = vunpack.c.h.b16 %v722
        %v2755 = vunpack.c.l.b16 %v723
        %v2756 = vunpack.c.h.b16 %v723
        %v2757 = vunpack.c.l.b16 %v724
        %v2758 = vunpack.c.h.b16 %v724
        %v2759 = vunpack.c.l.b16 %v725
        %v2760 = vunpack.c.h.b16 %v725
        %v2761 = vunpack.c.l.b16 %v726
        %v2762 = vunpack.c.h.b16 %v726
        %v2763 = vunpack.c.l.b16 %v727
        %v2764 = vunpack.c.h.b16 %v727
        %v2765 = vunpack.c.l.b16 %v728
        %v2766 = vunpack.c.h.b16 %v728
        %v2767 = vunpack.c.l.b16 %v729
        %v2768 = vunpack.c.h.b16 %v729
        %v2769 = vunpack.c.l.b16 %v730
        %v2770 = vunpack.c.h.b16 %v730
        %v2771 = vunpack.c.l.b16 %v731
        %v2772 = vunpack.c.h.b16 %v731
        %v2773 = vunpack.c.l.b16 %v732
        %v2774 = vunpack.c.h.b16 %v732
        %v2775 = vunpack.c.l.b16 %v733
        %v2776 = vunpack.c.h.b16 %v733
        %v2777 = vunpack.c.l.b16 %v734
        %v2778 = vunpack.c.h.b16 %v734
        %v2779 = vunpack.c.l.b16 %v735
        %v2780 = vunpack.c.h.b16 %v735
        %v2781 = vunpack.c.l.b16 %v736
        %v2782 = vunpack.c.h.b16 %v736
        %v2783 = vunpack.c.l.b16 %v737
        %v2784 = vunpack.c.h.b16 %v737
        %v2785 = vunpack.c.l.b16 %v738
        %v2786 = vunpack.c.h.b16 %v738
        %v2787 = vunpack.c.l.b16 %v739
        %v2788 = vunpack.c.h.b16 %v739
        %v2789 = vunpack.c.l.b16 %v740
        %v2790 = vunpack.c.h.b16 %v740
        %v2791 = vunpack.c.l.b16 %v741
        %v2792 = vunpack.c.h.b16 %v741
        %v2793 = vunpack.c.l.b16 %v742
        %v2794 = vunpack.c.h.b16 %v742
        %v2795 = vunpack.c.l.b16 %v743
        %v2796 = vunpack.c.h.b16 %v743
        %v2797 = vunpack.c.l.b16 %v744
        %v2798 = vunpack.c.h.b16 %v744
        %v2799 = vunpack.c.l.b16 %v745
        %v2800 = vunpack.c.h.b16 %v745
        %v2801 = vunpack.c.l.b16 %v746
        %v2802 = vunpack.c.h.b16 %v746
        %v2803 = vunpack.c.l.b16 %v747
        %v2804 = vunpack.c.h.b16 %v747
        %v2805 = vunpack.c.l.b16 %v748
        %v2806 = vunpack.c.h.b16 %v748
        %v2807 = vunpack.c.l.b16 %v749
        %v2808 = vunpack.c.h.b16 %v749
        %v2809 = vunpack.c.l.b16 %v750
        %v2810 = vunpack.c.h.b16 %v750
        %v2811 = vunpack.c.l.b16 %v751
        %v2812 = vunpack.c.h.b16 %v751
        %v2813 = vunpack.c.l.b16 %v752
        %v2814 = vunpack.c.h.b16 %v752
        %v2815 = vunpack.c.l.b16 %v753
        %v2816 = vunpack.c.h.b16 %v753
        %v2817 = vunpack.c.l.b16 %v754
        %v2818 = vunpack.c.h.b16 %v754
        %v2819 = vunpack.c.l.b16 %v755
        %v2820 = vunpack.c.h.b16 %v755
        %v2821 = vunpack.c.l.b16 %v756
        %v2822 = vunpack.c.h.b16 %v756
        %v2823 = vunpack.c.l.b16 %v757
        %v2824 = vunpack.c.h.b16 %v757
        %v2825 = vunpack.c.l.b16 %v758
        %v2826 = vunpack.c.h.b16 %v758
        %v2827 = vunpack.c.l.b16 %v759
        %v2828 = vunpack.c.h.b16 %v759
        %v2829 = vunpack.c.l.b16 %v760
        %v2830 = vunpack.c.h.b16 %v760
        %v2831 = vunpack.c.l.b16 %v761
        %v2832 = vunpack.c.h.b16 %v761
        %v2833 = vunpack.c.l.b16 %v762
        %v2834 = vunpack.c.h.b16 %v762
        %v2835 = vunpack.c.l.b16 %v763
        %v2836 = vunpack.c.h.b16 %v763
        %v2837 = vunpack.c.l.b16 %v764
        %v2838 = vunpack.c.h.b16 %v764
        %v2839 = vunpack.c.l.b16 %v765
        %v2840 = vunpack.c.h.b16 %v765
        %v2841 = vunpack.c.l.b16 %v766
        %v2842 = vunpack.c.h.b16 %v766
        %v2843 = vunpack.c.l.b16 %v767
        %v2844 = vunpack.c.h.b16 %v767
        %v2845 = vunpack.c.l.b16 %v768
        %v2846 = vunpack.c.h.b16 %v768
        %v2847 = vunpack.c.l.b16 %v769
        %v2848 = vunpack.c.h.b16 %v769
        %v2849 = vunpack.c.l.b16 %v770
        %v2850 = vunpack.c.h.b16 %v770
        %v2851 = vunpack.c.l.b16 %v771
        %v2852 = vunpack.c.h.b16 %v771
        %v2853 = vunpack.c.l.b16 %v772
        %v2854 = vunpack.c.h.b16 %v772
        %v2855 = vunpack.c.l.b16 %v773
        %v2856 = vunpack.c.h.b16 %v773
        %v2857 = vunpack.c.l.b16 %v774
        %v2858 = vunpack.c.h.b16 %v774
        %v2859 = vunpack.c.l.b16 %v775
        %v2860 = vunpack.c.h.b16 %v775
        %v2861 = vunpack.c.l.b16 %v776
        %v2862 = vunpack.c.h.b16 %v776
        %v2863 = vunpack.c.l.b16 %v777
        %v2864 = vunpack.c.h.b16 %v777
        %v2865 = vunpack.c.l.b16 %v778
        %v2866 = vunpack.c.h.b16 %v778
        %v2867 = vunpack.c.l.b16 %v779
        %v2868 = vunpack.c.h.b16 %v779
        %v2869 = vunpack.c.l.b16 %v780
        %v2870 = vunpack.c.h.b16 %v780
        %v2871 = vunpack.c.l.b16 %v781
        %v2872 = vunpack.c.h.b16 %v781
        %v2873 = vunpack.c.l.b16 %v782
        %v2874 = vunpack.c.h.b16 %v782
        %v2875 = vunpack.c.l.b16 %v783
        %v2876 = vunpack.c.h.b16 %v783
        %v2877 = vunpack.c.l.b16 %v784
        %v2878 = vunpack.c.h.b16 %v784
        %v2879 = vunpack.c.l.b16 %v785
        %v2880 = vunpack.c.h.b16 %v785
        %v2881 = vunpack.c.l.b16 %v786
        %v2882 = vunpack.c.h.b16 %v786
        %v2883 = vunpack.c.l.b16 %v787
        %v2884 = vunpack.c.h.b16 %v787
        %v2885 = vunpack.c.l.b16 %v788
        %v2886 = vunpack.c.h.b16 %v788
        %v2887 = vunpack.c.l.b16 %v789
        %v2888 = vunpack.c.h.b16 %v789
        %v2889 = vunpack.c.l.b16 %v790
        %v2890 = vunpack.c.h.b16 %v790
        %v2891 = vunpack.c.l.b16 %v791
        %v2892 = vunpack.c.h.b16 %v791
        %v2893 = vunpack.c.l.b16 %v792
        %v2894 = vunpack.c.h.b16 %v792
        %v2895 = vunpack.c.l.b16 %v793
        %v2896 = vunpack.c.h.b16 %v793
        %v2897 = vunpack.c.l.b16 %v794
        %v2898 = vunpack.c.h.b16 %v794
        %v2899 = vunpack.c.l.b16 %v795
        %v2900 = vunpack.c.h.b16 %v795
        %v2901 = vunpack.c.l.b16 %v796
        %v2902 = vunpack.c.h.b16 %v796
        %v2903 = vunpack.c.l.b16 %v797
        %v2904 = vunpack.c.h.b16 %v797
        %v2905 = vunpack.c.l.b16 %v798
        %v2906 = vunpack.c.h.b16 %v798
        %v2907 = vunpack.c.l.b16 %v799
        %v2908 = vunpack.c.h.b16 %v799
        %v2909 = vunpack.c.l.b16 %v800
        %v2910 = vunpack.c.h.b16 %v800
        %v2911 = vunpack.c.l.b16 %v801
        %v2912 = vunpack.c.h.b16 %v801
        %v2913 = vunpack.c.l.b16 %v802
        %v2914 = vunpack.c.h.b16 %v802
        %v2915 = vunpack.c.l.b16 %v803
        %v2916 = vunpack.c.h.b16 %v803
        %v2917 = vunpack.c.l.b16 %v804
        %v2918 = vunpack.c.h.b16 %v804
        %v2919 = vunpack.c.l.b16 %v805
        %v2920 = vunpack.c.h.b16 %v805
        %v2921 = vunpack.c.l.b16 %v806
        %v2922 = vunpack.c.h.b16 %v806
        %v2923 = vunpack.c.l.b16 %v807
        %v2924 = vunpack.c.h.b16 %v807
        %v2925 = vunpack.c.l.b16 %v808
        %v2926 = vunpack.c.h.b16 %v808
        %v2927 = vunpack.c.l.b16 %v809
        %v2928 = vunpack.c.h.b16 %v809
        %v2929 = vunpack.c.l.b16 %v810
        %v2930 = vunpack.c.h.b16 %v810
        %v2931 = vunpack.c.l.b16 %v811
        %v2932 = vunpack.c.h.b16 %v811
        %v2933 = vunpack.c.l.b16 %v812
        %v2934 = vunpack.c.h.b16 %v812
        %v2935 = vunpack.c.l.b16 %v813
        %v2936 = vunpack.c.h.b16 %v813
        %v2937 = vunpack.c.l.b16 %v814
        %v2938 = vunpack.c.h.b16 %v814
        %v2939 = vunpack.c.l.b16 %v815
        %v2940 = vunpack.c.h.b16 %v815
        %v2941 = vunpack.c.l.b16 %v816
        %v2942 = vunpack.c.h.b16 %v816
        %v2943 = vunpack.c.l.b16 %v817
        %v2944 = vunpack.c.h.b16 %v817
        %v2945 = vunpack.c.l.b16 %v818
        %v2946 = vunpack.c.h.b16 %v818
        %v2947 = vunpack.c.l.b16 %v819
        %v2948 = vunpack.c.h.b16 %v819
        %v2949 = vunpack.c.l.b16 %v820
        %v2950 = vunpack.c.h.b16 %v820
        %v2951 = vunpack.c.l.b16 %v821
        %v2952 = vunpack.c.h.b16 %v821
        %v2953 = vunpack.c.l.b16 %v822
        %v2954 = vunpack.c.h.b16 %v822
        %v2955 = vunpack.c.l.b16 %v823
        %v2956 = vunpack.c.h.b16 %v823
        %v2957 = vunpack.c.l.b16 %v824
        %v2958 = vunpack.c.h.b16 %v824
        %v2959 = vunpack.c.l.b16 %v825
        %v2960 = vunpack.c.h.b16 %v825
        %v2961 = vunpack.c.l.b16 %v826
        %v2962 = vunpack.c.h.b16 %v826
        %v2963 = vunpack.c.l.b16 %v827
        %v2964 = vunpack.c.h.b16 %v827
        %v2965 = vunpack.c.l.b16 %v828
        %v2966 = vunpack.c.h.b16 %v828
        %v2967 = vunpack.c.l.b16 %v829
        %v2968 = vunpack.c.h.b16 %v829
        %v2969 = vunpack.c.l.b16 %v830
        %v2970 = vunpack.c.h.b16 %v830
        %v2971 = vunpack.c.l.b16 %v831
        %v2972 = vunpack.c.h.b16 %v831
        %v2973 = vunpack.c.l.b16 %v832
        %v2974 = vunpack.c.h.b16 %v832
        %v2975 = vunpack.c.l.b16 %v833
        %v2976 = vunpack.c.h.b16 %v833
        %v2977 = vunpack.c.l.b16 %v834
        %v2978 = vunpack.c.h.b16 %v834
        %v2979 = vunpack.c.l.b16 %v835
        %v2980 = vunpack.c.h.b16 %v835
        %v2981 = vunpack.c.l.b16 %v836
        %v2982 = vunpack.c.h.b16 %v836
        %v2983 = vunpack.c.l.b16 %v837
        %v2984 = vunpack.c.h.b16 %v837
        %v2985 = vunpack.c.l.b16 %v838
        %v2986 = vunpack.c.h.b16 %v838
        %v2987 = vunpack.c.l.b16 %v839
        %v2988 = vunpack.c.h.b16 %v839
        %v2989 = vunpack.c.l.b16 %v840
        %v2990 = vunpack.c.h.b16 %v840
        %v2991 = vunpack.c.l.b16 %v841
        %v2992 = vunpack.c.h.b16 %v841
        %v2993 = vunpack.c.l.b16 %v842
        %v2994 = vunpack.c.h.b16 %v842
        %v2995 = vunpack.c.l.b16 %v843
        %v2996 = vunpack.c.h.b16 %v843
        %v2997 = vunpack.c.l.b16 %v844
        %v2998 = vunpack.c.h.b16 %v844
        %v2999 = vunpack.c.l.b16 %v845
        %v3000 = vunpack.c.h.b16 %v845
        %v3001 = vunpack.c.l.b16 %v846
        %v3002 = vunpack.c.h.b16 %v846
        %v3003 = vunpack.c.l.b16 %v847
        %v3004 = vunpack.c.h.b16 %v847
        %v3005 = vunpack.c.l.b16 %v848
        %v3006 = vunpack.c.h.b16 %v848
        %v3007 = vunpack.c.l.b16 %v849
        %v3008 = vunpack.c.h.b16 %v849
        %v3009 = vunpack.c.l.b16 %v850
        %v3010 = vunpack.c.h.b16 %v850
        %v3011 = vunpack.c.l.b16 %v851
        %v3012 = vunpack.c.h.b16 %v851
        %v3013 = vunpack.c.l.b16 %v852
        %v3014 = vunpack.c.h.b16 %v852
        %v3015 = vunpack.c.l.b16 %v853
        %v3016 = vunpack.c.h.b16 %v853
        %v3017 = vunpack.c.l.b16 %v854
        %v3018 = vunpack.c.h.b16 %v854
        %v3019 = vunpack.c.l.b16 %v855
        %v3020 = vunpack.c.h.b16 %v855
        %v3021 = vunpack.c.l.b16 %v856
        %v3022 = vunpack.c.h.b16 %v856
        %v3023 = vunpack.c.l.b16 %v857
        %v3024 = vunpack.c.h.b16 %v857
        %v3025 = vunpack.c.l.b16 %v858
        %v3026 = vunpack.c.h.b16 %v858
        %v3027 = vunpack.c.l.b16 %v859
        %v3028 = vunpack.c.h.b16 %v859
        %v3029 = vunpack.c.l.b16 %v860
        %v3030 = vunpack.c.h.b16 %v860
        %v3031 = vunpack.c.l.b16 %v861
        %v3032 = vunpack.c.h.b16 %v861
        %v3033 = vunpack.c.l.b16 %v862
        %v3034 = vunpack.c.h.b16 %v862
        %v3035 = vunpack.c.l.b16 %v863
        %v3036 = vunpack.c.h.b16 %v863
        %v3037 = vunpack.c.l.b16 %v864
        %v3038 = vunpack.c.h.b16 %v864
        %v3039 = vunpack.c.l.b16 %v865
        %v3040 = vunpack.c.h.b16 %v865
        %v3041 = vunpack.c.l.b16 %v866
        %v3042 = vunpack.c.h.b16 %v866
        %v3043 = vunpack.c.l.b16 %v867
        %v3044 = vunpack.c.h.b16 %v867
        %v3045 = vunpack.c.l.b16 %v868
        %v3046 = vunpack.c.h.b16 %v868
        %v3047 = vunpack.c.l.b16 %v869
        %v3048 = vunpack.c.h.b16 %v869
        %v3049 = vunpack.c.l.b16 %v870
        %v3050 = vunpack.c.h.b16 %v870
        %v3051 = vunpack.c.l.b16 %v871
        %v3052 = vunpack.c.h.b16 %v871
        %v3053 = vunpack.c.l.b16 %v872
        %v3054 = vunpack.c.h.b16 %v872
        %v3055 = vunpack.c.l.b16 %v873
        %v3056 = vunpack.c.h.b16 %v873
        %v3057 = vunpack.c.l.b16 %v874
        %v3058 = vunpack.c.h.b16 %v874
        %v3059 = vunpack.c.l.b16 %v875
        %v3060 = vunpack.c.h.b16 %v875
        %v3061 = vunpack.c.l.b16 %v876
        %v3062 = vunpack.c.h.b16 %v876
        %v3063 = vunpack.c.l.b16 %v877
        %v3064 = vunpack.c.h.b16 %v877
        %v3065 = vunpack.c.l.b16 %v878
        %v3066 = vunpack.c.h.b16 %v878
        %v3067 = vunpack.c.l.b16 %v879
        %v3068 = vunpack.c.h.b16 %v879
        %v3069 = vunpack.c.l.b16 %v880
        %v3070 = vunpack.c.h.b16 %v880
        %v3071 = vunpack.c.l.b16 %v881
        %v3072 = vunpack.c.h.b16 %v881
        %v3073 = vunpack.c.l.b16 %v882
        %v3074 = vunpack.c.h.b16 %v882
        %v3075 = vunpack.c.l.b16 %v883
        %v3076 = vunpack.c.h.b16 %v883
        %v3077 = vunpack.c.l.b16 %v884
        %v3078 = vunpack.c.h.b16 %v884
        %v3079 = vunpack.c.l.b16 %v885
        %v3080 = vunpack.c.h.b16 %v885
        %v3081 = vunpack.c.l.b16 %v886
        %v3082 = vunpack.c.h.b16 %v886
        %v3083 = vunpack.c.l.b16 %v887
        %v3084 = vunpack.c.h.b16 %v887
        %v3085 = vunpack.c.l.b16 %v888
        %v3086 = vunpack.c.h.b16 %v888
        %v3087 = vunpack.c.l.b16 %v889
        %v3088 = vunpack.c.h.b16 %v889
        %v3089 = vunpack.c.l.b16 %v890
        %v3090 = vunpack.c.h.b16 %v890
        %v3091 = vunpack.c.l.b16 %v891
        %v3092 = vunpack.c.h.b16 %v891
        %v3093 = vunpack.c.l.b16 %v892
        %v3094 = vunpack.c.h.b16 %v892
        %v3095 = vunpack.c.l.b16 %v893
        %v3096 = vunpack.c.h.b16 %v893
        %v3097 = vunpack.c.l.b16 %v894
        %v3098 = vunpack.c.h.b16 %v894
        %v3099 = vunpack.c.l.b16 %v895
        %v3100 = vunpack.c.h.b16 %v895
        %v3101 = vunpack.c.l.b16 %v896
        %v3102 = vunpack.c.h.b16 %v896
        %v3103 = vunpack.c.l.b16 %v897
        %v3104 = vunpack.c.h.b16 %v897
        %v3105 = vunpack.c.l.b16 %v898
        %v3106 = vunpack.c.h.b16 %v898
        %v3107 = vunpack.c.l.b16 %v899
        %v3108 = vunpack.c.h.b16 %v899
        %v3109 = vunpack.c.l.b16 %v900
        %v3110 = vunpack.c.h.b16 %v900
        %v3111 = vunpack.c.l.b16 %v901
        %v3112 = vunpack.c.h.b16 %v901
        %v3113 = vunpack.c.l.b16 %v902
        %v3114 = vunpack.c.h.b16 %v902
        %v3115 = vunpack.c.l.b16 %v903
        %v3116 = vunpack.c.h.b16 %v903
        %v3117 = vunpack.c.l.b16 %v904
        %v3118 = vunpack.c.h.b16 %v904
        %v3119 = vunpack.c.l.b16 %v905
        %v3120 = vunpack.c.h.b16 %v905
        %v3121 = vunpack.c.l.b16 %v906
        %v3122 = vunpack.c.h.b16 %v906
        %v3123 = vunpack.c.l.b16 %v907
        %v3124 = vunpack.c.h.b16 %v907
        %v3125 = vunpack.c.l.b16 %v908
        %v3126 = vunpack.c.h.b16 %v908
        %v3127 = vunpack.c.l.b16 %v909
        %v3128 = vunpack.c.h.b16 %v909
        %v3129 = vunpack.c.l.b16 %v910
        %v3130 = vunpack.c.h.b16 %v910
        %v3131 = vunpack.c.l.b16 %v911
        %v3132 = vunpack.c.h.b16 %v911
        %v3133 = vunpack.c.l.b16 %v912
        %v3134 = vunpack.c.h.b16 %v912
        %v3135 = vunpack.c.l.b16 %v913
        %v3136 = vunpack.c.h.b16 %v913
        %v3137 = vunpack.c.l.b16 %v914
        %v3138 = vunpack.c.h.b16 %v914
        %v3139 = vpack.c.b16 %v1739, %v1731
        %v3140 = vpack.c.b16 %v1740, %v1732
        %v3141 = vpack.c.b16 %v1741, %v1733
        %v3142 = vpack.c.b16 %v1742, %v1734
        %v3143 = vpack.c.b16 %v1743, %v1735
        %v3144 = vpack.c.b16 %v1744, %v1736
        %v3145 = vpack.c.b16 %v1745, %v1737
        %v3146 = vpack.c.b16 %v1746, %v1738
        %v3147 = vpack.c.b16 %v1755, %v1747
        %v3148 = vpack.c.b16 %v1756, %v1748
        %v3149 = vpack.c.b16 %v1757, %v1749
        %v3150 = vpack.c.b16 %v1758, %v1750
        %v3151 = vpack.c.b16 %v1759, %v1751
        %v3152 = vpack.c.b16 %v1760, %v1752
        %v3153 = vpack.c.b16 %v1761, %v1753
        %v3154 = vpack.c.b16 %v1762, %v1754
        %v3155 = vpack.c.b16 %v1771, %v1763
        %v3156 = vpack.c.b16 %v1772, %v1764
        %v3157 = vpack.c.b16 %v1773, %v1765
        %v3158 = vpack.c.b16 %v1774, %v1766
        %v3159 = vpack.c.b16 %v1775, %v1767
        %v3160 = vpack.c.b16 %v1776, %v1768
        %v3161 = vpack.c.b16 %v1777, %v1769
        %v3162 = vpack.c.b16 %v1778, %v1770
        %v3163 = vpack.c.b16 %v1787, %v1779
        %v3164 = vpack.c.b16 %v1788, %v1780
        %v3165 = vpack.c.b16 %v1789, %v1781
        %v3166 = vpack.c.b16 %v1790, %v1782
        %v3167 = vpack.c.b16 %v1791, %v1783
        %v3168 = vpack.c.b16 %v1792, %v1784
        %v3169 = vpack.c.b16 %v1793, %v1785
        %v3170 = vpack.c.b16 %v1794, %v1786
        %v3171 = vpack.c.b16 %v1803, %v1795
        %v3172 = vpack.c.b16 %v1804, %v1796
        %v3173 = vpack.c.b16 %v1805, %v1797
        %v3174 = vpack.c.b16 %v1806, %v1798
        %v3175 = vpack.c.b16 %v1807, %v1799
        %v3176 = vpack.c.b16 %v1808, %v1800
        %v3177 = vpack.c.b16 %v1809, %v1801
        %v3178 = vpack.c.b16 %v1810, %v1802
        %v3179 = vpack.c.b16 %v1819, %v1811
        %v3180 = vpack.c.b16 %v1820, %v1812
        %v3181 = vpack.c.b16 %v1821, %v1813
        %v3182 = vpack.c.b16 %v1822, %v1814
        %v3183 = vpack.c.b16 %v1823, %v1815
        %v3184 = vpack.c.b16 %v1824, %v1816
        %v3185 = vpack.c.b16 %v1825, %v1817
        %v3186 = vpack.c.b16 %v1826, %v1818
        %v3187 = vpack.c.b16 %v1835, %v1827
        %v3188 = vpack.c.b16 %v1836, %v1828
        %v3189 = vpack.c.b16 %v1837, %v1829
        %v3190 = vpack.c.b16 %v1838, %v1830
        %v3191 = vpack.c.b16 %v1839, %v1831
        %v3192 = vpack.c.b16 %v1840, %v1832
        %v3193 = vpack.c.b16 %v1841, %v1833
        %v3194 = vpack.c.b16 %v1842, %v1834
        %v3195 = vpack.c.b16 %v1851, %v1843
        %v3196 = vpack.c.b16 %v1852, %v1844
        %v3197 = vpack.c.b16 %v1853, %v1845
        %v3198 = vpack.c.b16 %v1854, %v1846
        %v3199 = vpack.c.b16 %v1855, %v1847
        %v3200 = vpack.c.b16 %v1856, %v1848
        %v3201 = vpack.c.b16 %v1857, %v1849
        %v3202 = vpack.c.b16 %v1858, %v1850
        %v3203 = vpack.c.b16 %v1867, %v1859
        %v3204 = vpack.c.b16 %v1868, %v1860
        %v3205 = vpack.c.b16 %v1869, %v1861
        %v3206 = vpack.c.b16 %v1870, %v1862
        %v3207 = vpack.c.b16 %v1871, %v1863
        %v3208 = vpack.c.b16 %v1872, %v1864
        %v3209 = vpack.c.b16 %v1873, %v1865
        %v3210 = vpack.c.b16 %v1874, %v1866
        %v3211 = vpack.c.b16 %v1883, %v1875
        %v3212 = vpack.c.b16 %v1884, %v1876
        %v3213 = vpack.c.b16 %v1885, %v1877
        %v3214 = vpack.c.b16 %v1886, %v1878
        %v3215 = vpack.c.b16 %v1887, %v1879
        %v3216 = vpack.c.b16 %v1888, %v1880
        %v3217 = vpack.c.b16 %v1889, %v1881
        %v3218 = vpack.c.b16 %v1890, %v1882
        %v3219 = vpack.c.b16 %v1899, %v1891
        %v3220 = vpack.c.b16 %v1900, %v1892
        %v3221 = vpack.c.b16 %v1901, %v1893
        %v3222 = vpack.c.b16 %v1902, %v1894
        %v3223 = vpack.c.b16 %v1903, %v1895
        %v3224 = vpack.c.b16 %v1904, %v1896
        %v3225 = vpack.c.b16 %v1905, %v1897
        %v3226 = vpack.c.b16 %v1906, %v1898
        %v3227 = vpack.c.b16 %v1915, %v1907
        %v3228 = vpack.c.b16 %v1916, %v1908
        %v3229 = vpack.c.b16 %v1917, %v1909
        %v3230 = vpack.c.b16 %v1918, %v1910
        %v3231 = vpack.c.b16 %v1919, %v1911
        %v3232 = vpack.c.b16 %v1920, %v1912
        %v3233 = vpack.c.b16 %v1921, %v1913
        %v3234 = vpack.c.b16 %v1922, %v1914
        %v3235 = vpack.c.b16 %v1931, %v1923
        %v3236 = vpack.c.b16 %v1932, %v1924
        %v3237 = vpack.c.b16 %v1933, %v1925
        %v3238 = vpack.c.b16 %v1934, %v1926
        %v3239 = vpack.c.b16 %v1935, %v1927
        %v3240 = vpack.c.b16 %v1936, %v1928
        %v3241 = vpack.c.b16 %v1937, %v1929
        %v3242 = vpack.c.b16 %v1938, %v1930
        %v3243 = vpack.c.b16 %v1947, %v1939
        %v3244 = vpack.c.b16 %v1948, %v1940
        %v3245 = vpack.c.b16 %v1949, %v1941
        %v3246 = vpack.c.b16 %v1950, %v1942
        %v3247 = vpack.c.b16 %v1951, %v1943
        %v3248 = vpack.c.b16 %v1952, %v1944
        %v3249 = vpack.c.b16 %v1953, %v1945
        %v3250 = vpack.c.b16 %v1954, %v1946
        %v3251 = vpack.c.b16 %v1963, %v1955
        %v3252 = vpack.c.b16 %v1964, %v1956
        %v3253 = vpack.c.b16 %v1965, %v1957
        %v3254 = vpack.c.b16 %v1966, %v1958
        %v3255 = vpack.c.b16 %v1967, %v1959
        %v3256 = vpack.c.b16 %v1968, %v1960
        %v3257 = vpack.c.b16 %v1969, %v1961
        %v3258 = vpack.c.b16 %v1970, %v1962
        %v3259 = vpack.c.b16 %v1979, %v1971
        %v3260 = vpack.c.b16 %v1980, %v1972
        %v3261 = vpack.c.b16 %v1981, %v1973
        %v3262 = vpack.c.b16 %v1982, %v1974
        %v3263 = vpack.c.b16 %v1983, %v1975
        %v3264 = vpack.c.b16 %v1984, %v1976
        %v3265 = vpack.c.b16 %v1985, %v1977
        %v3266 = vpack.c.b16 %v1986, %v1978
        %v3267 = vpack.c.b16 %v1995, %v1987
        %v3268 = vpack.c.b16 %v1996, %v1988
        %v3269 = vpack.c.b16 %v1997, %v1989
        %v3270 = vpack.c.b16 %v1998, %v1990
        %v3271 = vpack.c.b16 %v1999, %v1991
        %v3272 = vpack.c.b16 %v2000, %v1992
        %v3273 = vpack.c.b16 %v2001, %v1993
        %v3274 = vpack.c.b16 %v2002, %v1994
        %v3275 = vpack.c.b16 %v2011, %v2003
        %v3276 = vpack.c.b16 %v2012, %v2004
        %v3277 = vpack.c.b16 %v2013, %v2005
        %v3278 = vpack.c.b16 %v2014, %v2006
        %v3279 = vpack.c.b16 %v2015, %v2007
        %v3280 = vpack.c.b16 %v2016, %v2008
        %v3281 = vpack.c.b16 %v2017, %v2009
        %v3282 = vpack.c.b16 %v2018, %v2010
        %v3283 = vpack.c.b16 %v2027, %v2019
        %v3284 = vpack.c.b16 %v2028, %v2020
        %v3285 = vpack.c.b16 %v2029, %v2021
        %v3286 = vpack.c.b16 %v2030, %v2022
        %v3287 = vpack.c.b16 %v2031, %v2023
        %v3288 = vpack.c.b16 %v2032, %v2024
        %v3289 = vpack.c.b16 %v2033, %v2025
        %v3290 = vpack.c.b16 %v2034, %v2026
        %v3291 = vpack.c.b16 %v2043, %v2035
        %v3292 = vpack.c.b16 %v2044, %v2036
        %v3293 = vpack.c.b16 %v2045, %v2037
        %v3294 = vpack.c.b16 %v2046, %v2038
        %v3295 = vpack.c.b16 %v2047, %v2039
        %v3296 = vpack.c.b16 %v2048, %v2040
        %v3297 = vpack.c.b16 %v2049, %v2041
        %v3298 = vpack.c.b16 %v2050, %v2042
        %v3299 = vpack.c.b16 %v2059, %v2051
        %v3300 = vpack.c.b16 %v2060, %v2052
        %v3301 = vpack.c.b16 %v2061, %v2053
        %v3302 = vpack.c.b16 %v2062, %v2054
        %v3303 = vpack.c.b16 %v2063, %v2055
        %v3304 = vpack.c.b16 %v2064, %v2056
        %v3305 = vpack.c.b16 %v2065, %v2057
        %v3306 = vpack.c.b16 %v2066, %v2058
        %v3307 = vpack.c.b16 %v2075, %v2067
        %v3308 = vpack.c.b16 %v2076, %v2068
        %v3309 = vpack.c.b16 %v2077, %v2069
        %v3310 = vpack.c.b16 %v2078, %v2070
        %v3311 = vpack.c.b16 %v2079, %v2071
        %v3312 = vpack.c.b16 %v2080, %v2072
        %v3313 = vpack.c.b16 %v2081, %v2073
        %v3314 = vpack.c.b16 %v2082, %v2074
        %v3315 = vpack.c.b16 %v2091, %v2083
        %v3316 = vpack.c.b16 %v2092, %v2084
        %v3317 = vpack.c.b16 %v2093, %v2085
        %v3318 = vpack.c.b16 %v2094, %v2086
        %v3319 = vpack.c.b16 %v2095, %v2087
        %v3320 = vpack.c.b16 %v2096, %v2088
        %v3321 = vpack.c.b16 %v2097, %v2089
        %v3322 = vpack.c.b16 %v2098, %v2090
        %v3323 = vpack.c.b16 %v2107, %v2099
        %v3324 = vpack.c.b16 %v2108, %v2100
        %v3325 = vpack.c.b16 %v2109, %v2101
        %v3326 = vpack.c.b16 %v2110, %v2102
        %v3327 = vpack.c.b16 %v2111, %v2103
        %v3328 = vpack.c.b16 %v2112, %v2104
        %v3329 = vpack.c.b16 %v2113, %v2105
        %v3330 = vpack.c.b16 %v2114, %v2106
        %v3331 = vpack.c.b16 %v2123, %v2115
        %v3332 = vpack.c.b16 %v2124, %v2116
        %v3333 = vpack.c.b16 %v2125, %v2117
        %v3334 = vpack.c.b16 %v2126, %v2118
        %v3335 = vpack.c.b16 %v2127, %v2119
        %v3336 = vpack.c.b16 %v2128, %v2120
        %v3337 = vpack.c.b16 %v2129, %v2121
        %v3338 = vpack.c.b16 %v2130, %v2122
        %v3339 = vpack.c.b16 %v2139, %v2131
        %v3340 = vpack.c.b16 %v2140, %v2132
        %v3341 = vpack.c.b16 %v2141, %v2133
        %v3342 = vpack.c.b16 %v2142, %v2134
        %v3343 = vpack.c.b16 %v2143, %v2135
        %v3344 = vpack.c.b16 %v2144, %v2136
        %v3345 = vpack.c.b16 %v2145, %v2137
        %v3346 = vpack.c.b16 %v2146, %v2138
        %v3347 = vpack.c.b16 %v2155, %v2147
        %v3348 = vpack.c.b16 %v2156, %v2148
        %v3349 = vpack.c.b16 %v2157, %v2149
        %v3350 = vpack.c.b16 %v2158, %v2150
        %v3351 = vpack.c.b16 %v2159, %v2151
        %v3352 = vpack.c.b16 %v2160, %v2152
        %v3353 = vpack.c.b16 %v2161, %v2153
        %v3354 = vpack.c.b16 %v2162, %v2154
        %v3355 = vpack.c.b16 %v2171, %v2163
        %v3356 = vpack.c.b16 %v2172, %v2164
        %v3357 = vpack.c.b16 %v2173, %v2165
        %v3358 = vpack.c.b16 %v2174, %v2166
        %v3359 = vpack.c.b16 %v2175, %v2167
        %v3360 = vpack.c.b16 %v2176, %v2168
        %v3361 = vpack.c.b16 %v2177, %v2169
        %v3362 = vpack.c.b16 %v2178, %v2170
        %v3363 = vpack.c.b16 %v2187, %v2179
        %v3364 = vpack.c.b16 %v2188, %v2180
        %v3365 = vpack.c.b16 %v2189, %v2181
        %v3366 = vpack.c.b16 %v2190, %v2182
        %v3367 = vpack.c.b16 %v2191, %v2183
        %v3368 = vpack.c.b16 %v2192, %v2184
        %v3369 = vpack.c.b16 %v2193, %v2185
        %v3370 = vpack.c.b16 %v2194, %v2186
        %v3371 = vpack.c.b16 %v2203, %v2195
        %v3372 = vpack.c.b16 %v2204, %v2196
        %v3373 = vpack.c.b16 %v2205, %v2197
        %v3374 = vpack.c.b16 %v2206, %v2198
        %v3375 = vpack.c.b16 %v2207, %v2199
        %v3376 = vpack.c.b16 %v2208, %v2200
        %v3377 = vpack.c.b16 %v2209, %v2201
        %v3378 = vpack.c.b16 %v2210, %v2202
        %v3379 = vpack.c.b16 %v2219, %v2211
        %v3380 = vpack.c.b16 %v2220, %v2212
        %v3381 = vpack.c.b16 %v2221, %v2213
        %v3382 = vpack.c.b16 %v2222, %v2214
        %v3383 = vpack.c.b16 %v2223, %v2215
        %v3384 = vpack.c.b16 %v2224, %v2216
        %v3385 = vpack.c.b16 %v2225, %v2217
        %v3386 = vpack.c.b16 %v2226, %v2218
        %v3387 = vpack.c.b16 %v2235, %v2227
        %v3388 = vpack.c.b16 %v2236, %v2228
        %v3389 = vpack.c.b16 %v2237, %v2229
        %v3390 = vpack.c.b16 %v2238, %v2230
        %v3391 = vpack.c.b16 %v2239, %v2231
        %v3392 = vpack.c.b16 %v2240, %v2232
        %v3393 = vpack.c.b16 %v2241, %v2233
        %v3394 = vpack.c.b16 %v2242, %v2234
        %v3395 = vpack.c.b16 %v2251, %v2243
        %v3396 = vpack.c.b16 %v2252, %v2244
        %v3397 = vpack.c.b16 %v2253, %v2245
        %v3398 = vpack.c.b16 %v2254, %v2246
        %v3399 = vpack.c.b16 %v2255, %v2247
        %v3400 = vpack.c.b16 %v2256, %v2248
        %v3401 = vpack.c.b16 %v2257, %v2249
        %v3402 = vpack.c.b16 %v2258, %v2250
        %v3403 = vpack.c.b16 %v2267, %v2259
        %v3404 = vpack.c.b16 %v2268, %v2260
        %v3405 = vpack.c.b16 %v2269, %v2261
        %v3406 = vpack.c.b16 %v2270, %v2262
        %v3407 = vpack.c.b16 %v2271, %v2263
        %v3408 = vpack.c.b16 %v2272, %v2264
        %v3409 = vpack.c.b16 %v2273, %v2265
        %v3410 = vpack.c.b16 %v2274, %v2266
        %v3411 = vpack.c.b16 %v2283, %v2275
        %v3412 = vpack.c.b16 %v2284, %v2276
        %v3413 = vpack.c.b16 %v2285, %v2277
        %v3414 = vpack.c.b16 %v2286, %v2278
        %v3415 = vpack.c.b16 %v2287, %v2279
        %v3416 = vpack.c.b16 %v2288, %v2280
        %v3417 = vpack.c.b16 %v2289, %v2281
        %v3418 = vpack.c.b16 %v2290, %v2282
        %v3419 = vpack.c.b16 %v2299, %v2291
        %v3420 = vpack.c.b16 %v2300, %v2292
        %v3421 = vpack.c.b16 %v2301, %v2293
        %v3422 = vpack.c.b16 %v2302, %v2294
        %v3423 = vpack.c.b16 %v2303, %v2295
        %v3424 = vpack.c.b16 %v2304, %v2296
        %v3425 = vpack.c.b16 %v2305, %v2297
        %v3426 = vpack.c.b16 %v2306, %v2298
        %v3427 = vpack.c.b16 %v2315, %v2307
        %v3428 = vpack.c.b16 %v2316, %v2308
        %v3429 = vpack.c.b16 %v2317, %v2309
        %v3430 = vpack.c.b16 %v2318, %v2310
        %v3431 = vpack.c.b16 %v2319, %v2311
        %v3432 = vpack.c.b16 %v2320, %v2312
        %v3433 = vpack.c.b16 %v2321, %v2313
        %v3434 = vpack.c.b16 %v2322, %v2314
        %v3435 = vpack.c.b16 %v2331, %v2323
        %v3436 = vpack.c.b16 %v2332, %v2324
        %v3437 = vpack.c.b16 %v2333, %v2325
        %v3438 = vpack.c.b16 %v2334, %v2326
        %v3439 = vpack.c.b16 %v2335, %v2327
        %v3440 = vpack.c.b16 %v2336, %v2328
        %v3441 = vpack.c.b16 %v2337, %v2329
        %v3442 = vpack.c.b16 %v2338, %v2330
        %v3443 = vpack.c.b16 %v2347, %v2339
        %v3444 = vpack.c.b16 %v2348, %v2340
        %v3445 = vpack.c.b16 %v2349, %v2341
        %v3446 = vpack.c.b16 %v2350, %v2342
        %v3447 = vpack.c.b16 %v2351, %v2343
        %v3448 = vpack.c.b16 %v2352, %v2344
        %v3449 = vpack.c.b16 %v2353, %v2345
        %v3450 = vpack.c.b16 %v2354, %v2346
        %v3451 = vpack.c.b16 %v2363, %v2355
        %v3452 = vpack.c.b16 %v2364, %v2356
        %v3453 = vpack.c.b16 %v2365, %v2357
        %v3454 = vpack.c.b16 %v2366, %v2358
        %v3455 = vpack.c.b16 %v2367, %v2359
        %v3456 = vpack.c.b16 %v2368, %v2360
        %v3457 = vpack.c.b16 %v2369, %v2361
        %v3458 = vpack.c.b16 %v2370, %v2362
        %v3459 = vpack.c.b16 %v2379, %v2371
        %v3460 = vpack.c.b16 %v2380, %v2372
        %v3461 = vpack.c.b16 %v2381, %v2373
        %v3462 = vpack.c.b16 %v2382, %v2374
        %v3463 = vpack.c.b16 %v2383, %v2375
        %v3464 = vpack.c.b16 %v2384, %v2376
        %v3465 = vpack.c.b16 %v2385, %v2377
        %v3466 = vpack.c.b16 %v2386, %v2378
        %v3467 = vpack.c.b16 %v2395, %v2387
        %v3468 = vpack.c.b16 %v2396, %v2388
        %v3469 = vpack.c.b16 %v2397, %v2389
        %v3470 = vpack.c.b16 %v2398, %v2390
        %v3471 = vpack.c.b16 %v2399, %v2391
        %v3472 = vpack.c.b16 %v2400, %v2392
        %v3473 = vpack.c.b16 %v2401, %v2393
        %v3474 = vpack.c.b16 %v2402, %v2394
        %v3475 = vpack.c.b16 %v2411, %v2403
        %v3476 = vpack.c.b16 %v2412, %v2404
        %v3477 = vpack.c.b16 %v2413, %v2405
        %v3478 = vpack.c.b16 %v2414, %v2406
        %v3479 = vpack.c.b16 %v2415, %v2407
        %v3480 = vpack.c.b16 %v2416, %v2408
        %v3481 = vpack.c.b16 %v2417, %v2409
        %v3482 = vpack.c.b16 %v2418, %v2410
        %v3483 = vpack.c.b16 %v2427, %v2419
        %v3484 = vpack.c.b16 %v2428, %v2420
        %v3485 = vpack.c.b16 %v2429, %v2421
        %v3486 = vpack.c.b16 %v2430, %v2422
        %v3487 = vpack.c.b16 %v2431, %v2423
        %v3488 = vpack.c.b16 %v2432, %v2424
        %v3489 = vpack.c.b16 %v2433, %v2425
        %v3490 = vpack.c.b16 %v2434, %v2426
        %v3491 = vpack.c.b16 %v2443, %v2435
        %v3492 = vpack.c.b16 %v2444, %v2436
        %v3493 = vpack.c.b16 %v2445, %v2437
        %v3494 = vpack.c.b16 %v2446, %v2438
        %v3495 = vpack.c.b16 %v2447, %v2439
        %v3496 = vpack.c.b16 %v2448, %v2440
        %v3497 = vpack.c.b16 %v2449, %v2441
        %v3498 = vpack.c.b16 %v2450, %v2442
        %v3499 = vpack.c.b16 %v2459, %v2451
        %v3500 = vpack.c.b16 %v2460, %v2452
        %v3501 = vpack.c.b16 %v2461, %v2453
        %v3502 = vpack.c.b16 %v2462, %v2454
        %v3503 = vpack.c.b16 %v2463, %v2455
        %v3504 = vpack.c.b16 %v2464, %v2456
        %v3505 = vpack.c.b16 %v2465, %v2457
        %v3506 = vpack.c.b16 %v2466, %v2458
        %v3507 = vpack.c.b16 %v2475, %v2467
        %v3508 = vpack.c.b16 %v2476, %v2468
        %v3509 = vpack.c.b16 %v2477, %v2469
        %v3510 = vpack.c.b16 %v2478, %v2470
        %v3511 = vpack.c.b16 %v2479, %v2471
        %v3512 = vpack.c.b16 %v2480, %v2472
        %v3513 = vpack.c.b16 %v2481, %v2473
        %v3514 = vpack.c.b16 %v2482, %v2474
        %v3515 = vpack.c.b16 %v2491, %v2483
        %v3516 = vpack.c.b16 %v2492, %v2484
        %v3517 = vpack.c.b16 %v2493, %v2485
        %v3518 = vpack.c.b16 %v2494, %v2486
        %v3519 = vpack.c.b16 %v2495, %v2487
        %v3520 = vpack.c.b16 %v2496, %v2488
        %v3521 = vpack.c.b16 %v2497, %v2489
        %v3522 = vpack.c.b16 %v2498, %v2490
        %v3523 = vpack.c.b16 %v2507, %v2499
        %v3524 = vpack.c.b16 %v2508, %v2500
        %v3525 = vpack.c.b16 %v2509, %v2501
        %v3526 = vpack.c.b16 %v2510, %v2502
        %v3527 = vpack.c.b16 %v2511, %v2503
        %v3528 = vpack.c.b16 %v2512, %v2504
        %v3529 = vpack.c.b16 %v2513, %v2505
        %v3530 = vpack.c.b16 %v2514, %v2506
        %v3531 = vpack.c.b16 %v2523, %v2515
        %v3532 = vpack.c.b16 %v2524, %v2516
        %v3533 = vpack.c.b16 %v2525, %v2517
        %v3534 = vpack.c.b16 %v2526, %v2518
        %v3535 = vpack.c.b16 %v2527, %v2519
        %v3536 = vpack.c.b16 %v2528, %v2520
        %v3537 = vpack.c.b16 %v2529, %v2521
        %v3538 = vpack.c.b16 %v2530, %v2522
        %v3539 = vpack.c.b16 %v2539, %v2531
        %v3540 = vpack.c.b16 %v2540, %v2532
        %v3541 = vpack.c.b16 %v2541, %v2533
        %v3542 = vpack.c.b16 %v2542, %v2534
        %v3543 = vpack.c.b16 %v2543, %v2535
        %v3544 = vpack.c.b16 %v2544, %v2536
        %v3545 = vpack.c.b16 %v2545, %v2537
        %v3546 = vpack.c.b16 %v2546, %v2538
        %v3547 = vpack.c.b16 %v2555, %v2547
        %v3548 = vpack.c.b16 %v2556, %v2548
        %v3549 = vpack.c.b16 %v2557, %v2549
        %v3550 = vpack.c.b16 %v2558, %v2550
        %v3551 = vpack.c.b16 %v2559, %v2551
        %v3552 = vpack.c.b16 %v2560, %v2552
        %v3553 = vpack.c.b16 %v2561, %v2553
        %v3554 = vpack.c.b16 %v2562, %v2554
        %v3555 = vpack.c.b16 %v2571, %v2563
        %v3556 = vpack.c.b16 %v2572, %v2564
        %v3557 = vpack.c.b16 %v2573, %v2565
        %v3558 = vpack.c.b16 %v2574, %v2566
        %v3559 = vpack.c.b16 %v2575, %v2567
        %v3560 = vpack.c.b16 %v2576, %v2568
        %v3561 = vpack.c.b16 %v2577, %v2569
        %v3562 = vpack.c.b16 %v2578, %v2570
        %v3563 = vpack.c.b16 %v2587, %v2579
        %v3564 = vpack.c.b16 %v2588, %v2580
        %v3565 = vpack.c.b16 %v2589, %v2581
        %v3566 = vpack.c.b16 %v2590, %v2582
        %v3567 = vpack.c.b16 %v2591, %v2583
        %v3568 = vpack.c.b16 %v2592, %v2584
        %v3569 = vpack.c.b16 %v2593, %v2585
        %v3570 = vpack.c.b16 %v2594, %v2586
        %v3571 = vpack.c.b16 %v2603, %v2595
        %v3572 = vpack.c.b16 %v2604, %v2596
        %v3573 = vpack.c.b16 %v2605, %v2597
        %v3574 = vpack.c.b16 %v2606, %v2598
        %v3575 = vpack.c.b16 %v2607, %v2599
        %v3576 = vpack.c.b16 %v2608, %v2600
        %v3577 = vpack.c.b16 %v2609, %v2601
        %v3578 = vpack.c.b16 %v2610, %v2602
        %v3579 = vpack.c.b16 %v2619, %v2611
        %v3580 = vpack.c.b16 %v2620, %v2612
        %v3581 = vpack.c.b16 %v2621, %v2613
        %v3582 = vpack.c.b16 %v2622, %v2614
        %v3583 = vpack.c.b16 %v2623, %v2615
        %v3584 = vpack.c.b16 %v2624, %v2616
        %v3585 = vpack.c.b16 %v2625, %v2617
        %v3586 = vpack.c.b16 %v2626, %v2618
        %v3587 = vpack.c.b16 %v2635, %v2627
        %v3588 = vpack.c.b16 %v2636, %v2628
        %v3589 = vpack.c.b16 %v2637, %v2629
        %v3590 = vpack.c.b16 %v2638, %v2630
        %v3591 = vpack.c.b16 %v2639, %v2631
        %v3592 = vpack.c.b16 %v2640, %v2632
        %v3593 = vpack.c.b16 %v2641, %v2633
        %v3594 = vpack.c.b16 %v2642, %v2634
        %v3595 = vpack.c.b16 %v2651, %v2643
        %v3596 = vpack.c.b16 %v2652, %v2644
        %v3597 = vpack.c.b16 %v2653, %v2645
        %v3598 = vpack.c.b16 %v2654, %v2646
        %v3599 = vpack.c.b16 %v2655, %v2647
        %v3600 = vpack.c.b16 %v2656, %v2648
        %v3601 = vpack.c.b16 %v2657, %v2649
        %v3602 = vpack.c.b16 %v2658, %v2650
        %v3603 = vpack.c.b16 %v2667, %v2659
        %v3604 = vpack.c.b16 %v2668, %v2660
        %v3605 = vpack.c.b16 %v2669, %v2661
        %v3606 = vpack.c.b16 %v2670, %v2662
        %v3607 = vpack.c.b16 %v2671, %v2663
        %v3608 = vpack.c.b16 %v2672, %v2664
        %v3609 = vpack.c.b16 %v2673, %v2665
        %v3610 = vpack.c.b16 %v2674, %v2666
        %v3611 = vpack.c.b16 %v2683, %v2675
        %v3612 = vpack.c.b16 %v2684, %v2676
        %v3613 = vpack.c.b16 %v2685, %v2677
        %v3614 = vpack.c.b16 %v2686, %v2678
        %v3615 = vpack.c.b16 %v2687, %v2679
        %v3616 = vpack.c.b16 %v2688, %v2680
        %v3617 = vpack.c.b16 %v2689, %v2681
        %v3618 = vpack.c.b16 %v2690, %v2682
        %v3619 = vpack.c.b16 %v2699, %v2691
        %v3620 = vpack.c.b16 %v2700, %v2692
        %v3621 = vpack.c.b16 %v2701, %v2693
        %v3622 = vpack.c.b16 %v2702, %v2694
        %v3623 = vpack.c.b16 %v2703, %v2695
        %v3624 = vpack.c.b16 %v2704, %v2696
        %v3625 = vpack.c.b16 %v2705, %v2697
        %v3626 = vpack.c.b16 %v2706, %v2698
        %v3627 = vpack.c.b16 %v2715, %v2707
        %v3628 = vpack.c.b16 %v2716, %v2708
        %v3629 = vpack.c.b16 %v2717, %v2709
        %v3630 = vpack.c.b16 %v2718, %v2710
        %v3631 = vpack.c.b16 %v2719, %v2711
        %v3632 = vpack.c.b16 %v2720, %v2712
        %v3633 = vpack.c.b16 %v2721, %v2713
        %v3634 = vpack.c.b16 %v2722, %v2714
        %v3635 = vpack.c.b16 %v2731, %v2723
        %v3636 = vpack.c.b16 %v2732, %v2724
        %v3637 = vpack.c.b16 %v2733, %v2725
        %v3638 = vpack.c.b16 %v2734, %v2726
        %v3639 = vpack.c.b16 %v2735, %v2727
        %v3640 = vpack.c.b16 %v2736, %v2728
        %v3641 = vpack.c.b16 %v2737, %v2729
        %v3642 = vpack.c.b16 %v2738, %v2730
        %v3643 = vpack.c.b16 %v2747, %v2739
        %v3644 = vpack.c.b16 %v2748, %v2740
        %v3645 = vpack.c.b16 %v2749, %v2741
        %v3646 = vpack.c.b16 %v2750, %v2742
        %v3647 = vpack.c.b16 %v2751, %v2743
        %v3648 = vpack.c.b16 %v2752, %v2744
        %v3649 = vpack.c.b16 %v2753, %v2745
        %v3650 = vpack.c.b16 %v2754, %v2746
        %v3651 = vpack.c.b16 %v2763, %v2755
        %v3652 = vpack.c.b16 %v2764, %v2756
        %v3653 = vpack.c.b16 %v2765, %v2757
        %v3654 = vpack.c.b16 %v2766, %v2758
        %v3655 = vpack.c.b16 %v2767, %v2759
        %v3656 = vpack.c.b16 %v2768, %v2760
        %v3657 = vpack.c.b16 %v2769, %v2761
        %v3658 = vpack.c.b16 %v2770, %v2762
        %v3659 = vpack.c.b16 %v2779, %v2771
        %v3660 = vpack.c.b16 %v2780, %v2772
        %v3661 = vpack.c.b16 %v2781, %v2773
        %v3662 = vpack.c.b16 %v2782, %v2774
        %v3663 = vpack.c.b16 %v2783, %v2775
        %v3664 = vpack.c.b16 %v2784, %v2776
        %v3665 = vpack.c.b16 %v2785, %v2777
        %v3666 = vpack.c.b16 %v2786, %v2778
        %v3667 = vpack.c.b16 %v2795, %v2787
        %v3668 = vpack.c.b16 %v2796, %v2788
        %v3669 = vpack.c.b16 %v2797, %v2789
        %v3670 = vpack.c.b16 %v2798, %v2790
        %v3671 = vpack.c.b16 %v2799, %v2791
        %v3672 = vpack.c.b16 %v2800, %v2792
        %v3673 = vpack.c.b16 %v2801, %v2793
        %v3674 = vpack.c.b16 %v2802, %v2794
        %v3675 = vpack.c.b16 %v2811, %v2803
        %v3676 = vpack.c.b16 %v2812, %v2804
        %v3677 = vpack.c.b16 %v2813, %v2805
        %v3678 = vpack.c.b16 %v2814, %v2806
        %v3679 = vpack.c.b16 %v2815, %v2807
        %v3680 = vpack.c.b16 %v2816, %v2808
        %v3681 = vpack.c.b16 %v2817, %v2809
        %v3682 = vpack.c.b16 %v2818, %v2810
        %v3683 = vpack.c.b16 %v2827, %v2819
        %v3684 = vpack.c.b16 %v2828, %v2820
        %v3685 = vpack.c.b16 %v2829, %v2821
        %v3686 = vpack.c.b16 %v2830, %v2822
        %v3687 = vpack.c.b16 %v2831, %v2823
        %v3688 = vpack.c.b16 %v2832, %v2824
        %v3689 = vpack.c.b16 %v2833, %v2825
        %v3690 = vpack.c.b16 %v2834, %v2826
        %v3691 = vpack.c.b16 %v2843, %v2835
        %v3692 = vpack.c.b16 %v2844, %v2836
        %v3693 = vpack.c.b16 %v2845, %v2837
        %v3694 = vpack.c.b16 %v2846, %v2838
        %v3695 = vpack.c.b16 %v2847, %v2839
        %v3696 = vpack.c.b16 %v2848, %v2840
        %v3697 = vpack.c.b16 %v2849, %v2841
        %v3698 = vpack.c.b16 %v2850, %v2842
        %v3699 = vpack.c.b16 %v2859, %v2851
        %v3700 = vpack.c.b16 %v2860, %v2852
        %v3701 = vpack.c.b16 %v2861, %v2853
        %v3702 = vpack.c.b16 %v2862, %v2854
        %v3703 = vpack.c.b16 %v2863, %v2855
        %v3704 = vpack.c.b16 %v2864, %v2856
        %v3705 = vpack.c.b16 %v2865, %v2857
        %v3706 = vpack.c.b16 %v2866, %v2858
        %v3707 = vpack.c.b16 %v2875, %v2867
        %v3708 = vpack.c.b16 %v2876, %v2868
        %v3709 = vpack.c.b16 %v2877, %v2869
        %v3710 = vpack.c.b16 %v2878, %v2870
        %v3711 = vpack.c.b16 %v2879, %v2871
        %v3712 = vpack.c.b16 %v2880, %v2872
        %v3713 = vpack.c.b16 %v2881, %v2873
        %v3714 = vpack.c.b16 %v2882, %v2874
        %v3715 = vpack.c.b16 %v2891, %v2883
        %v3716 = vpack.c.b16 %v2892, %v2884
        %v3717 = vpack.c.b16 %v2893, %v2885
        %v3718 = vpack.c.b16 %v2894, %v2886
        %v3719 = vpack.c.b16 %v2895, %v2887
        %v3720 = vpack.c.b16 %v2896, %v2888
        %v3721 = vpack.c.b16 %v2897, %v2889
        %v3722 = vpack.c.b16 %v2898, %v2890
        %v3723 = vpack.c.b16 %v2907, %v2899
        %v3724 = vpack.c.b16 %v2908, %v2900
        %v3725 = vpack.c.b16 %v2909, %v2901
        %v3726 = vpack.c.b16 %v2910, %v2902
        %v3727 = vpack.c.b16 %v2911, %v2903
        %v3728 = vpack.c.b16 %v2912, %v2904
        %v3729 = vpack.c.b16 %v2913, %v2905
        %v3730 = vpack.c.b16 %v2914, %v2906
        %v3731 = vpack.c.b16 %v2923, %v2915
        %v3732 = vpack.c.b16 %v2924, %v2916
        %v3733 = vpack.c.b16 %v2925, %v2917
        %v3734 = vpack.c.b16 %v2926, %v2918
        %v3735 = vpack.c.b16 %v2927, %v2919
        %v3736 = vpack.c.b16 %v2928, %v2920
        %v3737 = vpack.c.b16 %v2929, %v2921
        %v3738 = vpack.c.b16 %v2930, %v2922
        %v3739 = vpack.c.b16 %v2939, %v2931
        %v3740 = vpack.c.b16 %v2940, %v2932
        %v3741 = vpack.c.b16 %v2941, %v2933
        %v3742 = vpack.c.b16 %v2942, %v2934
        %v3743 = vpack.c.b16 %v2943, %v2935
        %v3744 = vpack.c.b16 %v2944, %v2936
        %v3745 = vpack.c.b16 %v2945, %v2937
        %v3746 = vpack.c.b16 %v2946, %v2938
        %v3747 = vpack.c.b16 %v2955, %v2947
        %v3748 = vpack.c.b16 %v2956, %v2948
        %v3749 = vpack.c.b16 %v2957, %v2949
        %v3750 = vpack.c.b16 %v2958, %v2950
        %v3751 = vpack.c.b16 %v2959, %v2951
        %v3752 = vpack.c.b16 %v2960, %v2952
        %v3753 = vpack.c.b16 %v2961, %v2953
        %v3754 = vpack.c.b16 %v2962, %v2954
        %v3755 = vpack.c.b16 %v2971, %v2963
        %v3756 = vpack.c.b16 %v2972, %v2964
        %v3757 = vpack.c.b16 %v2973, %v2965
        %v3758 = vpack.c.b16 %v2974, %v2966
        %v3759 = vpack.c.b16 %v2975, %v2967
        %v3760 = vpack.c.b16 %v2976, %v2968
        %v3761 = vpack.c.b16 %v2977, %v2969
        %v3762 = vpack.c.b16 %v2978, %v2970
        %v3763 = vpack.c.b16 %v2987, %v2979
        %v3764 = vpack.c.b16 %v2988, %v2980
        %v3765 = vpack.c.b16 %v2989, %v2981
        %v3766 = vpack.c.b16 %v2990, %v2982
        %v3767 = vpack.c.b16 %v2991, %v2983
        %v3768 = vpack.c.b16 %v2992, %v2984
        %v3769 = vpack.c.b16 %v2993, %v2985
        %v3770 = vpack.c.b16 %v2994, %v2986
        %v3771 = vpack.c.b16 %v3003, %v2995
        %v3772 = vpack.c.b16 %v3004, %v2996
        %v3773 = vpack.c.b16 %v3005, %v2997
        %v3774 = vpack.c.b16 %v3006, %v2998
        %v3775 = vpack.c.b16 %v3007, %v2999
        %v3776 = vpack.c.b16 %v3008, %v3000
        %v3777 = vpack.c.b16 %v3009, %v3001
        %v3778 = vpack.c.b16 %v3010, %v3002
        %v3779 = vpack.c.b16 %v3019, %v3011
        %v3780 = vpack.c.b16 %v3020, %v3012
        %v3781 = vpack.c.b16 %v3021, %v3013
        %v3782 = vpack.c.b16 %v3022, %v3014
        %v3783 = vpack.c.b16 %v3023, %v3015
        %v3784 = vpack.c.b16 %v3024, %v3016
        %v3785 = vpack.c.b16 %v3025, %v3017
        %v3786 = vpack.c.b16 %v3026, %v3018
        %v3787 = vpack.c.b16 %v3035, %v3027
        %v3788 = vpack.c.b16 %v3036, %v3028
        %v3789 = vpack.c.b16 %v3037, %v3029
        %v3790 = vpack.c.b16 %v3038, %v3030
        %v3791 = vpack.c.b16 %v3039, %v3031
        %v3792 = vpack.c.b16 %v3040, %v3032
        %v3793 = vpack.c.b16 %v3041, %v3033
        %v3794 = vpack.c.b16 %v3042, %v3034
        %v3795 = vpack.c.b16 %v3051, %v3043
        %v3796 = vpack.c.b16 %v3052, %v3044
        %v3797 = vpack.c.b16 %v3053, %v3045
        %v3798 = vpack.c.b16 %v3054, %v3046
        %v3799 = vpack.c.b16 %v3055, %v3047
        %v3800 = vpack.c.b16 %v3056, %v3048
        %v3801 = vpack.c.b16 %v3057, %v3049
        %v3802 = vpack.c.b16 %v3058, %v3050
        %v3803 = vpack.c.b16 %v3067, %v3059
        %v3804 = vpack.c.b16 %v3068, %v3060
        %v3805 = vpack.c.b16 %v3069, %v3061
        %v3806 = vpack.c.b16 %v3070, %v3062
        %v3807 = vpack.c.b16 %v3071, %v3063
        %v3808 = vpack.c.b16 %v3072, %v3064
        %v3809 = vpack.c.b16 %v3073, %v3065
        %v3810 = vpack.c.b16 %v3074, %v3066
        %v3811 = vpack.c.b16 %v3083, %v3075
        %v3812 = vpack.c.b16 %v3084, %v3076
        %v3813 = vpack.c.b16 %v3085, %v3077
        %v3814 = vpack.c.b16 %v3086, %v3078
        %v3815 = vpack.c.b16 %v3087, %v3079
        %v3816 = vpack.c.b16 %v3088, %v3080
        %v3817 = vpack.c.b16 %v3089, %v3081
        %v3818 = vpack.c.b16 %v3090, %v3082
        %v3819 = vpack.c.b16 %v3099, %v3091
        %v3820 = vpack.c.b16 %v3100, %v3092
        %v3821 = vpack.c.b16 %v3101, %v3093
        %v3822 = vpack.c.b16 %v3102, %v3094
        %v3823 = vpack.c.b16 %v3103, %v3095
        %v3824 = vpack.c.b16 %v3104, %v3096
        %v3825 = vpack.c.b16 %v3105, %v3097
        %v3826 = vpack.c.b16 %v3106, %v3098
        %v3827 = vpack.c.b16 %v3115, %v3107
        %v3828 = vpack.c.b16 %v3116, %v3108
        %v3829 = vpack.c.b16 %v3117, %v3109
        %v3830 = vpack.c.b16 %v3118, %v3110
        %v3831 = vpack.c.b16 %v3119, %v3111
        %v3832 = vpack.c.b16 %v3120, %v3112
        %v3833 = vpack.c.b16 %v3121, %v3113
        %v3834 = vpack.c.b16 %v3122, %v3114
        %v3835 = vpack.c.b16 %v3131, %v3123
        %v3836 = vpack.c.b16 %v3132, %v3124
        %v3837 = vpack.c.b16 %v3133, %v3125
        %v3838 = vpack.c.b16 %v3134, %v3126
        %v3839 = vpack.c.b16 %v3135, %v3127
        %v3840 = vpack.c.b16 %v3136, %v3128
        %v3841 = vpack.c.b16 %v3137, %v3129
        %v3842 = vpack.c.b16 %v3138, %v3130
        %4547 = vmatprep.subr.bf16.mxu0 %v3140
        %4548 = vmatpush1.bf16.msra.mxu0 %v3139
        %4549 = vmatprep.subr.bf16.mxu0 %v3148
        %4550 = vmatpush1.bf16.msra.mxu0 %v3147
        %4551 = vmatprep.subr.bf16.mxu0 %v3156
        %4552 = vmatpush1.bf16.msra.mxu0 %v3155
        %4553 = vmatprep.subr.bf16.mxu0 %v3164
        %4554 = vmatpush1.bf16.msra.mxu0 %v3163
        %4555 = vmatprep.subr.bf16.mxu0 %v3172
        %4556 = vmatpush1.bf16.msra.mxu0 %v3171
        %4557 = vmatprep.subr.bf16.mxu0 %v3180
        %4558 = vmatpush1.bf16.msra.mxu0 %v3179
        %4559 = vmatprep.subr.bf16.mxu0 %v3188
        %4560 = vmatpush1.bf16.msra.mxu0 %v3187
        %4561 = vmatprep.subr.bf16.mxu0 %v3196
        %4562 = vmatpush1.bf16.msra.mxu0 %v3195
        %4563 = vmatprep.subr.bf16.mxu0 %v3204
        %4564 = vmatpush1.bf16.msra.mxu0 %v3203
        %4565 = vmatprep.subr.bf16.mxu0 %v3212
        %4566 = vmatpush1.bf16.msra.mxu0 %v3211
        %4567 = vmatprep.subr.bf16.mxu0 %v3220
        %4568 = vmatpush1.bf16.msra.mxu0 %v3219
        %4569 = vmatprep.subr.bf16.mxu0 %v3228
        %4570 = vmatpush1.bf16.msra.mxu0 %v3227
        %4571 = vmatprep.subr.bf16.mxu0 %v3236
        %4572 = vmatpush1.bf16.msra.mxu0 %v3235
        %4573 = vmatprep.subr.bf16.mxu0 %v3244
        %4574 = vmatpush1.bf16.msra.mxu0 %v3243
        %4575 = vmatprep.subr.bf16.mxu0 %v3252
        %4576 = vmatpush1.bf16.msra.mxu0 %v3251
        %4577 = vmatprep.subr.bf16.mxu0 %v3260
        %4578 = vmatpush1.bf16.msra.mxu0 %v3259
        %4579 = vmatprep.mubr.bf16.mxu0 %v984
        %4580 = vmatmul.mubr.bf16.gmra.mrb[0].mxu0 %v983
        %v4581 = vpop.f32.mrb[0].mxu0
        %v4582 = vadd.f32 0.0, %v4581
        %v4583 = vpop.f32.mrb[0].mxu0
        %v4584 = vadd.f32 0.0, %v4583
        %v4585 = vpop.f32.mrb[0].mxu0
        %v4586 = vadd.f32 0.0, %v4585
        %v4587 = vpop.f32.mrb[0].mxu0
        %v4588 = vadd.f32 0.0, %v4587
        %4589 = vmatprep.mubr.bf16.mxu0 %v995
        %4590 = vmatmul.mubr.bf16.gmra.mrb[0].mxu0 %v994
        %v4591 = vpop.f32.mrb[0].mxu0
        %v4592 = vadd.f32 0.0, %v4591
        %v4593 = vpop.f32.mrb[0].mxu0
        %v4594 = vadd.f32 0.0, %v4593
        %v4595 = vpop.f32.mrb[0].mxu0
        %v4596 = vadd.f32 0.0, %v4595
        %v4597 = vpop.f32.mrb[0].mxu0
        %v4598 = vadd.f32 0.0, %v4597
        %4599 = vdwg.mxu0
        %4600 = vmatprep.subr.bf16.mxu0 %v3268
        %4601 = vmatpush1.bf16.msra.mxu0 %v3267
        %4602 = vmatprep.subr.bf16.mxu0 %v3276
        %4603 = vmatpush1.bf16.msra.mxu0 %v3275
        %4604 = vmatprep.subr.bf16.mxu0 %v3284
        %4605 = vmatpush1.bf16.msra.mxu0 %v3283
        %4606 = vmatprep.subr.bf16.mxu0 %v3292
        %4607 = vmatpush1.bf16.msra.mxu0 %v3291
        %4608 = vmatprep.subr.bf16.mxu0 %v3300
        %4609 = vmatpush1.bf16.msra.mxu0 %v3299
        %4610 = vmatprep.subr.bf16.mxu0 %v3308
        %4611 = vmatpush1.bf16.msra.mxu0 %v3307
        %4612 = vmatprep.subr.bf16.mxu0 %v3316
        %4613 = vmatpush1.bf16.msra.mxu0 %v3315
        %4614 = vmatprep.subr.bf16.mxu0 %v3324
        %4615 = vmatpush1.bf16.msra.mxu0 %v3323
        %4616 = vmatprep.subr.bf16.mxu0 %v3332
        %4617 = vmatpush1.bf16.msra.mxu0 %v3331
        %4618 = vmatprep.subr.bf16.mxu0 %v3340
        %4619 = vmatpush1.bf16.msra.mxu0 %v3339
        %4620 = vmatprep.subr.bf16.mxu0 %v3348
        %4621 = vmatpush1.bf16.msra.mxu0 %v3347
        %4622 = vmatprep.subr.bf16.mxu0 %v3356
        %4623 = vmatpush1.bf16.msra.mxu0 %v3355
        %4624 = vmatprep.subr.bf16.mxu0 %v3364
        %4625 = vmatpush1.bf16.msra.mxu0 %v3363
        %4626 = vmatprep.subr.bf16.mxu0 %v3372
        %4627 = vmatpush1.bf16.msra.mxu0 %v3371
        %4628 = vmatprep.subr.bf16.mxu0 %v3380
        %4629 = vmatpush1.bf16.msra.mxu0 %v3379
        %4630 = vmatprep.subr.bf16.mxu0 %v3388
        %4631 = vmatpush1.bf16.msra.mxu0 %v3387
        %4632 = vmatprep.mubr.bf16.mxu0 %v986
        %4633 = vmatmul.mubr.bf16.gmra.mrb[0].mxu0 %v985
        %v4634 = vpop.f32.mrb[0].mxu0
        %v4635 = vadd.f32 %v4582, %v4634
        %v4636 = vpop.f32.mrb[0].mxu0
        %v4637 = vadd.f32 %v4584, %v4636
        %v4638 = vpop.f32.mrb[0].mxu0
        %v4639 = vadd.f32 %v4586, %v4638
        %v4640 = vpop.f32.mrb[0].mxu0
        %v4641 = vadd.f32 %v4588, %v4640
        %4642 = vmatprep.mubr.bf16.mxu0 %v997
        %4643 = vmatmul.mubr.bf16.gmra.mrb[0].mxu0 %v996
        %v4644 = vpop.f32.mrb[0].mxu0
        %v4645 = vadd.f32 %v4592, %v4644
        %v4646 = vpop.f32.mrb[0].mxu0
        %v4647 = vadd.f32 %v4594, %v4646
        %v4648 = vpop.f32.mrb[0].mxu0
        %v4649 = vadd.f32 %v4596, %v4648
        %v4650 = vpop.f32.mrb[0].mxu0
        %v4651 = vadd.f32 %v4598, %v4650
        %4652 = vdwg.mxu0
        %4653 = vmatprep.subr.bf16.mxu0 %v3396
        %4654 = vmatpush1.bf16.msra.mxu0 %v3395
        %4655 = vmatprep.subr.bf16.mxu0 %v3404
        %4656 = vmatpush1.bf16.msra.mxu0 %v3403
        %4657 = vmatprep.subr.bf16.mxu0 %v3412
        %4658 = vmatpush1.bf16.msra.mxu0 %v3411
        %4659 = vmatprep.subr.bf16.mxu0 %v3420
        %4660 = vmatpush1.bf16.msra.mxu0 %v3419
        %4661 = vmatprep.subr.bf16.mxu0 %v3428
        %4662 = vmatpush1.bf16.msra.mxu0 %v3427
        %4663 = vmatprep.subr.bf16.mxu0 %v3436
        %4664 = vmatpush1.bf16.msra.mxu0 %v3435
        %4665 = vmatprep.subr.bf16.mxu0 %v3444
        %4666 = vmatpush1.bf16.msra.mxu0 %v3443
        %4667 = vmatprep.subr.bf16.mxu0 %v3452
        %4668 = vmatpush1.bf16.msra.mxu0 %v3451
        %4669 = vmatprep.subr.bf16.mxu0 %v3460
        %4670 = vmatpush1.bf16.msra.mxu0 %v3459
        %4671 = vmatprep.subr.bf16.mxu0 %v3468
        %4672 = vmatpush1.bf16.msra.mxu0 %v3467
        %4673 = vmatprep.subr.bf16.mxu0 %v3476
        %4674 = vmatpush1.bf16.msra.mxu0 %v3475
        %4675 = vmatprep.subr.bf16.mxu0 %v3484
        %4676 = vmatpush1.bf16.msra.mxu0 %v3483
        %4677 = vmatprep.subr.bf16.mxu0 %v3492
        %4678 = vmatpush1.bf16.msra.mxu0 %v3491
        %4679 = vmatprep.subr.bf16.mxu0 %v3500
        %4680 = vmatpush1.bf16.msra.mxu0 %v3499
        %4681 = vmatprep.subr.bf16.mxu0 %v3508
        %4682 = vmatpush1.bf16.msra.mxu0 %v3507
        %4683 = vmatprep.subr.bf16.mxu0 %v3516
        %4684 = vmatpush1.bf16.msra.mxu0 %v3515
        %4685 = vmatprep.mubr.bf16.mxu0 %v988
        %4686 = vmatmul.mubr.bf16.gmra.mrb[0].mxu0 %v987
        %v4687 = vpop.f32.mrb[0].mxu0
        %v4688 = vadd.f32 %v4635, %v4687
        %v4689 = vpop.f32.mrb[0].mxu0
        %v4690 = vadd.f32 %v4637, %v4689
        %v4691 = vpop.f32.mrb[0].mxu0
        %v4692 = vadd.f32 %v4639, %v4691
        %v4693 = vpop.f32.mrb[0].mxu0
        %v4694 = vadd.f32 %v4641, %v4693
        %4695 = vmatprep.mubr.bf16.mxu0 %v999
        %4696 = vmatmul.mubr.bf16.gmra.mrb[0].mxu0 %v998
        %v4697 = vpop.f32.mrb[0].mxu0
        %v4698 = vadd.f32 %v4645, %v4697
        %v4699 = vpop.f32.mrb[0].mxu0
        %v4700 = vadd.f32 %v4647, %v4699
        %v4701 = vpop.f32.mrb[0].mxu0
        %v4702 = vadd.f32 %v4649, %v4701
        %v4703 = vpop.f32.mrb[0].mxu0
        %v4704 = vadd.f32 %v4651, %v4703
        %4705 = vdwg.mxu0
        %4706 = vmatprep.subr.bf16.mxu0 %v3524
        %4707 = vmatpush1.bf16.msra.mxu0 %v3523
        %4708 = vmatprep.subr.bf16.mxu0 %v3532
        %4709 = vmatpush1.bf16.msra.mxu0 %v3531
        %4710 = vmatprep.subr.bf16.mxu0 %v3540
        %4711 = vmatpush1.bf16.msra.mxu0 %v3539
        %4712 = vmatprep.subr.bf16.mxu0 %v3548
        %4713 = vmatpush1.bf16.msra.mxu0 %v3547
        %4714 = vmatprep.subr.bf16.mxu0 %v3556
        %4715 = vmatpush1.bf16.msra.mxu0 %v3555
        %4716 = vmatprep.subr.bf16.mxu0 %v3564
        %4717 = vmatpush1.bf16.msra.mxu0 %v3563
        %4718 = vmatprep.subr.bf16.mxu0 %v3572
        %4719 = vmatpush1.bf16.msra.mxu0 %v3571
        %4720 = vmatprep.subr.bf16.mxu0 %v3580
        %4721 = vmatpush1.bf16.msra.mxu0 %v3579
        %4722 = vmatprep.subr.bf16.mxu0 %v3588
        %4723 = vmatpush1.bf16.msra.mxu0 %v3587
        %4724 = vmatprep.subr.bf16.mxu0 %v3596
        %4725 = vmatpush1.bf16.msra.mxu0 %v3595
        %4726 = vmatprep.subr.bf16.mxu0 %v3604
        %4727 = vmatpush1.bf16.msra.mxu0 %v3603
        %4728 = vmatprep.subr.bf16.mxu0 %v3612
        %4729 = vmatpush1.bf16.msra.mxu0 %v3611
        %4730 = vmatprep.subr.bf16.mxu0 %v3620
        %4731 = vmatpush1.bf16.msra.mxu0 %v3619
        %4732 = vmatprep.subr.bf16.mxu0 %v3628
        %4733 = vmatpush1.bf16.msra.mxu0 %v3627
        %4734 = vmatprep.subr.bf16.mxu0 %v3636
        %4735 = vmatpush1.bf16.msra.mxu0 %v3635
        %4736 = vmatprep.subr.bf16.mxu0 %v3644
        %4737 = vmatpush1.bf16.msra.mxu0 %v3643
        %4738 = vmatprep.mubr.bf16.mxu0 %v990
        %4739 = vmatmul.mubr.bf16.gmra.mrb[0].mxu0 %v989
        %v4740 = vpop.f32.mrb[0].mxu0
        %v4741 = vadd.f32 %v4688, %v4740
        %v4742 = vpop.f32.mrb[0].mxu0
        %v4743 = vadd.f32 %v4690, %v4742
        %v4744 = vpop.f32.mrb[0].mxu0
        %v4745 = vadd.f32 %v4692, %v4744
        %v4746 = vpop.f32.mrb[0].mxu0
        %v4747 = vadd.f32 %v4694, %v4746
        %4748 = vmatprep.mubr.bf16.mxu0 %v1001
        %4749 = vmatmul.mubr.bf16.gmra.mrb[0].mxu0 %v1000
        %v4750 = vpop.f32.mrb[0].mxu0
        %v4751 = vadd.f32 %v4698, %v4750
        %v4752 = vpop.f32.mrb[0].mxu0
        %v4753 = vadd.f32 %v4700, %v4752
        %v4754 = vpop.f32.mrb[0].mxu0
        %v4755 = vadd.f32 %v4702, %v4754
        %v4756 = vpop.f32.mrb[0].mxu0
        %v4757 = vadd.f32 %v4704, %v4756
        %4758 = vdwg.mxu0
        %4759 = vmatprep.subr.bf16.mxu0 %v3652
        %4760 = vmatpush1.bf16.msra.mxu0 %v3651
        %4761 = vmatprep.subr.bf16.mxu0 %v3660
        %4762 = vmatpush1.bf16.msra.mxu0 %v3659
        %4763 = vmatprep.subr.bf16.mxu0 %v3668
        %4764 = vmatpush1.bf16.msra.mxu0 %v3667
        %4765 = vmatprep.subr.bf16.mxu0 %v3676
        %4766 = vmatpush1.bf16.msra.mxu0 %v3675
        %4767 = vmatprep.subr.bf16.mxu0 %v3684
        %4768 = vmatpush1.bf16.msra.mxu0 %v3683
        %4769 = vmatprep.subr.bf16.mxu0 %v3692
        %4770 = vmatpush1.bf16.msra.mxu0 %v3691
        %4771 = vmatprep.subr.bf16.mxu0 %v3700
        %4772 = vmatpush1.bf16.msra.mxu0 %v3699
        %4773 = vmatprep.subr.bf16.mxu0 %v3708
        %4774 = vmatpush1.bf16.msra.mxu0 %v3707
        %4775 = vmatprep.subr.bf16.mxu0 %v3716
        %4776 = vmatpush1.bf16.msra.mxu0 %v3715
        %4777 = vmatprep.subr.bf16.mxu0 %v3724
        %4778 = vmatpush1.bf16.msra.mxu0 %v3723
        %4779 = vmatprep.subr.bf16.mxu0 %v3732
        %4780 = vmatpush1.bf16.msra.mxu0 %v3731
        %4781 = vmatprep.subr.bf16.mxu0 %v3740
        %4782 = vmatpush1.bf16.msra.mxu0 %v3739
        %4783 = vmatprep.subr.bf16.mxu0 %v3748
        %4784 = vmatpush1.bf16.msra.mxu0 %v3747
        %4785 = vmatprep.subr.bf16.mxu0 %v3756
        %4786 = vmatpush1.bf16.msra.mxu0 %v3755
        %4787 = vmatprep.subr.bf16.mxu0 %v3764
        %4788 = vmatpush1.bf16.msra.mxu0 %v3763
        %4789 = vmatprep.subr.bf16.mxu0 %v3772
        %4790 = vmatpush1.bf16.msra.mxu0 %v3771
        %4791 = vmatprep.mubr.bf16.mxu0 %v992
        %4792 = vmatmul.mubr.bf16.gmra.mrb[0].mxu0 %v991
        %v4793 = vpop.f32.mrb[0].mxu0
        %v4794 = vadd.f32 %v4741, %v4793
        %v4795 = vpop.f32.mrb[0].mxu0
        %v4796 = vadd.f32 %v4743, %v4795
        %v4797 = vpop.f32.mrb[0].mxu0
        %v4798 = vadd.f32 %v4745, %v4797
        %v4799 = vpop.f32.mrb[0].mxu0
        %v4800 = vadd.f32 %v4747, %v4799
        %4801 = vmatprep.mubr.bf16.mxu0 %v1003
        %4802 = vmatmul.mubr.bf16.gmra.mrb[0].mxu0 %v1002
        %v4803 = vpop.f32.mrb[0].mxu0
        %v4804 = vadd.f32 %v4751, %v4803
        %v4805 = vpop.f32.mrb[0].mxu0
        %v4806 = vadd.f32 %v4753, %v4805
        %v4807 = vpop.f32.mrb[0].mxu0
        %v4808 = vadd.f32 %v4755, %v4807
        %v4809 = vpop.f32.mrb[0].mxu0
        %v4810 = vadd.f32 %v4757, %v4809
        %4811 = vdwg.mxu0
        %4812 = vmatprep.subr.bf16.mxu0 %v3780
        %4813 = vmatpush1.bf16.msra.mxu0 %v3779
        %4814 = vmatprep.subr.bf16.mxu0 %v3788
        %4815 = vmatpush1.bf16.msra.mxu0 %v3787
        %4816 = vmatprep.subr.bf16.mxu0 %v3796
        %4817 = vmatpush1.bf16.msra.mxu0 %v3795
        %4818 = vmatprep.subr.bf16.mxu0 %v3804
        %4819 = vmatpush1.bf16.msra.mxu0 %v3803
        %4820 = vmatprep.subr.bf16.mxu0 %v3812
        %4821 = vmatpush1.bf16.msra.mxu0 %v3811
        %4822 = vmatprep.subr.bf16.mxu0 %v3820
        %4823 = vmatpush1.bf16.msra.mxu0 %v3819
        %4824 = vmatprep.subr.bf16.mxu0 %v3828
        %4825 = vmatpush1.bf16.msra.mxu0 %v3827
        %4826 = vmatprep.subr.bf16.mxu0 %v3836
        %4827 = vmatpush1.bf16.msra.mxu0 %v3835
        %4828 = vmatprep.subr.bf16.mxu0 0
        %4829 = vmatpush1.bf16.msra.mxu0 0
        %4830 = vmatprep.subr.bf16.mxu0 0
        %4831 = vmatpush1.bf16.msra.mxu0 0
        %4832 = vmatprep.subr.bf16.mxu0 0
        %4833 = vmatpush1.bf16.msra.mxu0 0
        %4834 = vmatprep.subr.bf16.mxu0 0
        %4835 = vmatpush1.bf16.msra.mxu0 0
        %4836 = vmatprep.subr.bf16.mxu0 0
        %4837 = vmatpush1.bf16.msra.mxu0 0
        %4838 = vmatprep.subr.bf16.mxu0 0
        %4839 = vmatpush1.bf16.msra.mxu0 0
        %4840 = vmatprep.subr.bf16.mxu0 0
        %4841 = vmatpush1.bf16.msra.mxu0 0
        %4842 = vmatprep.subr.bf16.mxu0 0
        %4843 = vmatpush1.bf16.msra.mxu0 0
        %4844 = vmatprep.mubr.bf16.mxu0 0
        %4845 = vmatmul.mubr.bf16.gmra.mrb[0].mxu0 %v993
        %v4846 = vpop.f32.mrb[0].mxu0
        %v4847 = vadd.f32 %v4794, %v4846
        %v4848 = vpop.f32.mrb[0].mxu0
        %v4849 = vadd.f32 %v4796, %v4848
        %v4850 = vpop.f32.mrb[0].mxu0
        %v4851 = vadd.f32 %v4798, %v4850
        %v4852 = vpop.f32.mrb[0].mxu0
        %v4853 = vadd.f32 %v4800, %v4852
        %4854 = vmatprep.mubr.bf16.mxu0 0
        %4855 = vmatmul.mubr.bf16.gmra.mrb[0].mxu0 %v1004
        %v4856 = vpop.f32.mrb[0].mxu0
        %v4857 = vadd.f32 %v4804, %v4856
        %v4858 = vpop.f32.mrb[0].mxu0
        %v4859 = vadd.f32 %v4806, %v4858
        %v4860 = vpop.f32.mrb[0].mxu0
        %v4861 = vadd.f32 %v4808, %v4860
        %v4862 = vpop.f32.mrb[0].mxu0
        %v4863 = vadd.f32 %v4810, %v4862
        %4864 = vdwg.mxu0
        %4865 = vmatprep.subr.bf16.mxu0 %v3142
        %4866 = vmatpush1.bf16.msra.mxu0 %v3141
        %4867 = vmatprep.subr.bf16.mxu0 %v3150
        %4868 = vmatpush1.bf16.msra.mxu0 %v3149
        %4869 = vmatprep.subr.bf16.mxu0 %v3158
        %4870 = vmatpush1.bf16.msra.mxu0 %v3157
        %4871 = vmatprep.subr.bf16.mxu0 %v3166
        %4872 = vmatpush1.bf16.msra.mxu0 %v3165
        %4873 = vmatprep.subr.bf16.mxu0 %v3174
        %4874 = vmatpush1.bf16.msra.mxu0 %v3173
        %4875 = vmatprep.subr.bf16.mxu0 %v3182
        %4876 = vmatpush1.bf16.msra.mxu0 %v3181
        %4877 = vmatprep.subr.bf16.mxu0 %v3190
        %4878 = vmatpush1.bf16.msra.mxu0 %v3189
        %4879 = vmatprep.subr.bf16.mxu0 %v3198
        %4880 = vmatpush1.bf16.msra.mxu0 %v3197
        %4881 = vmatprep.subr.bf16.mxu0 %v3206
        %4882 = vmatpush1.bf16.msra.mxu0 %v3205
        %4883 = vmatprep.subr.bf16.mxu0 %v3214
        %4884 = vmatpush1.bf16.msra.mxu0 %v3213
        %4885 = vmatprep.subr.bf16.mxu0 %v3222
        %4886 = vmatpush1.bf16.msra.mxu0 %v3221
        %4887 = vmatprep.subr.bf16.mxu0 %v3230
        %4888 = vmatpush1.bf16.msra.mxu0 %v3229
        %4889 = vmatprep.subr.bf16.mxu0 %v3238
        %4890 = vmatpush1.bf16.msra.mxu0 %v3237
        %4891 = vmatprep.subr.bf16.mxu0 %v3246
        %4892 = vmatpush1.bf16.msra.mxu0 %v3245
        %4893 = vmatprep.subr.bf16.mxu0 %v3254
        %4894 = vmatpush1.bf16.msra.mxu0 %v3253
        %4895 = vmatprep.subr.bf16.mxu0 %v3262
        %4896 = vmatpush1.bf16.msra.mxu0 %v3261
        %4897 = vmatprep.mubr.bf16.mxu0 %v984
        %4898 = vmatmul.mubr.bf16.gmra.mrb[0].mxu0 %v983
        %v4899 = vpop.f32.mrb[0].mxu0
        %v4900 = vadd.f32 0.0, %v4899
        %v4901 = vpop.f32.mrb[0].mxu0
        %v4902 = vadd.f32 0.0, %v4901
        %v4903 = vpop.f32.mrb[0].mxu0
        %v4904 = vadd.f32 0.0, %v4903
        %v4905 = vpop.f32.mrb[0].mxu0
        %v4906 = vadd.f32 0.0, %v4905
        %4907 = vmatprep.mubr.bf16.mxu0 %v995
        %4908 = vmatmul.mubr.bf16.gmra.mrb[0].mxu0 %v994
        %v4909 = vpop.f32.mrb[0].mxu0
        %v4910 = vadd.f32 0.0, %v4909
        %v4911 = vpop.f32.mrb[0].mxu0
        %v4912 = vadd.f32 0.0, %v4911
        %v4913 = vpop.f32.mrb[0].mxu0
        %v4914 = vadd.f32 0.0, %v4913
        %v4915 = vpop.f32.mrb[0].mxu0
        %v4916 = vadd.f32 0.0, %v4915
        %4917 = vdwg.mxu0
        %4918 = vmatprep.subr.bf16.mxu0 %v3270
        %4919 = vmatpush1.bf16.msra.mxu0 %v3269
        %4920 = vmatprep.subr.bf16.mxu0 %v3278
        %4921 = vmatpush1.bf16.msra.mxu0 %v3277
        %4922 = vmatprep.subr.bf16.mxu0 %v3286
        %4923 = vmatpush1.bf16.msra.mxu0 %v3285
        %4924 = vmatprep.subr.bf16.mxu0 %v3294
        %4925 = vmatpush1.bf16.msra.mxu0 %v3293
        %4926 = vmatprep.subr.bf16.mxu0 %v3302
        %4927 = vmatpush1.bf16.msra.mxu0 %v3301
        %4928 = vmatprep.subr.bf16.mxu0 %v3310
        %4929 = vmatpush1.bf16.msra.mxu0 %v3309
        %4930 = vmatprep.subr.bf16.mxu0 %v3318
        %4931 = vmatpush1.bf16.msra.mxu0 %v3317
        %4932 = vmatprep.subr.bf16.mxu0 %v3326
        %4933 = vmatpush1.bf16.msra.mxu0 %v3325
        %4934 = vmatprep.subr.bf16.mxu0 %v3334
        %4935 = vmatpush1.bf16.msra.mxu0 %v3333
        %4936 = vmatprep.subr.bf16.mxu0 %v3342
        %4937 = vmatpush1.bf16.msra.mxu0 %v3341
        %4938 = vmatprep.subr.bf16.mxu0 %v3350
        %4939 = vmatpush1.bf16.msra.mxu0 %v3349
        %4940 = vmatprep.subr.bf16.mxu0 %v3358
        %4941 = vmatpush1.bf16.msra.mxu0 %v3357
        %4942 = vmatprep.subr.bf16.mxu0 %v3366
        %4943 = vmatpush1.bf16.msra.mxu0 %v3365
        %4944 = vmatprep.subr.bf16.mxu0 %v3374
        %4945 = vmatpush1.bf16.msra.mxu0 %v3373
        %4946 = vmatprep.subr.bf16.mxu0 %v3382
        %4947 = vmatpush1.bf16.msra.mxu0 %v3381
        %4948 = vmatprep.subr.bf16.mxu0 %v3390
        %4949 = vmatpush1.bf16.msra.mxu0 %v3389
        %4950 = vmatprep.mubr.bf16.mxu0 %v986
        %4951 = vmatmul.mubr.bf16.gmra.mrb[0].mxu0 %v985
        %v4952 = vpop.f32.mrb[0].mxu0
        %v4953 = vadd.f32 %v4900, %v4952
        %v4954 = vpop.f32.mrb[0].mxu0
        %v4955 = vadd.f32 %v4902, %v4954
        %v4956 = vpop.f32.mrb[0].mxu0
        %v4957 = vadd.f32 %v4904, %v4956
        %v4958 = vpop.f32.mrb[0].mxu0
        %v4959 = vadd.f32 %v4906, %v4958
        %4960 = vmatprep.mubr.bf16.mxu0 %v997
        %4961 = vmatmul.mubr.bf16.gmra.mrb[0].mxu0 %v996
        %v4962 = vpop.f32.mrb[0].mxu0
        %v4963 = vadd.f32 %v4910, %v4962
        %v4964 = vpop.f32.mrb[0].mxu0
        %v4965 = vadd.f32 %v4912, %v4964
        %v4966 = vpop.f32.mrb[0].mxu0
        %v4967 = vadd.f32 %v4914, %v4966
        %v4968 = vpop.f32.mrb[0].mxu0
        %v4969 = vadd.f32 %v4916, %v4968
        %4970 = vdwg.mxu0
        %4971 = vmatprep.subr.bf16.mxu0 %v3398
        %4972 = vmatpush1.bf16.msra.mxu0 %v3397
        %4973 = vmatprep.subr.bf16.mxu0 %v3406
        %4974 = vmatpush1.bf16.msra.mxu0 %v3405
        %4975 = vmatprep.subr.bf16.mxu0 %v3414
        %4976 = vmatpush1.bf16.msra.mxu0 %v3413
        %4977 = vmatprep.subr.bf16.mxu0 %v3422
        %4978 = vmatpush1.bf16.msra.mxu0 %v3421
        %4979 = vmatprep.subr.bf16.mxu0 %v3430
        %4980 = vmatpush1.bf16.msra.mxu0 %v3429
        %4981 = vmatprep.subr.bf16.mxu0 %v3438
        %4982 = vmatpush1.bf16.msra.mxu0 %v3437
        %4983 = vmatprep.subr.bf16.mxu0 %v3446
        %4984 = vmatpush1.bf16.msra.mxu0 %v3445
        %4985 = vmatprep.subr.bf16.mxu0 %v3454
        %4986 = vmatpush1.bf16.msra.mxu0 %v3453
        %4987 = vmatprep.subr.bf16.mxu0 %v3462
        %4988 = vmatpush1.bf16.msra.mxu0 %v3461
        %4989 = vmatprep.subr.bf16.mxu0 %v3470
        %4990 = vmatpush1.bf16.msra.mxu0 %v3469
        %4991 = vmatprep.subr.bf16.mxu0 %v3478
        %4992 = vmatpush1.bf16.msra.mxu0 %v3477
        %4993 = vmatprep.subr.bf16.mxu0 %v3486
        %4994 = vmatpush1.bf16.msra.mxu0 %v3485
        %4995 = vmatprep.subr.bf16.mxu0 %v3494
        %4996 = vmatpush1.bf16.msra.mxu0 %v3493
        %4997 = vmatprep.subr.bf16.mxu0 %v3502
        %4998 = vmatpush1.bf16.msra.mxu0 %v3501
        %4999 = vmatprep.subr.bf16.mxu0 %v3510
        %5000 = vmatpush1.bf16.msra.mxu0 %v3509
        %5001 = vmatprep.subr.bf16.mxu0 %v3518
        %5002 = vmatpush1.bf16.msra.mxu0 %v3517
        %5003 = vmatprep.mubr.bf16.mxu0 %v988
        %5004 = vmatmul.mubr.bf16.gmra.mrb[0].mxu0 %v987
        %v5005 = vpop.f32.mrb[0].mxu0
        %v5006 = vadd.f32 %v4953, %v5005
        %v5007 = vpop.f32.mrb[0].mxu0
        %v5008 = vadd.f32 %v4955, %v5007
        %v5009 = vpop.f32.mrb[0].mxu0
        %v5010 = vadd.f32 %v4957, %v5009
        %v5011 = vpop.f32.mrb[0].mxu0
        %v5012 = vadd.f32 %v4959, %v5011
        %5013 = vmatprep.mubr.bf16.mxu0 %v999
        %5014 = vmatmul.mubr.bf16.gmra.mrb[0].mxu0 %v998
        %v5015 = vpop.f32.mrb[0].mxu0
        %v5016 = vadd.f32 %v4963, %v5015
        %v5017 = vpop.f32.mrb[0].mxu0
        %v5018 = vadd.f32 %v4965, %v5017
        %v5019 = vpop.f32.mrb[0].mxu0
        %v5020 = vadd.f32 %v4967, %v5019
        %v5021 = vpop.f32.mrb[0].mxu0
        %v5022 = vadd.f32 %v4969, %v5021
        %5023 = vdwg.mxu0
        %5024 = vmatprep.subr.bf16.mxu0 %v3526
        %5025 = vmatpush1.bf16.msra.mxu0 %v3525
        %5026 = vmatprep.subr.bf16.mxu0 %v3534
        %5027 = vmatpush1.bf16.msra.mxu0 %v3533
        %5028 = vmatprep.subr.bf16.mxu0 %v3542
        %5029 = vmatpush1.bf16.msra.mxu0 %v3541
        %5030 = vmatprep.subr.bf16.mxu0 %v3550
        %5031 = vmatpush1.bf16.msra.mxu0 %v3549
        %5032 = vmatprep.subr.bf16.mxu0 %v3558
        %5033 = vmatpush1.bf16.msra.mxu0 %v3557
        %5034 = vmatprep.subr.bf16.mxu0 %v3566
        %5035 = vmatpush1.bf16.msra.mxu0 %v3565
        %5036 = vmatprep.subr.bf16.mxu0 %v3574
        %5037 = vmatpush1.bf16.msra.mxu0 %v3573
        %5038 = vmatprep.subr.bf16.mxu0 %v3582
        %5039 = vmatpush1.bf16.msra.mxu0 %v3581
        %5040 = vmatprep.subr.bf16.mxu0 %v3590
        %5041 = vmatpush1.bf16.msra.mxu0 %v3589
        %5042 = vmatprep.subr.bf16.mxu0 %v3598
        %5043 = vmatpush1.bf16.msra.mxu0 %v3597
        %5044 = vmatprep.subr.bf16.mxu0 %v3606
        %5045 = vmatpush1.bf16.msra.mxu0 %v3605
        %5046 = vmatprep.subr.bf16.mxu0 %v3614
        %5047 = vmatpush1.bf16.msra.mxu0 %v3613
        %5048 = vmatprep.subr.bf16.mxu0 %v3622
        %5049 = vmatpush1.bf16.msra.mxu0 %v3621
        %5050 = vmatprep.subr.bf16.mxu0 %v3630
        %5051 = vmatpush1.bf16.msra.mxu0 %v3629
        %5052 = vmatprep.subr.bf16.mxu0 %v3638
        %5053 = vmatpush1.bf16.msra.mxu0 %v3637
        %5054 = vmatprep.subr.bf16.mxu0 %v3646
        %5055 = vmatpush1.bf16.msra.mxu0 %v3645
        %5056 = vmatprep.mubr.bf16.mxu0 %v990
        %5057 = vmatmul.mubr.bf16.gmra.mrb[0].mxu0 %v989
        %v5058 = vpop.f32.mrb[0].mxu0
        %v5059 = vadd.f32 %v5006, %v5058
        %v5060 = vpop.f32.mrb[0].mxu0
        %v5061 = vadd.f32 %v5008, %v5060
        %v5062 = vpop.f32.mrb[0].mxu0
        %v5063 = vadd.f32 %v5010, %v5062
        %v5064 = vpop.f32.mrb[0].mxu0
        %v5065 = vadd.f32 %v5012, %v5064
        %5066 = vmatprep.mubr.bf16.mxu0 %v1001
        %5067 = vmatmul.mubr.bf16.gmra.mrb[0].mxu0 %v1000
        %v5068 = vpop.f32.mrb[0].mxu0
        %v5069 = vadd.f32 %v5016, %v5068
        %v5070 = vpop.f32.mrb[0].mxu0
        %v5071 = vadd.f32 %v5018, %v5070
        %v5072 = vpop.f32.mrb[0].mxu0
        %v5073 = vadd.f32 %v5020, %v5072
        %v5074 = vpop.f32.mrb[0].mxu0
        %v5075 = vadd.f32 %v5022, %v5074
        %5076 = vdwg.mxu0
        %5077 = vmatprep.subr.bf16.mxu0 %v3654
        %5078 = vmatpush1.bf16.msra.mxu0 %v3653
        %5079 = vmatprep.subr.bf16.mxu0 %v3662
        %5080 = vmatpush1.bf16.msra.mxu0 %v3661
        %5081 = vmatprep.subr.bf16.mxu0 %v3670
        %5082 = vmatpush1.bf16.msra.mxu0 %v3669
        %5083 = vmatprep.subr.bf16.mxu0 %v3678
        %5084 = vmatpush1.bf16.msra.mxu0 %v3677
        %5085 = vmatprep.subr.bf16.mxu0 %v3686
        %5086 = vmatpush1.bf16.msra.mxu0 %v3685
        %5087 = vmatprep.subr.bf16.mxu0 %v3694
        %5088 = vmatpush1.bf16.msra.mxu0 %v3693
        %5089 = vmatprep.subr.bf16.mxu0 %v3702
        %5090 = vmatpush1.bf16.msra.mxu0 %v3701
        %5091 = vmatprep.subr.bf16.mxu0 %v3710
        %5092 = vmatpush1.bf16.msra.mxu0 %v3709
        %5093 = vmatprep.subr.bf16.mxu0 %v3718
        %5094 = vmatpush1.bf16.msra.mxu0 %v3717
        %5095 = vmatprep.subr.bf16.mxu0 %v3726
        %5096 = vmatpush1.bf16.msra.mxu0 %v3725
        %5097 = vmatprep.subr.bf16.mxu0 %v3734
        %5098 = vmatpush1.bf16.msra.mxu0 %v3733
        %5099 = vmatprep.subr.bf16.mxu0 %v3742
        %5100 = vmatpush1.bf16.msra.mxu0 %v3741
        %5101 = vmatprep.subr.bf16.mxu0 %v3750
        %5102 = vmatpush1.bf16.msra.mxu0 %v3749
        %5103 = vmatprep.subr.bf16.mxu0 %v3758
        %5104 = vmatpush1.bf16.msra.mxu0 %v3757
        %5105 = vmatprep.subr.bf16.mxu0 %v3766
        %5106 = vmatpush1.bf16.msra.mxu0 %v3765
        %5107 = vmatprep.subr.bf16.mxu0 %v3774
        %5108 = vmatpush1.bf16.msra.mxu0 %v3773
        %5109 = vmatprep.mubr.bf16.mxu0 %v992
        %5110 = vmatmul.mubr.bf16.gmra.mrb[0].mxu0 %v991
        %v5111 = vpop.f32.mrb[0].mxu0
        %v5112 = vadd.f32 %v5059, %v5111
        %v5113 = vpop.f32.mrb[0].mxu0
        %v5114 = vadd.f32 %v5061, %v5113
        %v5115 = vpop.f32.mrb[0].mxu0
        %v5116 = vadd.f32 %v5063, %v5115
        %v5117 = vpop.f32.mrb[0].mxu0
        %v5118 = vadd.f32 %v5065, %v5117
        %5119 = vmatprep.mubr.bf16.mxu0 %v1003
        %5120 = vmatmul.mubr.bf16.gmra.mrb[0].mxu0 %v1002
        %v5121 = vpop.f32.mrb[0].mxu0
        %v5122 = vadd.f32 %v5069, %v5121
        %v5123 = vpop.f32.mrb[0].mxu0
        %v5124 = vadd.f32 %v5071, %v5123
        %v5125 = vpop.f32.mrb[0].mxu0
        %v5126 = vadd.f32 %v5073, %v5125
        %v5127 = vpop.f32.mrb[0].mxu0
        %v5128 = vadd.f32 %v5075, %v5127
        %5129 = vdwg.mxu0
        %5130 = vmatprep.subr.bf16.mxu0 %v3782
        %5131 = vmatpush1.bf16.msra.mxu0 %v3781
        %5132 = vmatprep.subr.bf16.mxu0 %v3790
        %5133 = vmatpush1.bf16.msra.mxu0 %v3789
        %5134 = vmatprep.subr.bf16.mxu0 %v3798
        %5135 = vmatpush1.bf16.msra.mxu0 %v3797
        %5136 = vmatprep.subr.bf16.mxu0 %v3806
        %5137 = vmatpush1.bf16.msra.mxu0 %v3805
        %5138 = vmatprep.subr.bf16.mxu0 %v3814
        %5139 = vmatpush1.bf16.msra.mxu0 %v3813
        %5140 = vmatprep.subr.bf16.mxu0 %v3822
        %5141 = vmatpush1.bf16.msra.mxu0 %v3821
        %5142 = vmatprep.subr.bf16.mxu0 %v3830
        %5143 = vmatpush1.bf16.msra.mxu0 %v3829
        %5144 = vmatprep.subr.bf16.mxu0 %v3838
        %5145 = vmatpush1.bf16.msra.mxu0 %v3837
        %5146 = vmatprep.subr.bf16.mxu0 0
        %5147 = vmatpush1.bf16.msra.mxu0 0
        %5148 = vmatprep.subr.bf16.mxu0 0
        %5149 = vmatpush1.bf16.msra.mxu0 0
        %5150 = vmatprep.subr.bf16.mxu0 0
        %5151 = vmatpush1.bf16.msra.mxu0 0
        %5152 = vmatprep.subr.bf16.mxu0 0
        %5153 = vmatpush1.bf16.msra.mxu0 0
        %5154 = vmatprep.subr.bf16.mxu0 0
        %5155 = vmatpush1.bf16.msra.mxu0 0
        %5156 = vmatprep.subr.bf16.mxu0 0
        %5157 = vmatpush1.bf16.msra.mxu0 0
        %5158 = vmatprep.subr.bf16.mxu0 0
        %5159 = vmatpush1.bf16.msra.mxu0 0
        %5160 = vmatprep.subr.bf16.mxu0 0
        %5161 = vmatpush1.bf16.msra.mxu0 0
        %5162 = vmatprep.mubr.bf16.mxu0 0
        %5163 = vmatmul.mubr.bf16.gmra.mrb[0].mxu0 %v993
        %v5164 = vpop.f32.mrb[0].mxu0
        %v5165 = vadd.f32 %v5112, %v5164
        %v5166 = vpop.f32.mrb[0].mxu0
        %v5167 = vadd.f32 %v5114, %v5166
        %v5168 = vpop.f32.mrb[0].mxu0
        %v5169 = vadd.f32 %v5116, %v5168
        %v5170 = vpop.f32.mrb[0].mxu0
        %v5171 = vadd.f32 %v5118, %v5170
        %5172 = vmatprep.mubr.bf16.mxu0 0
        %5173 = vmatmul.mubr.bf16.gmra.mrb[0].mxu0 %v1004
        %v5174 = vpop.f32.mrb[0].mxu0
        %v5175 = vadd.f32 %v5122, %v5174
        %v5176 = vpop.f32.mrb[0].mxu0
        %v5177 = vadd.f32 %v5124, %v5176
        %v5178 = vpop.f32.mrb[0].mxu0
        %v5179 = vadd.f32 %v5126, %v5178
        %v5180 = vpop.f32.mrb[0].mxu0
        %v5181 = vadd.f32 %v5128, %v5180
        %5182 = vdwg.mxu0
        %5183 = vmatprep.subr.bf16.mxu0 %v3144
        %5184 = vmatpush1.bf16.msra.mxu0 %v3143
        %5185 = vmatprep.subr.bf16.mxu0 %v3152
        %5186 = vmatpush1.bf16.msra.mxu0 %v3151
        %5187 = vmatprep.subr.bf16.mxu0 %v3160
        %5188 = vmatpush1.bf16.msra.mxu0 %v3159
        %5189 = vmatprep.subr.bf16.mxu0 %v3168
        %5190 = vmatpush1.bf16.msra.mxu0 %v3167
        %5191 = vmatprep.subr.bf16.mxu0 %v3176
        %5192 = vmatpush1.bf16.msra.mxu0 %v3175
        %5193 = vmatprep.subr.bf16.mxu0 %v3184
        %5194 = vmatpush1.bf16.msra.mxu0 %v3183
        %5195 = vmatprep.subr.bf16.mxu0 %v3192
        %5196 = vmatpush1.bf16.msra.mxu0 %v3191
        %5197 = vmatprep.subr.bf16.mxu0 %v3200
        %5198 = vmatpush1.bf16.msra.mxu0 %v3199
        %5199 = vmatprep.subr.bf16.mxu0 %v3208
        %5200 = vmatpush1.bf16.msra.mxu0 %v3207
        %5201 = vmatprep.subr.bf16.mxu0 %v3216
        %5202 = vmatpush1.bf16.msra.mxu0 %v3215
        %5203 = vmatprep.subr.bf16.mxu0 %v3224
        %5204 = vmatpush1.bf16.msra.mxu0 %v3223
        %5205 = vmatprep.subr.bf16.mxu0 %v3232
        %5206 = vmatpush1.bf16.msra.mxu0 %v3231
        %5207 = vmatprep.subr.bf16.mxu0 %v3240
        %5208 = vmatpush1.bf16.msra.mxu0 %v3239
        %5209 = vmatprep.subr.bf16.mxu0 %v3248
        %5210 = vmatpush1.bf16.msra.mxu0 %v3247
        %5211 = vmatprep.subr.bf16.mxu0 %v3256
        %5212 = vmatpush1.bf16.msra.mxu0 %v3255
        %5213 = vmatprep.subr.bf16.mxu0 %v3264
        %5214 = vmatpush1.bf16.msra.mxu0 %v3263
        %5215 = vmatprep.mubr.bf16.mxu0 %v984
        %5216 = vmatmul.mubr.bf16.gmra.mrb[0].mxu0 %v983
        %v5217 = vpop.f32.mrb[0].mxu0
        %v5218 = vadd.f32 0.0, %v5217
        %v5219 = vpop.f32.mrb[0].mxu0
        %v5220 = vadd.f32 0.0, %v5219
        %v5221 = vpop.f32.mrb[0].mxu0
        %v5222 = vadd.f32 0.0, %v5221
        %v5223 = vpop.f32.mrb[0].mxu0
        %v5224 = vadd.f32 0.0, %v5223
        %5225 = vmatprep.mubr.bf16.mxu0 %v995
        %5226 = vmatmul.mubr.bf16.gmra.mrb[0].mxu0 %v994
        %v5227 = vpop.f32.mrb[0].mxu0
        %v5228 = vadd.f32 0.0, %v5227
        %v5229 = vpop.f32.mrb[0].mxu0
        %v5230 = vadd.f32 0.0, %v5229
        %v5231 = vpop.f32.mrb[0].mxu0
        %v5232 = vadd.f32 0.0, %v5231
        %v5233 = vpop.f32.mrb[0].mxu0
        %v5234 = vadd.f32 0.0, %v5233
        %5235 = vdwg.mxu0
        %5236 = vmatprep.subr.bf16.mxu0 %v3272
        %5237 = vmatpush1.bf16.msra.mxu0 %v3271
        %5238 = vmatprep.subr.bf16.mxu0 %v3280
        %5239 = vmatpush1.bf16.msra.mxu0 %v3279
        %5240 = vmatprep.subr.bf16.mxu0 %v3288
        %5241 = vmatpush1.bf16.msra.mxu0 %v3287
        %5242 = vmatprep.subr.bf16.mxu0 %v3296
        %5243 = vmatpush1.bf16.msra.mxu0 %v3295
        %5244 = vmatprep.subr.bf16.mxu0 %v3304
        %5245 = vmatpush1.bf16.msra.mxu0 %v3303
        %5246 = vmatprep.subr.bf16.mxu0 %v3312
        %5247 = vmatpush1.bf16.msra.mxu0 %v3311
        %5248 = vmatprep.subr.bf16.mxu0 %v3320
        %5249 = vmatpush1.bf16.msra.mxu0 %v3319
        %5250 = vmatprep.subr.bf16.mxu0 %v3328
        %5251 = vmatpush1.bf16.msra.mxu0 %v3327
        %5252 = vmatprep.subr.bf16.mxu0 %v3336
        %5253 = vmatpush1.bf16.msra.mxu0 %v3335
        %5254 = vmatprep.subr.bf16.mxu0 %v3344
        %5255 = vmatpush1.bf16.msra.mxu0 %v3343
        %5256 = vmatprep.subr.bf16.mxu0 %v3352
        %5257 = vmatpush1.bf16.msra.mxu0 %v3351
        %5258 = vmatprep.subr.bf16.mxu0 %v3360
        %5259 = vmatpush1.bf16.msra.mxu0 %v3359
        %5260 = vmatprep.subr.bf16.mxu0 %v3368
        %5261 = vmatpush1.bf16.msra.mxu0 %v3367
        %5262 = vmatprep.subr.bf16.mxu0 %v3376
        %5263 = vmatpush1.bf16.msra.mxu0 %v3375
        %5264 = vmatprep.subr.bf16.mxu0 %v3384
        %5265 = vmatpush1.bf16.msra.mxu0 %v3383
        %5266 = vmatprep.subr.bf16.mxu0 %v3392
        %5267 = vmatpush1.bf16.msra.mxu0 %v3391
        %5268 = vmatprep.mubr.bf16.mxu0 %v986
        %5269 = vmatmul.mubr.bf16.gmra.mrb[0].mxu0 %v985
        %v5270 = vpop.f32.mrb[0].mxu0
        %v5271 = vadd.f32 %v5218, %v5270
        %v5272 = vpop.f32.mrb[0].mxu0
        %v5273 = vadd.f32 %v5220, %v5272
        %v5274 = vpop.f32.mrb[0].mxu0
        %v5275 = vadd.f32 %v5222, %v5274
        %v5276 = vpop.f32.mrb[0].mxu0
        %v5277 = vadd.f32 %v5224, %v5276
        %5278 = vmatprep.mubr.bf16.mxu0 %v997
        %5279 = vmatmul.mubr.bf16.gmra.mrb[0].mxu0 %v996
        %v5280 = vpop.f32.mrb[0].mxu0
        %v5281 = vadd.f32 %v5228, %v5280
        %v5282 = vpop.f32.mrb[0].mxu0
        %v5283 = vadd.f32 %v5230, %v5282
        %v5284 = vpop.f32.mrb[0].mxu0
        %v5285 = vadd.f32 %v5232, %v5284
        %v5286 = vpop.f32.mrb[0].mxu0
        %v5287 = vadd.f32 %v5234, %v5286
        %5288 = vdwg.mxu0
        %5289 = vmatprep.subr.bf16.mxu0 %v3400
        %5290 = vmatpush1.bf16.msra.mxu0 %v3399
        %5291 = vmatprep.subr.bf16.mxu0 %v3408
        %5292 = vmatpush1.bf16.msra.mxu0 %v3407
        %5293 = vmatprep.subr.bf16.mxu0 %v3416
        %5294 = vmatpush1.bf16.msra.mxu0 %v3415
        %5295 = vmatprep.subr.bf16.mxu0 %v3424
        %5296 = vmatpush1.bf16.msra.mxu0 %v3423
        %5297 = vmatprep.subr.bf16.mxu0 %v3432
        %5298 = vmatpush1.bf16.msra.mxu0 %v3431
        %5299 = vmatprep.subr.bf16.mxu0 %v3440
        %5300 = vmatpush1.bf16.msra.mxu0 %v3439
        %5301 = vmatprep.subr.bf16.mxu0 %v3448
        %5302 = vmatpush1.bf16.msra.mxu0 %v3447
        %5303 = vmatprep.subr.bf16.mxu0 %v3456
        %5304 = vmatpush1.bf16.msra.mxu0 %v3455
        %5305 = vmatprep.subr.bf16.mxu0 %v3464
        %5306 = vmatpush1.bf16.msra.mxu0 %v3463
        %5307 = vmatprep.subr.bf16.mxu0 %v3472
        %5308 = vmatpush1.bf16.msra.mxu0 %v3471
        %5309 = vmatprep.subr.bf16.mxu0 %v3480
        %5310 = vmatpush1.bf16.msra.mxu0 %v3479
        %5311 = vmatprep.subr.bf16.mxu0 %v3488
        %5312 = vmatpush1.bf16.msra.mxu0 %v3487
        %5313 = vmatprep.subr.bf16.mxu0 %v3496
        %5314 = vmatpush1.bf16.msra.mxu0 %v3495
        %5315 = vmatprep.subr.bf16.mxu0 %v3504
        %5316 = vmatpush1.bf16.msra.mxu0 %v3503
        %5317 = vmatprep.subr.bf16.mxu0 %v3512
        %5318 = vmatpush1.bf16.msra.mxu0 %v3511
        %5319 = vmatprep.subr.bf16.mxu0 %v3520
        %5320 = vmatpush1.bf16.msra.mxu0 %v3519
        %5321 = vmatprep.mubr.bf16.mxu0 %v988
        %5322 = vmatmul.mubr.bf16.gmra.mrb[0].mxu0 %v987
        %v5323 = vpop.f32.mrb[0].mxu0
        %v5324 = vadd.f32 %v5271, %v5323
        %v5325 = vpop.f32.mrb[0].mxu0
        %v5326 = vadd.f32 %v5273, %v5325
        %v5327 = vpop.f32.mrb[0].mxu0
        %v5328 = vadd.f32 %v5275, %v5327
        %v5329 = vpop.f32.mrb[0].mxu0
        %v5330 = vadd.f32 %v5277, %v5329
        %5331 = vmatprep.mubr.bf16.mxu0 %v999
        %5332 = vmatmul.mubr.bf16.gmra.mrb[0].mxu0 %v998
        %v5333 = vpop.f32.mrb[0].mxu0
        %v5334 = vadd.f32 %v5281, %v5333
        %v5335 = vpop.f32.mrb[0].mxu0
        %v5336 = vadd.f32 %v5283, %v5335
        %v5337 = vpop.f32.mrb[0].mxu0
        %v5338 = vadd.f32 %v5285, %v5337
        %v5339 = vpop.f32.mrb[0].mxu0
        %v5340 = vadd.f32 %v5287, %v5339
        %5341 = vdwg.mxu0
        %5342 = vmatprep.subr.bf16.mxu0 %v3528
        %5343 = vmatpush1.bf16.msra.mxu0 %v3527
        %5344 = vmatprep.subr.bf16.mxu0 %v3536
        %5345 = vmatpush1.bf16.msra.mxu0 %v3535
        %5346 = vmatprep.subr.bf16.mxu0 %v3544
        %5347 = vmatpush1.bf16.msra.mxu0 %v3543
        %5348 = vmatprep.subr.bf16.mxu0 %v3552
        %5349 = vmatpush1.bf16.msra.mxu0 %v3551
        %5350 = vmatprep.subr.bf16.mxu0 %v3560
        %5351 = vmatpush1.bf16.msra.mxu0 %v3559
        %5352 = vmatprep.subr.bf16.mxu0 %v3568
        %5353 = vmatpush1.bf16.msra.mxu0 %v3567
        %5354 = vmatprep.subr.bf16.mxu0 %v3576
        %5355 = vmatpush1.bf16.msra.mxu0 %v3575
        %5356 = vmatprep.subr.bf16.mxu0 %v3584
        %5357 = vmatpush1.bf16.msra.mxu0 %v3583
        %5358 = vmatprep.subr.bf16.mxu0 %v3592
        %5359 = vmatpush1.bf16.msra.mxu0 %v3591
        %5360 = vmatprep.subr.bf16.mxu0 %v3600
        %5361 = vmatpush1.bf16.msra.mxu0 %v3599
        %5362 = vmatprep.subr.bf16.mxu0 %v3608
        %5363 = vmatpush1.bf16.msra.mxu0 %v3607
        %5364 = vmatprep.subr.bf16.mxu0 %v3616
        %5365 = vmatpush1.bf16.msra.mxu0 %v3615
        %5366 = vmatprep.subr.bf16.mxu0 %v3624
        %5367 = vmatpush1.bf16.msra.mxu0 %v3623
        %5368 = vmatprep.subr.bf16.mxu0 %v3632
        %5369 = vmatpush1.bf16.msra.mxu0 %v3631
        %5370 = vmatprep.subr.bf16.mxu0 %v3640
        %5371 = vmatpush1.bf16.msra.mxu0 %v3639
        %5372 = vmatprep.subr.bf16.mxu0 %v3648
        %5373 = vmatpush1.bf16.msra.mxu0 %v3647
        %5374 = vmatprep.mubr.bf16.mxu0 %v990
        %5375 = vmatmul.mubr.bf16.gmra.mrb[0].mxu0 %v989
        %v5376 = vpop.f32.mrb[0].mxu0
        %v5377 = vadd.f32 %v5324, %v5376
        %v5378 = vpop.f32.mrb[0].mxu0
        %v5379 = vadd.f32 %v5326, %v5378
        %v5380 = vpop.f32.mrb[0].mxu0
        %v5381 = vadd.f32 %v5328, %v5380
        %v5382 = vpop.f32.mrb[0].mxu0
        %v5383 = vadd.f32 %v5330, %v5382
        %5384 = vmatprep.mubr.bf16.mxu0 %v1001
        %5385 = vmatmul.mubr.bf16.gmra.mrb[0].mxu0 %v1000
        %v5386 = vpop.f32.mrb[0].mxu0
        %v5387 = vadd.f32 %v5334, %v5386
        %v5388 = vpop.f32.mrb[0].mxu0
        %v5389 = vadd.f32 %v5336, %v5388
        %v5390 = vpop.f32.mrb[0].mxu0
        %v5391 = vadd.f32 %v5338, %v5390
        %v5392 = vpop.f32.mrb[0].mxu0
        %v5393 = vadd.f32 %v5340, %v5392
        %5394 = vdwg.mxu0
        %5395 = vmatprep.subr.bf16.mxu0 %v3656
        %5396 = vmatpush1.bf16.msra.mxu0 %v3655
        %5397 = vmatprep.subr.bf16.mxu0 %v3664
        %5398 = vmatpush1.bf16.msra.mxu0 %v3663
        %5399 = vmatprep.subr.bf16.mxu0 %v3672
        %5400 = vmatpush1.bf16.msra.mxu0 %v3671
        %5401 = vmatprep.subr.bf16.mxu0 %v3680
        %5402 = vmatpush1.bf16.msra.mxu0 %v3679
        %5403 = vmatprep.subr.bf16.mxu0 %v3688
        %5404 = vmatpush1.bf16.msra.mxu0 %v3687
        %5405 = vmatprep.subr.bf16.mxu0 %v3696
        %5406 = vmatpush1.bf16.msra.mxu0 %v3695
        %5407 = vmatprep.subr.bf16.mxu0 %v3704
        %5408 = vmatpush1.bf16.msra.mxu0 %v3703
        %5409 = vmatprep.subr.bf16.mxu0 %v3712
        %5410 = vmatpush1.bf16.msra.mxu0 %v3711
        %5411 = vmatprep.subr.bf16.mxu0 %v3720
        %5412 = vmatpush1.bf16.msra.mxu0 %v3719
        %5413 = vmatprep.subr.bf16.mxu0 %v3728
        %5414 = vmatpush1.bf16.msra.mxu0 %v3727
        %5415 = vmatprep.subr.bf16.mxu0 %v3736
        %5416 = vmatpush1.bf16.msra.mxu0 %v3735
        %5417 = vmatprep.subr.bf16.mxu0 %v3744
        %5418 = vmatpush1.bf16.msra.mxu0 %v3743
        %5419 = vmatprep.subr.bf16.mxu0 %v3752
        %5420 = vmatpush1.bf16.msra.mxu0 %v3751
        %5421 = vmatprep.subr.bf16.mxu0 %v3760
        %5422 = vmatpush1.bf16.msra.mxu0 %v3759
        %5423 = vmatprep.subr.bf16.mxu0 %v3768
        %5424 = vmatpush1.bf16.msra.mxu0 %v3767
        %5425 = vmatprep.subr.bf16.mxu0 %v3776
        %5426 = vmatpush1.bf16.msra.mxu0 %v3775
        %5427 = vmatprep.mubr.bf16.mxu0 %v992
        %5428 = vmatmul.mubr.bf16.gmra.mrb[0].mxu0 %v991
        %v5429 = vpop.f32.mrb[0].mxu0
        %v5430 = vadd.f32 %v5377, %v5429
        %v5431 = vpop.f32.mrb[0].mxu0
        %v5432 = vadd.f32 %v5379, %v5431
        %v5433 = vpop.f32.mrb[0].mxu0
        %v5434 = vadd.f32 %v5381, %v5433
        %v5435 = vpop.f32.mrb[0].mxu0
        %v5436 = vadd.f32 %v5383, %v5435
        %5437 = vmatprep.mubr.bf16.mxu0 %v1003
        %5438 = vmatmul.mubr.bf16.gmra.mrb[0].mxu0 %v1002
        %v5439 = vpop.f32.mrb[0].mxu0
        %v5440 = vadd.f32 %v5387, %v5439
        %v5441 = vpop.f32.mrb[0].mxu0
        %v5442 = vadd.f32 %v5389, %v5441
        %v5443 = vpop.f32.mrb[0].mxu0
        %v5444 = vadd.f32 %v5391, %v5443
        %v5445 = vpop.f32.mrb[0].mxu0
        %v5446 = vadd.f32 %v5393, %v5445
        %5447 = vdwg.mxu0
        %5448 = vmatprep.subr.bf16.mxu0 %v3784
        %5449 = vmatpush1.bf16.msra.mxu0 %v3783
        %5450 = vmatprep.subr.bf16.mxu0 %v3792
        %5451 = vmatpush1.bf16.msra.mxu0 %v3791
        %5452 = vmatprep.subr.bf16.mxu0 %v3800
        %5453 = vmatpush1.bf16.msra.mxu0 %v3799
        %5454 = vmatprep.subr.bf16.mxu0 %v3808
        %5455 = vmatpush1.bf16.msra.mxu0 %v3807
        %5456 = vmatprep.subr.bf16.mxu0 %v3816
        %5457 = vmatpush1.bf16.msra.mxu0 %v3815
        %5458 = vmatprep.subr.bf16.mxu0 %v3824
        %5459 = vmatpush1.bf16.msra.mxu0 %v3823
        %5460 = vmatprep.subr.bf16.mxu0 %v3832
        %5461 = vmatpush1.bf16.msra.mxu0 %v3831
        %5462 = vmatprep.subr.bf16.mxu0 %v3840
        %5463 = vmatpush1.bf16.msra.mxu0 %v3839
        %5464 = vmatprep.subr.bf16.mxu0 0
        %5465 = vmatpush1.bf16.msra.mxu0 0
        %5466 = vmatprep.subr.bf16.mxu0 0
        %5467 = vmatpush1.bf16.msra.mxu0 0
        %5468 = vmatprep.subr.bf16.mxu0 0
        %5469 = vmatpush1.bf16.msra.mxu0 0
        %5470 = vmatprep.subr.bf16.mxu0 0
        %5471 = vmatpush1.bf16.msra.mxu0 0
        %5472 = vmatprep.subr.bf16.mxu0 0
        %5473 = vmatpush1.bf16.msra.mxu0 0
        %5474 = vmatprep.subr.bf16.mxu0 0
        %5475 = vmatpush1.bf16.msra.mxu0 0
        %5476 = vmatprep.subr.bf16.mxu0 0
        %5477 = vmatpush1.bf16.msra.mxu0 0
        %5478 = vmatprep.subr.bf16.mxu0 0
        %5479 = vmatpush1.bf16.msra.mxu0 0
        %5480 = vmatprep.mubr.bf16.mxu0 0
        %5481 = vmatmul.mubr.bf16.gmra.mrb[0].mxu0 %v993
        %v5482 = vpop.f32.mrb[0].mxu0
        %v5483 = vadd.f32 %v5430, %v5482
        %v5484 = vpop.f32.mrb[0].mxu0
        %v5485 = vadd.f32 %v5432, %v5484
        %v5486 = vpop.f32.mrb[0].mxu0
        %v5487 = vadd.f32 %v5434, %v5486
        %v5488 = vpop.f32.mrb[0].mxu0
        %v5489 = vadd.f32 %v5436, %v5488
        %5490 = vmatprep.mubr.bf16.mxu0 0
        %5491 = vmatmul.mubr.bf16.gmra.mrb[0].mxu0 %v1004
        %v5492 = vpop.f32.mrb[0].mxu0
        %v5493 = vadd.f32 %v5440, %v5492
        %v5494 = vpop.f32.mrb[0].mxu0
        %v5495 = vadd.f32 %v5442, %v5494
        %v5496 = vpop.f32.mrb[0].mxu0
        %v5497 = vadd.f32 %v5444, %v5496
        %v5498 = vpop.f32.mrb[0].mxu0
        %v5499 = vadd.f32 %v5446, %v5498
        %5500 = vdwg.mxu0
        %5501 = vmatprep.subr.bf16.mxu0 %v3146
        %5502 = vmatpush1.bf16.msra.mxu0 %v3145
        %5503 = vmatprep.subr.bf16.mxu0 %v3154
        %5504 = vmatpush1.bf16.msra.mxu0 %v3153
        %5505 = vmatprep.subr.bf16.mxu0 %v3162
        %5506 = vmatpush1.bf16.msra.mxu0 %v3161
        %5507 = vmatprep.subr.bf16.mxu0 %v3170
        %5508 = vmatpush1.bf16.msra.mxu0 %v3169
        %5509 = vmatprep.subr.bf16.mxu0 %v3178
        %5510 = vmatpush1.bf16.msra.mxu0 %v3177
        %5511 = vmatprep.subr.bf16.mxu0 %v3186
        %5512 = vmatpush1.bf16.msra.mxu0 %v3185
        %5513 = vmatprep.subr.bf16.mxu0 %v3194
        %5514 = vmatpush1.bf16.msra.mxu0 %v3193
        %5515 = vmatprep.subr.bf16.mxu0 %v3202
        %5516 = vmatpush1.bf16.msra.mxu0 %v3201
        %5517 = vmatprep.subr.bf16.mxu0 %v3210
        %5518 = vmatpush1.bf16.msra.mxu0 %v3209
        %5519 = vmatprep.subr.bf16.mxu0 %v3218
        %5520 = vmatpush1.bf16.msra.mxu0 %v3217
        %5521 = vmatprep.subr.bf16.mxu0 %v3226
        %5522 = vmatpush1.bf16.msra.mxu0 %v3225
        %5523 = vmatprep.subr.bf16.mxu0 %v3234
        %5524 = vmatpush1.bf16.msra.mxu0 %v3233
        %5525 = vmatprep.subr.bf16.mxu0 %v3242
        %5526 = vmatpush1.bf16.msra.mxu0 %v3241
        %5527 = vmatprep.subr.bf16.mxu0 %v3250
        %5528 = vmatpush1.bf16.msra.mxu0 %v3249
        %5529 = vmatprep.subr.bf16.mxu0 %v3258
        %5530 = vmatpush1.bf16.msra.mxu0 %v3257
        %5531 = vmatprep.subr.bf16.mxu0 %v3266
        %5532 = vmatpush1.bf16.msra.mxu0 %v3265
        %5533 = vmatprep.mubr.bf16.mxu0 %v984
        %5534 = vmatmul.mubr.bf16.gmra.mrb[0].mxu0 %v983
        %v5535 = vpop.f32.mrb[0].mxu0
        %v5536 = vadd.f32 0.0, %v5535
        %v5537 = vpop.f32.mrb[0].mxu0
        %v5538 = vadd.f32 0.0, %v5537
        %v5539 = vpop.f32.mrb[0].mxu0
        %v5540 = vadd.f32 0.0, %v5539
        %v5541 = vpop.f32.mrb[0].mxu0
        %v5542 = vadd.f32 0.0, %v5541
        %5543 = vmatprep.mubr.bf16.mxu0 %v995
        %5544 = vmatmul.mubr.bf16.gmra.mrb[0].mxu0 %v994
        %v5545 = vpop.f32.mrb[0].mxu0
        %v5546 = vadd.f32 0.0, %v5545
        %v5547 = vpop.f32.mrb[0].mxu0
        %v5548 = vadd.f32 0.0, %v5547
        %v5549 = vpop.f32.mrb[0].mxu0
        %v5550 = vadd.f32 0.0, %v5549
        %v5551 = vpop.f32.mrb[0].mxu0
        %v5552 = vadd.f32 0.0, %v5551
        %5553 = vdwg.mxu0
        %5554 = vmatprep.subr.bf16.mxu0 %v3274
        %5555 = vmatpush1.bf16.msra.mxu0 %v3273
        %5556 = vmatprep.subr.bf16.mxu0 %v3282
        %5557 = vmatpush1.bf16.msra.mxu0 %v3281
        %5558 = vmatprep.subr.bf16.mxu0 %v3290
        %5559 = vmatpush1.bf16.msra.mxu0 %v3289
        %5560 = vmatprep.subr.bf16.mxu0 %v3298
        %5561 = vmatpush1.bf16.msra.mxu0 %v3297
        %5562 = vmatprep.subr.bf16.mxu0 %v3306
        %5563 = vmatpush1.bf16.msra.mxu0 %v3305
        %5564 = vmatprep.subr.bf16.mxu0 %v3314
        %5565 = vmatpush1.bf16.msra.mxu0 %v3313
        %5566 = vmatprep.subr.bf16.mxu0 %v3322
        %5567 = vmatpush1.bf16.msra.mxu0 %v3321
        %5568 = vmatprep.subr.bf16.mxu0 %v3330
        %5569 = vmatpush1.bf16.msra.mxu0 %v3329
        %5570 = vmatprep.subr.bf16.mxu0 %v3338
        %5571 = vmatpush1.bf16.msra.mxu0 %v3337
        %5572 = vmatprep.subr.bf16.mxu0 %v3346
        %5573 = vmatpush1.bf16.msra.mxu0 %v3345
        %5574 = vmatprep.subr.bf16.mxu0 %v3354
        %5575 = vmatpush1.bf16.msra.mxu0 %v3353
        %5576 = vmatprep.subr.bf16.mxu0 %v3362
        %5577 = vmatpush1.bf16.msra.mxu0 %v3361
        %5578 = vmatprep.subr.bf16.mxu0 %v3370
        %5579 = vmatpush1.bf16.msra.mxu0 %v3369
        %5580 = vmatprep.subr.bf16.mxu0 %v3378
        %5581 = vmatpush1.bf16.msra.mxu0 %v3377
        %5582 = vmatprep.subr.bf16.mxu0 %v3386
        %5583 = vmatpush1.bf16.msra.mxu0 %v3385
        %5584 = vmatprep.subr.bf16.mxu0 %v3394
        %5585 = vmatpush1.bf16.msra.mxu0 %v3393
        %5586 = vmatprep.mubr.bf16.mxu0 %v986
        %5587 = vmatmul.mubr.bf16.gmra.mrb[0].mxu0 %v985
        %v5588 = vpop.f32.mrb[0].mxu0
        %v5589 = vadd.f32 %v5536, %v5588
        %v5590 = vpop.f32.mrb[0].mxu0
        %v5591 = vadd.f32 %v5538, %v5590
        %v5592 = vpop.f32.mrb[0].mxu0
        %v5593 = vadd.f32 %v5540, %v5592
        %v5594 = vpop.f32.mrb[0].mxu0
        %v5595 = vadd.f32 %v5542, %v5594
        %5596 = vmatprep.mubr.bf16.mxu0 %v997
        %5597 = vmatmul.mubr.bf16.gmra.mrb[0].mxu0 %v996
        %v5598 = vpop.f32.mrb[0].mxu0
        %v5599 = vadd.f32 %v5546, %v5598
        %v5600 = vpop.f32.mrb[0].mxu0
        %v5601 = vadd.f32 %v5548, %v5600
        %v5602 = vpop.f32.mrb[0].mxu0
        %v5603 = vadd.f32 %v5550, %v5602
        %v5604 = vpop.f32.mrb[0].mxu0
        %v5605 = vadd.f32 %v5552, %v5604
        %5606 = vdwg.mxu0
        %5607 = vmatprep.subr.bf16.mxu0 %v3402
        %5608 = vmatpush1.bf16.msra.mxu0 %v3401
        %5609 = vmatprep.subr.bf16.mxu0 %v3410
        %5610 = vmatpush1.bf16.msra.mxu0 %v3409
        %5611 = vmatprep.subr.bf16.mxu0 %v3418
        %5612 = vmatpush1.bf16.msra.mxu0 %v3417
        %5613 = vmatprep.subr.bf16.mxu0 %v3426
        %5614 = vmatpush1.bf16.msra.mxu0 %v3425
        %5615 = vmatprep.subr.bf16.mxu0 %v3434
        %5616 = vmatpush1.bf16.msra.mxu0 %v3433
        %5617 = vmatprep.subr.bf16.mxu0 %v3442
        %5618 = vmatpush1.bf16.msra.mxu0 %v3441
        %5619 = vmatprep.subr.bf16.mxu0 %v3450
        %5620 = vmatpush1.bf16.msra.mxu0 %v3449
        %5621 = vmatprep.subr.bf16.mxu0 %v3458
        %5622 = vmatpush1.bf16.msra.mxu0 %v3457
        %5623 = vmatprep.subr.bf16.mxu0 %v3466
        %5624 = vmatpush1.bf16.msra.mxu0 %v3465
        %5625 = vmatprep.subr.bf16.mxu0 %v3474
        %5626 = vmatpush1.bf16.msra.mxu0 %v3473
        %5627 = vmatprep.subr.bf16.mxu0 %v3482
        %5628 = vmatpush1.bf16.msra.mxu0 %v3481
        %5629 = vmatprep.subr.bf16.mxu0 %v3490
        %5630 = vmatpush1.bf16.msra.mxu0 %v3489
        %5631 = vmatprep.subr.bf16.mxu0 %v3498
        %5632 = vmatpush1.bf16.msra.mxu0 %v3497
        %5633 = vmatprep.subr.bf16.mxu0 %v3506
        %5634 = vmatpush1.bf16.msra.mxu0 %v3505
        %5635 = vmatprep.subr.bf16.mxu0 %v3514
        %5636 = vmatpush1.bf16.msra.mxu0 %v3513
        %5637 = vmatprep.subr.bf16.mxu0 %v3522
        %5638 = vmatpush1.bf16.msra.mxu0 %v3521
        %5639 = vmatprep.mubr.bf16.mxu0 %v988
        %5640 = vmatmul.mubr.bf16.gmra.mrb[0].mxu0 %v987
        %v5641 = vpop.f32.mrb[0].mxu0
        %v5642 = vadd.f32 %v5589, %v5641
        %v5643 = vpop.f32.mrb[0].mxu0
        %v5644 = vadd.f32 %v5591, %v5643
        %v5645 = vpop.f32.mrb[0].mxu0
        %v5646 = vadd.f32 %v5593, %v5645
        %v5647 = vpop.f32.mrb[0].mxu0
        %v5648 = vadd.f32 %v5595, %v5647
        %5649 = vmatprep.mubr.bf16.mxu0 %v999
        %5650 = vmatmul.mubr.bf16.gmra.mrb[0].mxu0 %v998
        %v5651 = vpop.f32.mrb[0].mxu0
        %v5652 = vadd.f32 %v5599, %v5651
        %v5653 = vpop.f32.mrb[0].mxu0
        %v5654 = vadd.f32 %v5601, %v5653
        %v5655 = vpop.f32.mrb[0].mxu0
        %v5656 = vadd.f32 %v5603, %v5655
        %v5657 = vpop.f32.mrb[0].mxu0
        %v5658 = vadd.f32 %v5605, %v5657
        %5659 = vdwg.mxu0
        %5660 = vmatprep.subr.bf16.mxu0 %v3530
        %5661 = vmatpush1.bf16.msra.mxu0 %v3529
        %5662 = vmatprep.subr.bf16.mxu0 %v3538
        %5663 = vmatpush1.bf16.msra.mxu0 %v3537
        %5664 = vmatprep.subr.bf16.mxu0 %v3546
        %5665 = vmatpush1.bf16.msra.mxu0 %v3545
        %5666 = vmatprep.subr.bf16.mxu0 %v3554
        %5667 = vmatpush1.bf16.msra.mxu0 %v3553
        %5668 = vmatprep.subr.bf16.mxu0 %v3562
        %5669 = vmatpush1.bf16.msra.mxu0 %v3561
        %5670 = vmatprep.subr.bf16.mxu0 %v3570
        %5671 = vmatpush1.bf16.msra.mxu0 %v3569
        %5672 = vmatprep.subr.bf16.mxu0 %v3578
        %5673 = vmatpush1.bf16.msra.mxu0 %v3577
        %5674 = vmatprep.subr.bf16.mxu0 %v3586
        %5675 = vmatpush1.bf16.msra.mxu0 %v3585
        %5676 = vmatprep.subr.bf16.mxu0 %v3594
        %5677 = vmatpush1.bf16.msra.mxu0 %v3593
        %5678 = vmatprep.subr.bf16.mxu0 %v3602
        %5679 = vmatpush1.bf16.msra.mxu0 %v3601
        %5680 = vmatprep.subr.bf16.mxu0 %v3610
        %5681 = vmatpush1.bf16.msra.mxu0 %v3609
        %5682 = vmatprep.subr.bf16.mxu0 %v3618
        %5683 = vmatpush1.bf16.msra.mxu0 %v3617
        %5684 = vmatprep.subr.bf16.mxu0 %v3626
        %5685 = vmatpush1.bf16.msra.mxu0 %v3625
        %5686 = vmatprep.subr.bf16.mxu0 %v3634
        %5687 = vmatpush1.bf16.msra.mxu0 %v3633
        %5688 = vmatprep.subr.bf16.mxu0 %v3642
        %5689 = vmatpush1.bf16.msra.mxu0 %v3641
        %5690 = vmatprep.subr.bf16.mxu0 %v3650
        %5691 = vmatpush1.bf16.msra.mxu0 %v3649
        %5692 = vmatprep.mubr.bf16.mxu0 %v990
        %5693 = vmatmul.mubr.bf16.gmra.mrb[0].mxu0 %v989
        %v5694 = vpop.f32.mrb[0].mxu0
        %v5695 = vadd.f32 %v5642, %v5694
        %v5696 = vpop.f32.mrb[0].mxu0
        %v5697 = vadd.f32 %v5644, %v5696
        %v5698 = vpop.f32.mrb[0].mxu0
        %v5699 = vadd.f32 %v5646, %v5698
        %v5700 = vpop.f32.mrb[0].mxu0
        %v5701 = vadd.f32 %v5648, %v5700
        %5702 = vmatprep.mubr.bf16.mxu0 %v1001
        %5703 = vmatmul.mubr.bf16.gmra.mrb[0].mxu0 %v1000
        %v5704 = vpop.f32.mrb[0].mxu0
        %v5705 = vadd.f32 %v5652, %v5704
        %v5706 = vpop.f32.mrb[0].mxu0
        %v5707 = vadd.f32 %v5654, %v5706
        %v5708 = vpop.f32.mrb[0].mxu0
        %v5709 = vadd.f32 %v5656, %v5708
        %v5710 = vpop.f32.mrb[0].mxu0
        %v5711 = vadd.f32 %v5658, %v5710
        %5712 = vdwg.mxu0
        %5713 = vmatprep.subr.bf16.mxu0 %v3658
        %5714 = vmatpush1.bf16.msra.mxu0 %v3657
        %5715 = vmatprep.subr.bf16.mxu0 %v3666
        %5716 = vmatpush1.bf16.msra.mxu0 %v3665
        %5717 = vmatprep.subr.bf16.mxu0 %v3674
        %5718 = vmatpush1.bf16.msra.mxu0 %v3673
        %5719 = vmatprep.subr.bf16.mxu0 %v3682
        %5720 = vmatpush1.bf16.msra.mxu0 %v3681
        %5721 = vmatprep.subr.bf16.mxu0 %v3690
        %5722 = vmatpush1.bf16.msra.mxu0 %v3689
        %5723 = vmatprep.subr.bf16.mxu0 %v3698
        %5724 = vmatpush1.bf16.msra.mxu0 %v3697
        %5725 = vmatprep.subr.bf16.mxu0 %v3706
        %5726 = vmatpush1.bf16.msra.mxu0 %v3705
        %5727 = vmatprep.subr.bf16.mxu0 %v3714
        %5728 = vmatpush1.bf16.msra.mxu0 %v3713
        %5729 = vmatprep.subr.bf16.mxu0 %v3722
        %5730 = vmatpush1.bf16.msra.mxu0 %v3721
        %5731 = vmatprep.subr.bf16.mxu0 %v3730
        %5732 = vmatpush1.bf16.msra.mxu0 %v3729
        %5733 = vmatprep.subr.bf16.mxu0 %v3738
        %5734 = vmatpush1.bf16.msra.mxu0 %v3737
        %5735 = vmatprep.subr.bf16.mxu0 %v3746
        %5736 = vmatpush1.bf16.msra.mxu0 %v3745
        %5737 = vmatprep.subr.bf16.mxu0 %v3754
        %5738 = vmatpush1.bf16.msra.mxu0 %v3753
        %5739 = vmatprep.subr.bf16.mxu0 %v3762
        %5740 = vmatpush1.bf16.msra.mxu0 %v3761
        %5741 = vmatprep.subr.bf16.mxu0 %v3770
        %5742 = vmatpush1.bf16.msra.mxu0 %v3769
        %5743 = vmatprep.subr.bf16.mxu0 %v3778
        %5744 = vmatpush1.bf16.msra.mxu0 %v3777
        %5745 = vmatprep.mubr.bf16.mxu0 %v992
        %5746 = vmatmul.mubr.bf16.gmra.mrb[0].mxu0 %v991
        %v5747 = vpop.f32.mrb[0].mxu0
        %v5748 = vadd.f32 %v5695, %v5747
        %v5749 = vpop.f32.mrb[0].mxu0
        %v5750 = vadd.f32 %v5697, %v5749
        %v5751 = vpop.f32.mrb[0].mxu0
        %v5752 = vadd.f32 %v5699, %v5751
        %v5753 = vpop.f32.mrb[0].mxu0
        %v5754 = vadd.f32 %v5701, %v5753
        %5755 = vmatprep.mubr.bf16.mxu0 %v1003
        %5756 = vmatmul.mubr.bf16.gmra.mrb[0].mxu0 %v1002
        %v5757 = vpop.f32.mrb[0].mxu0
        %v5758 = vadd.f32 %v5705, %v5757
        %v5759 = vpop.f32.mrb[0].mxu0
        %v5760 = vadd.f32 %v5707, %v5759
        %v5761 = vpop.f32.mrb[0].mxu0
        %v5762 = vadd.f32 %v5709, %v5761
        %v5763 = vpop.f32.mrb[0].mxu0
        %v5764 = vadd.f32 %v5711, %v5763
        %5765 = vdwg.mxu0
        %5766 = vmatprep.subr.bf16.mxu0 %v3786
        %5767 = vmatpush1.bf16.msra.mxu0 %v3785
        %5768 = vmatprep.subr.bf16.mxu0 %v3794
        %5769 = vmatpush1.bf16.msra.mxu0 %v3793
        %5770 = vmatprep.subr.bf16.mxu0 %v3802
        %5771 = vmatpush1.bf16.msra.mxu0 %v3801
        %5772 = vmatprep.subr.bf16.mxu0 %v3810
        %5773 = vmatpush1.bf16.msra.mxu0 %v3809
        %5774 = vmatprep.subr.bf16.mxu0 %v3818
        %5775 = vmatpush1.bf16.msra.mxu0 %v3817
        %5776 = vmatprep.subr.bf16.mxu0 %v3826
        %5777 = vmatpush1.bf16.msra.mxu0 %v3825
        %5778 = vmatprep.subr.bf16.mxu0 %v3834
        %5779 = vmatpush1.bf16.msra.mxu0 %v3833
        %5780 = vmatprep.subr.bf16.mxu0 %v3842
        %5781 = vmatpush1.bf16.msra.mxu0 %v3841
        %5782 = vmatprep.subr.bf16.mxu0 0
        %5783 = vmatpush1.bf16.msra.mxu0 0
        %5784 = vmatprep.subr.bf16.mxu0 0
        %5785 = vmatpush1.bf16.msra.mxu0 0
        %5786 = vmatprep.subr.bf16.mxu0 0
        %5787 = vmatpush1.bf16.msra.mxu0 0
        %5788 = vmatprep.subr.bf16.mxu0 0
        %5789 = vmatpush1.bf16.msra.mxu0 0
        %5790 = vmatprep.subr.bf16.mxu0 0
        %5791 = vmatpush1.bf16.msra.mxu0 0
        %5792 = vmatprep.subr.bf16.mxu0 0
        %5793 = vmatpush1.bf16.msra.mxu0 0
        %5794 = vmatprep.subr.bf16.mxu0 0
        %5795 = vmatpush1.bf16.msra.mxu0 0
        %5796 = vmatprep.subr.bf16.mxu0 0
        %5797 = vmatpush1.bf16.msra.mxu0 0
        %5798 = vmatprep.mubr.bf16.mxu0 0
        %5799 = vmatmul.mubr.bf16.gmra.mrb[0].mxu0 %v993
        %v5800 = vpop.f32.mrb[0].mxu0
        %v5801 = vadd.f32 %v5748, %v5800
        %v5802 = vpop.f32.mrb[0].mxu0
        %v5803 = vadd.f32 %v5750, %v5802
        %v5804 = vpop.f32.mrb[0].mxu0
        %v5805 = vadd.f32 %v5752, %v5804
        %v5806 = vpop.f32.mrb[0].mxu0
        %v5807 = vadd.f32 %v5754, %v5806
        %5808 = vmatprep.mubr.bf16.mxu0 0
        %5809 = vmatmul.mubr.bf16.gmra.mrb[0].mxu0 %v1004
        %v5810 = vpop.f32.mrb[0].mxu0
        %v5811 = vadd.f32 %v5758, %v5810
        %v5812 = vpop.f32.mrb[0].mxu0
        %v5813 = vadd.f32 %v5760, %v5812
        %v5814 = vpop.f32.mrb[0].mxu0
        %v5815 = vadd.f32 %v5762, %v5814
        %v5816 = vpop.f32.mrb[0].mxu0
        %v5817 = vadd.f32 %v5764, %v5816
        %5818 = vdwg.mxu0
        %v5819 = vmax.f32 %v4847, 0.0
        %v5820 = vmax.f32 %v4849, 0.0
        %v5821 = vmax.f32 %v5165, 0.0
        %v5822 = vmax.f32 %v5167, 0.0
        %v5823 = vmax.f32 %v5483, 0.0
        %v5824 = vmax.f32 %v5485, 0.0
        %v5825 = vmax.f32 %v5801, 0.0
        %v5826 = vmax.f32 %v5803, 0.0
        %v5827 = vmax.f32 %v4851, 0.0
        %v5828 = vmax.f32 %v4853, 0.0
        %v5829 = vmax.f32 %v5169, 0.0
        %v5830 = vmax.f32 %v5171, 0.0
        %v5831 = vmax.f32 %v5487, 0.0
        %v5832 = vmax.f32 %v5489, 0.0
        %v5833 = vmax.f32 %v5805, 0.0
        %v5834 = vmax.f32 %v5807, 0.0
        %v5835 = vmax.f32 %v4857, 0.0
        %v5836 = vmax.f32 %v4859, 0.0
        %v5837 = vmax.f32 %v5175, 0.0
        %v5838 = vmax.f32 %v5177, 0.0
        %v5839 = vmax.f32 %v5493, 0.0
        %v5840 = vmax.f32 %v5495, 0.0
        %v5841 = vmax.f32 %v5811, 0.0
        %v5842 = vmax.f32 %v5813, 0.0
        %v5843 = vmax.f32 %v4861, 0.0
        %v5844 = vmax.f32 %v4863, 0.0
        %v5845 = vmax.f32 %v5179, 0.0
        %v5846 = vmax.f32 %v5181, 0.0
        %v5847 = vmax.f32 %v5497, 0.0
        %v5848 = vmax.f32 %v5499, 0.0
        %v5849 = vmax.f32 %v5815, 0.0
        %v5850 = vmax.f32 %v5817, 0.0
        %v5851 = vld [vmem:[%s2] sm:$0x1f]
        %vm5852 = vcmask 261120
        %v5854 = vsel %vm5852, %v5851, 0
        %5856 = vmatprep.subr.mxu0 %v5820
        %5857 = vmatpush1.msra.mxu0 %v5819
        %5858 = vmatprep.subr.mxu0 %v5828
        %5859 = vmatpush1.msra.mxu0 %v5827
        %5860 = vmatprep.subr.mxu0 %v5836
        %5861 = vmatpush1.msra.mxu0 %v5835
        %5862 = vmatprep.subr.mxu0 %v5844
        %5863 = vmatpush1.msra.mxu0 %v5843
        %5864 = vmatprep.subr.mxu0 0.0
        %5865 = vmatpush1.msra.mxu0 0.0
        %5866 = vmatprep.subr.mxu0 0.0
        %5867 = vmatpush1.msra.mxu0 0.0
        %5868 = vmatprep.subr.mxu0 0.0
        %5869 = vmatpush1.msra.mxu0 0.0
        %5870 = vmatprep.subr.mxu0 0.0
        %5871 = vmatpush1.msra.mxu0 0.0
        %5872 = vmatprep.subr.mxu0 0.0
        %5873 = vmatpush1.msra.mxu0 0.0
        %5874 = vmatprep.subr.mxu0 0.0
        %5875 = vmatpush1.msra.mxu0 0.0
        %5876 = vmatprep.subr.mxu0 0.0
        %5877 = vmatpush1.msra.mxu0 0.0
        %5878 = vmatprep.subr.mxu0 0.0
        %5879 = vmatpush1.msra.mxu0 0.0
        %5880 = vmatprep.subr.mxu0 0.0
        %5881 = vmatpush1.msra.mxu0 0.0
        %5882 = vmatprep.subr.mxu0 0.0
        %5883 = vmatpush1.msra.mxu0 0.0
        %5884 = vmatprep.subr.mxu0 0.0
        %5885 = vmatpush1.msra.mxu0 0.0
        %5886 = vmatprep.subr.mxu0 0.0
        %5887 = vmatpush1.msra.mxu0 0.0
        %5888 = vmatprep.subr.mxu0 0.0
        %5889 = vmatpush1.msra.mxu0 0.0
        %5890 = vmatprep.subr.mxu0 0.0
        %5891 = vmatpush1.msra.mxu0 0.0
        %5892 = vmatprep.subr.mxu0 0.0
        %5893 = vmatpush1.msra.mxu0 0.0
        %5894 = vmatprep.subr.mxu0 0.0
        %5895 = vmatpush1.msra.mxu0 0.0
        %5896 = vmatprep.subr.mxu0 0.0
        %5897 = vmatpush1.msra.mxu0 0.0
        %5898 = vmatprep.subr.mxu0 0.0
        %5899 = vmatpush1.msra.mxu0 0.0
        %5900 = vmatprep.subr.mxu0 0.0
        %5901 = vmatpush1.msra.mxu0 0.0
        %5902 = vmatprep.subr.mxu0 0.0
        %5903 = vmatpush1.msra.mxu0 0.0
        %5904 = vmatprep.subr.mxu0 0.0
        %5905 = vmatpush1.msra.mxu0 0.0
        %5906 = vmatprep.subr.mxu0 0.0
        %5907 = vmatpush1.msra.mxu0 0.0
        %5908 = vmatprep.subr.mxu0 0.0
        %5909 = vmatpush1.msra.mxu0 0.0
        %5910 = vmatprep.subr.mxu0 0.0
        %5911 = vmatpush1.msra.mxu0 0.0
        %5912 = vmatprep.subr.mxu0 0.0
        %5913 = vmatpush1.msra.mxu0 0.0
        %5914 = vmatprep.subr.mxu0 0.0
        %5915 = vmatpush1.msra.mxu0 0.0
        %5916 = vmatprep.subr.mxu0 0.0
        %5917 = vmatpush1.msra.mxu0 0.0
        %5918 = vmatprep.subr.mxu0 0.0
        %5919 = vmatpush1.msra.mxu0 0.0
        %5920 = vmatprep.mubr.f32.mxu0 0.0
        %5921 = vmatmul.mubr.f32.gmra.mrb[0].mxu0 %v5854
        %v5922 = vpop.f32.mrb[0].mxu0
        %v5923 = vadd.f32 0.0, %v5922
        %v5924 = vpop.f32.mrb[0].mxu0
        %v5925 = vadd.f32 0.0, %v5924
        %5926 = vdwg.mxu0
        %5927 = vmatprep.subr.mxu0 %v5822
        %5928 = vmatpush1.msra.mxu0 %v5821
        %5929 = vmatprep.subr.mxu0 %v5830
        %5930 = vmatpush1.msra.mxu0 %v5829
        %5931 = vmatprep.subr.mxu0 %v5838
        %5932 = vmatpush1.msra.mxu0 %v5837
        %5933 = vmatprep.subr.mxu0 %v5846
        %5934 = vmatpush1.msra.mxu0 %v5845
        %5935 = vmatprep.subr.mxu0 0.0
        %5936 = vmatpush1.msra.mxu0 0.0
        %5937 = vmatprep.subr.mxu0 0.0
        %5938 = vmatpush1.msra.mxu0 0.0
        %5939 = vmatprep.subr.mxu0 0.0
        %5940 = vmatpush1.msra.mxu0 0.0
        %5941 = vmatprep.subr.mxu0 0.0
        %5942 = vmatpush1.msra.mxu0 0.0
        %5943 = vmatprep.subr.mxu0 0.0
        %5944 = vmatpush1.msra.mxu0 0.0
        %5945 = vmatprep.subr.mxu0 0.0
        %5946 = vmatpush1.msra.mxu0 0.0
        %5947 = vmatprep.subr.mxu0 0.0
        %5948 = vmatpush1.msra.mxu0 0.0
        %5949 = vmatprep.subr.mxu0 0.0
        %5950 = vmatpush1.msra.mxu0 0.0
        %5951 = vmatprep.subr.mxu0 0.0
        %5952 = vmatpush1.msra.mxu0 0.0
        %5953 = vmatprep.subr.mxu0 0.0
        %5954 = vmatpush1.msra.mxu0 0.0
        %5955 = vmatprep.subr.mxu0 0.0
        %5956 = vmatpush1.msra.mxu0 0.0
        %5957 = vmatprep.subr.mxu0 0.0
        %5958 = vmatpush1.msra.mxu0 0.0
        %5959 = vmatprep.subr.mxu0 0.0
        %5960 = vmatpush1.msra.mxu0 0.0
        %5961 = vmatprep.subr.mxu0 0.0
        %5962 = vmatpush1.msra.mxu0 0.0
        %5963 = vmatprep.subr.mxu0 0.0
        %5964 = vmatpush1.msra.mxu0 0.0
        %5965 = vmatprep.subr.mxu0 0.0
        %5966 = vmatpush1.msra.mxu0 0.0
        %5967 = vmatprep.subr.mxu0 0.0
        %5968 = vmatpush1.msra.mxu0 0.0
        %5969 = vmatprep.subr.mxu0 0.0
        %5970 = vmatpush1.msra.mxu0 0.0
        %5971 = vmatprep.subr.mxu0 0.0
        %5972 = vmatpush1.msra.mxu0 0.0
        %5973 = vmatprep.subr.mxu0 0.0
        %5974 = vmatpush1.msra.mxu0 0.0
        %5975 = vmatprep.subr.mxu0 0.0
        %5976 = vmatpush1.msra.mxu0 0.0
        %5977 = vmatprep.subr.mxu0 0.0
        %5978 = vmatpush1.msra.mxu0 0.0
        %5979 = vmatprep.subr.mxu0 0.0
        %5980 = vmatpush1.msra.mxu0 0.0
        %5981 = vmatprep.subr.mxu0 0.0
        %5982 = vmatpush1.msra.mxu0 0.0
        %5983 = vmatprep.subr.mxu0 0.0
        %5984 = vmatpush1.msra.mxu0 0.0
        %5985 = vmatprep.subr.mxu0 0.0
        %5986 = vmatpush1.msra.mxu0 0.0
        %5987 = vmatprep.subr.mxu0 0.0
        %5988 = vmatpush1.msra.mxu0 0.0
        %5989 = vmatprep.subr.mxu0 0.0
        %5990 = vmatpush1.msra.mxu0 0.0
        %5991 = vmatprep.mubr.f32.mxu0 0.0
        %5992 = vmatmul.mubr.f32.gmra.mrb[0].mxu0 %v5854
        %v5993 = vpop.f32.mrb[0].mxu0
        %v5994 = vadd.f32 0.0, %v5993
        %v5995 = vpop.f32.mrb[0].mxu0
        %v5996 = vadd.f32 0.0, %v5995
        %5997 = vdwg.mxu0
        %5998 = vmatprep.subr.mxu0 %v5824
        %5999 = vmatpush1.msra.mxu0 %v5823
        %6000 = vmatprep.subr.mxu0 %v5832
        %6001 = vmatpush1.msra.mxu0 %v5831
        %6002 = vmatprep.subr.mxu0 %v5840
        %6003 = vmatpush1.msra.mxu0 %v5839
        %6004 = vmatprep.subr.mxu0 %v5848
        %6005 = vmatpush1.msra.mxu0 %v5847
        %6006 = vmatprep.subr.mxu0 0.0
        %6007 = vmatpush1.msra.mxu0 0.0
        %6008 = vmatprep.subr.mxu0 0.0
        %6009 = vmatpush1.msra.mxu0 0.0
        %6010 = vmatprep.subr.mxu0 0.0
        %6011 = vmatpush1.msra.mxu0 0.0
        %6012 = vmatprep.subr.mxu0 0.0
        %6013 = vmatpush1.msra.mxu0 0.0
        %6014 = vmatprep.subr.mxu0 0.0
        %6015 = vmatpush1.msra.mxu0 0.0
        %6016 = vmatprep.subr.mxu0 0.0
        %6017 = vmatpush1.msra.mxu0 0.0
        %6018 = vmatprep.subr.mxu0 0.0
        %6019 = vmatpush1.msra.mxu0 0.0
        %6020 = vmatprep.subr.mxu0 0.0
        %6021 = vmatpush1.msra.mxu0 0.0
        %6022 = vmatprep.subr.mxu0 0.0
        %6023 = vmatpush1.msra.mxu0 0.0
        %6024 = vmatprep.subr.mxu0 0.0
        %6025 = vmatpush1.msra.mxu0 0.0
        %6026 = vmatprep.subr.mxu0 0.0
        %6027 = vmatpush1.msra.mxu0 0.0
        %6028 = vmatprep.subr.mxu0 0.0
        %6029 = vmatpush1.msra.mxu0 0.0
        %6030 = vmatprep.subr.mxu0 0.0
        %6031 = vmatpush1.msra.mxu0 0.0
        %6032 = vmatprep.subr.mxu0 0.0
        %6033 = vmatpush1.msra.mxu0 0.0
        %6034 = vmatprep.subr.mxu0 0.0
        %6035 = vmatpush1.msra.mxu0 0.0
        %6036 = vmatprep.subr.mxu0 0.0
        %6037 = vmatpush1.msra.mxu0 0.0
        %6038 = vmatprep.subr.mxu0 0.0
        %6039 = vmatpush1.msra.mxu0 0.0
        %6040 = vmatprep.subr.mxu0 0.0
        %6041 = vmatpush1.msra.mxu0 0.0
        %6042 = vmatprep.subr.mxu0 0.0
        %6043 = vmatpush1.msra.mxu0 0.0
        %6044 = vmatprep.subr.mxu0 0.0
        %6045 = vmatpush1.msra.mxu0 0.0
        %6046 = vmatprep.subr.mxu0 0.0
        %6047 = vmatpush1.msra.mxu0 0.0
        %6048 = vmatprep.subr.mxu0 0.0
        %6049 = vmatpush1.msra.mxu0 0.0
        %6050 = vmatprep.subr.mxu0 0.0
        %6051 = vmatpush1.msra.mxu0 0.0
        %6052 = vmatprep.subr.mxu0 0.0
        %6053 = vmatpush1.msra.mxu0 0.0
        %6054 = vmatprep.subr.mxu0 0.0
        %6055 = vmatpush1.msra.mxu0 0.0
        %6056 = vmatprep.subr.mxu0 0.0
        %6057 = vmatpush1.msra.mxu0 0.0
        %6058 = vmatprep.subr.mxu0 0.0
        %6059 = vmatpush1.msra.mxu0 0.0
        %6060 = vmatprep.subr.mxu0 0.0
        %6061 = vmatpush1.msra.mxu0 0.0
        %6062 = vmatprep.mubr.f32.mxu0 0.0
        %6063 = vmatmul.mubr.f32.gmra.mrb[0].mxu0 %v5854
        %v6064 = vpop.f32.mrb[0].mxu0
        %v6065 = vadd.f32 0.0, %v6064
        %v6066 = vpop.f32.mrb[0].mxu0
        %v6067 = vadd.f32 0.0, %v6066
        %6068 = vdwg.mxu0
        %6069 = vmatprep.subr.mxu0 %v5826
        %6070 = vmatpush1.msra.mxu0 %v5825
        %6071 = vmatprep.subr.mxu0 %v5834
        %6072 = vmatpush1.msra.mxu0 %v5833
        %6073 = vmatprep.subr.mxu0 %v5842
        %6074 = vmatpush1.msra.mxu0 %v5841
        %6075 = vmatprep.subr.mxu0 %v5850
        %6076 = vmatpush1.msra.mxu0 %v5849
        %6077 = vmatprep.subr.mxu0 0.0
        %6078 = vmatpush1.msra.mxu0 0.0
        %6079 = vmatprep.subr.mxu0 0.0
        %6080 = vmatpush1.msra.mxu0 0.0
        %6081 = vmatprep.subr.mxu0 0.0
        %6082 = vmatpush1.msra.mxu0 0.0
        %6083 = vmatprep.subr.mxu0 0.0
        %6084 = vmatpush1.msra.mxu0 0.0
        %6085 = vmatprep.subr.mxu0 0.0
        %6086 = vmatpush1.msra.mxu0 0.0
        %6087 = vmatprep.subr.mxu0 0.0
        %6088 = vmatpush1.msra.mxu0 0.0
        %6089 = vmatprep.subr.mxu0 0.0
        %6090 = vmatpush1.msra.mxu0 0.0
        %6091 = vmatprep.subr.mxu0 0.0
        %6092 = vmatpush1.msra.mxu0 0.0
        %6093 = vmatprep.subr.mxu0 0.0
        %6094 = vmatpush1.msra.mxu0 0.0
        %6095 = vmatprep.subr.mxu0 0.0
        %6096 = vmatpush1.msra.mxu0 0.0
        %6097 = vmatprep.subr.mxu0 0.0
        %6098 = vmatpush1.msra.mxu0 0.0
        %6099 = vmatprep.subr.mxu0 0.0
        %6100 = vmatpush1.msra.mxu0 0.0
        %6101 = vmatprep.subr.mxu0 0.0
        %6102 = vmatpush1.msra.mxu0 0.0
        %6103 = vmatprep.subr.mxu0 0.0
        %6104 = vmatpush1.msra.mxu0 0.0
        %6105 = vmatprep.subr.mxu0 0.0
        %6106 = vmatpush1.msra.mxu0 0.0
        %6107 = vmatprep.subr.mxu0 0.0
        %6108 = vmatpush1.msra.mxu0 0.0
        %6109 = vmatprep.subr.mxu0 0.0
        %6110 = vmatpush1.msra.mxu0 0.0
        %6111 = vmatprep.subr.mxu0 0.0
        %6112 = vmatpush1.msra.mxu0 0.0
        %6113 = vmatprep.subr.mxu0 0.0
        %6114 = vmatpush1.msra.mxu0 0.0
        %6115 = vmatprep.subr.mxu0 0.0
        %6116 = vmatpush1.msra.mxu0 0.0
        %6117 = vmatprep.subr.mxu0 0.0
        %6118 = vmatpush1.msra.mxu0 0.0
        %6119 = vmatprep.subr.mxu0 0.0
        %6120 = vmatpush1.msra.mxu0 0.0
        %6121 = vmatprep.subr.mxu0 0.0
        %6122 = vmatpush1.msra.mxu0 0.0
        %6123 = vmatprep.subr.mxu0 0.0
        %6124 = vmatpush1.msra.mxu0 0.0
        %6125 = vmatprep.subr.mxu0 0.0
        %6126 = vmatpush1.msra.mxu0 0.0
        %6127 = vmatprep.subr.mxu0 0.0
        %6128 = vmatpush1.msra.mxu0 0.0
        %6129 = vmatprep.subr.mxu0 0.0
        %6130 = vmatpush1.msra.mxu0 0.0
        %6131 = vmatprep.subr.mxu0 0.0
        %6132 = vmatpush1.msra.mxu0 0.0
        %6133 = vmatprep.mubr.f32.mxu0 0.0
        %6134 = vmatmul.mubr.f32.gmra.mrb[0].mxu0 %v5854
        %v6135 = vpop.f32.mrb[0].mxu0
        %v6136 = vadd.f32 0.0, %v6135
        %v6137 = vpop.f32.mrb[0].mxu0
        %v6138 = vadd.f32 0.0, %v6137
        %6139 = vdwg.mxu0
        %6140 = vmatprep.subr.mxu0 %v5925
        %6141 = vmatpush1.xpose.msra.mxu0 %v5923
        %6142 = vmatprep.subr.mxu0 0.0
        %6143 = vmatpush1.xpose.msra.mxu0 0.0
        %6144 = vmatprep.subr.mxu0 0.0
        %6145 = vmatpush1.xpose.msra.mxu0 0.0
        %6146 = vmatprep.subr.mxu0 0.0
        %6147 = vmatpush1.xpose.msra.mxu0 0.0
        %6148 = vmatprep.subr.mxu0 0.0
        %6149 = vmatpush1.xpose.msra.mxu0 0.0
        %6150 = vmatprep.subr.mxu0 0.0
        %6151 = vmatpush1.xpose.msra.mxu0 0.0
        %6152 = vmatprep.subr.mxu0 0.0
        %6153 = vmatpush1.xpose.msra.mxu0 0.0
        %6154 = vmatprep.subr.mxu0 0.0
        %6155 = vmatpush1.xpose.msra.mxu0 0.0
        %6156 = vmatprep.subr.mxu0 0.0
        %6157 = vmatpush1.xpose.msra.mxu0 0.0
        %6158 = vmatprep.subr.mxu0 0.0
        %6159 = vmatpush1.xpose.msra.mxu0 0.0
        %6160 = vmatprep.subr.mxu0 0.0
        %6161 = vmatpush1.xpose.msra.mxu0 0.0
        %6162 = vmatprep.subr.mxu0 0.0
        %6163 = vmatpush1.xpose.msra.mxu0 0.0
        %6164 = vmatprep.subr.mxu0 0.0
        %6165 = vmatpush1.xpose.msra.mxu0 0.0
        %6166 = vmatprep.subr.mxu0 0.0
        %6167 = vmatpush1.xpose.msra.mxu0 0.0
        %6168 = vmatprep.subr.mxu0 0.0
        %6169 = vmatpush1.xpose.msra.mxu0 0.0
        %6170 = vmatprep.subr.mxu0 0.0
        %6171 = vmatpush1.xpose.msra.mxu0 0.0
        %6172 = vmatprep.subr.mxu0 0.0
        %6173 = vmatpush1.xpose.msra.mxu0 0.0
        %6174 = vmatprep.subr.mxu0 0.0
        %6175 = vmatpush1.xpose.msra.mxu0 0.0
        %6176 = vmatprep.subr.mxu0 0.0
        %6177 = vmatpush1.xpose.msra.mxu0 0.0
        %6178 = vmatprep.subr.mxu0 0.0
        %6179 = vmatpush1.xpose.msra.mxu0 0.0
        %6180 = vmatprep.subr.mxu0 0.0
        %6181 = vmatpush1.xpose.msra.mxu0 0.0
        %6182 = vmatprep.subr.mxu0 0.0
        %6183 = vmatpush1.xpose.msra.mxu0 0.0
        %6184 = vmatprep.subr.mxu0 0.0
        %6185 = vmatpush1.xpose.msra.mxu0 0.0
        %6186 = vmatprep.subr.mxu0 0.0
        %6187 = vmatpush1.xpose.msra.mxu0 0.0
        %6188 = vmatprep.subr.mxu0 0.0
        %6189 = vmatpush1.xpose.msra.mxu0 0.0
        %6190 = vmatprep.subr.mxu0 0.0
        %6191 = vmatpush1.xpose.msra.mxu0 0.0
        %6192 = vmatprep.subr.mxu0 0.0
        %6193 = vmatpush1.xpose.msra.mxu0 0.0
        %6194 = vmatprep.subr.mxu0 0.0
        %6195 = vmatpush1.xpose.msra.mxu0 0.0
        %6196 = vmatprep.subr.mxu0 0.0
        %6197 = vmatpush1.xpose.msra.mxu0 0.0
        %6198 = vmatprep.subr.mxu0 0.0
        %6199 = vmatpush1.xpose.msra.mxu0 0.0
        %6200 = vmatprep.subr.mxu0 0.0
        %6201 = vmatpush1.xpose.msra.mxu0 0.0
        %6202 = vmatprep.subr.mxu0 0.0
        %6203 = vmatpush1.xpose.msra.mxu0 0.0
        %6204 = vmatprep.mubr.f32.mxu0 %v5820
        %6205 = vmatmul.mubr.f32.gmra.mrb[0].mxu0 %v5819
        %v6206 = vpop.f32.mrb[0].mxu0
        %v6207 = vadd.f32 0.0, %v6206
        %v6208 = vpop.f32.mrb[0].mxu0
        %6209 = vmatprep.mubr.f32.mxu0 %v5828
        %6210 = vmatmul.mubr.f32.gmra.mrb[0].mxu0 %v5827
        %v6211 = vpop.f32.mrb[0].mxu0
        %v6212 = vadd.f32 0.0, %v6211
        %v6213 = vpop.f32.mrb[0].mxu0
        %6214 = vmatprep.mubr.f32.mxu0 %v5836
        %6215 = vmatmul.mubr.f32.gmra.mrb[0].mxu0 %v5835
        %v6216 = vpop.f32.mrb[0].mxu0
        %v6217 = vadd.f32 0.0, %v6216
        %v6218 = vpop.f32.mrb[0].mxu0
        %6219 = vmatprep.mubr.f32.mxu0 %v5844
        %6220 = vmatmul.mubr.f32.gmra.mrb[0].mxu0 %v5843
        %v6221 = vpop.f32.mrb[0].mxu0
        %v6222 = vadd.f32 0.0, %v6221
        %v6223 = vpop.f32.mrb[0].mxu0
        %6224 = vdwg.mxu0
        %6225 = vmatprep.subr.mxu0 %v5996
        %6226 = vmatpush1.xpose.msra.mxu0 %v5994
        %6227 = vmatprep.subr.mxu0 0.0
        %6228 = vmatpush1.xpose.msra.mxu0 0.0
        %6229 = vmatprep.subr.mxu0 0.0
        %6230 = vmatpush1.xpose.msra.mxu0 0.0
        %6231 = vmatprep.subr.mxu0 0.0
        %6232 = vmatpush1.xpose.msra.mxu0 0.0
        %6233 = vmatprep.subr.mxu0 0.0
        %6234 = vmatpush1.xpose.msra.mxu0 0.0
        %6235 = vmatprep.subr.mxu0 0.0
        %6236 = vmatpush1.xpose.msra.mxu0 0.0
        %6237 = vmatprep.subr.mxu0 0.0
        %6238 = vmatpush1.xpose.msra.mxu0 0.0
        %6239 = vmatprep.subr.mxu0 0.0
        %6240 = vmatpush1.xpose.msra.mxu0 0.0
        %6241 = vmatprep.subr.mxu0 0.0
        %6242 = vmatpush1.xpose.msra.mxu0 0.0
        %6243 = vmatprep.subr.mxu0 0.0
        %6244 = vmatpush1.xpose.msra.mxu0 0.0
        %6245 = vmatprep.subr.mxu0 0.0
        %6246 = vmatpush1.xpose.msra.mxu0 0.0
        %6247 = vmatprep.subr.mxu0 0.0
        %6248 = vmatpush1.xpose.msra.mxu0 0.0
        %6249 = vmatprep.subr.mxu0 0.0
        %6250 = vmatpush1.xpose.msra.mxu0 0.0
        %6251 = vmatprep.subr.mxu0 0.0
        %6252 = vmatpush1.xpose.msra.mxu0 0.0
        %6253 = vmatprep.subr.mxu0 0.0
        %6254 = vmatpush1.xpose.msra.mxu0 0.0
        %6255 = vmatprep.subr.mxu0 0.0
        %6256 = vmatpush1.xpose.msra.mxu0 0.0
        %6257 = vmatprep.subr.mxu0 0.0
        %6258 = vmatpush1.xpose.msra.mxu0 0.0
        %6259 = vmatprep.subr.mxu0 0.0
        %6260 = vmatpush1.xpose.msra.mxu0 0.0
        %6261 = vmatprep.subr.mxu0 0.0
        %6262 = vmatpush1.xpose.msra.mxu0 0.0
        %6263 = vmatprep.subr.mxu0 0.0
        %6264 = vmatpush1.xpose.msra.mxu0 0.0
        %6265 = vmatprep.subr.mxu0 0.0
        %6266 = vmatpush1.xpose.msra.mxu0 0.0
        %6267 = vmatprep.subr.mxu0 0.0
        %6268 = vmatpush1.xpose.msra.mxu0 0.0
        %6269 = vmatprep.subr.mxu0 0.0
        %6270 = vmatpush1.xpose.msra.mxu0 0.0
        %6271 = vmatprep.subr.mxu0 0.0
        %6272 = vmatpush1.xpose.msra.mxu0 0.0
        %6273 = vmatprep.subr.mxu0 0.0
        %6274 = vmatpush1.xpose.msra.mxu0 0.0
        %6275 = vmatprep.subr.mxu0 0.0
        %6276 = vmatpush1.xpose.msra.mxu0 0.0
        %6277 = vmatprep.subr.mxu0 0.0
        %6278 = vmatpush1.xpose.msra.mxu0 0.0
        %6279 = vmatprep.subr.mxu0 0.0
        %6280 = vmatpush1.xpose.msra.mxu0 0.0
        %6281 = vmatprep.subr.mxu0 0.0
        %6282 = vmatpush1.xpose.msra.mxu0 0.0
        %6283 = vmatprep.subr.mxu0 0.0
        %6284 = vmatpush1.xpose.msra.mxu0 0.0
        %6285 = vmatprep.subr.mxu0 0.0
        %6286 = vmatpush1.xpose.msra.mxu0 0.0
        %6287 = vmatprep.subr.mxu0 0.0
        %6288 = vmatpush1.xpose.msra.mxu0 0.0
        %6289 = vmatprep.mubr.f32.mxu0 %v5822
        %6290 = vmatmul.mubr.f32.gmra.mrb[0].mxu0 %v5821
        %v6291 = vpop.f32.mrb[0].mxu0
        %v6292 = vadd.f32 %v6207, %v6291
        %v6293 = vpop.f32.mrb[0].mxu0
        %6294 = vmatprep.mubr.f32.mxu0 %v5830
        %6295 = vmatmul.mubr.f32.gmra.mrb[0].mxu0 %v5829
        %v6296 = vpop.f32.mrb[0].mxu0
        %v6297 = vadd.f32 %v6212, %v6296
        %v6298 = vpop.f32.mrb[0].mxu0
        %6299 = vmatprep.mubr.f32.mxu0 %v5838
        %6300 = vmatmul.mubr.f32.gmra.mrb[0].mxu0 %v5837
        %v6301 = vpop.f32.mrb[0].mxu0
        %v6302 = vadd.f32 %v6217, %v6301
        %v6303 = vpop.f32.mrb[0].mxu0
        %6304 = vmatprep.mubr.f32.mxu0 %v5846
        %6305 = vmatmul.mubr.f32.gmra.mrb[0].mxu0 %v5845
        %v6306 = vpop.f32.mrb[0].mxu0
        %v6307 = vadd.f32 %v6222, %v6306
        %v6308 = vpop.f32.mrb[0].mxu0
        %6309 = vdwg.mxu0
        %6310 = vmatprep.subr.mxu0 %v6067
        %6311 = vmatpush1.xpose.msra.mxu0 %v6065
        %6312 = vmatprep.subr.mxu0 0.0
        %6313 = vmatpush1.xpose.msra.mxu0 0.0
        %6314 = vmatprep.subr.mxu0 0.0
        %6315 = vmatpush1.xpose.msra.mxu0 0.0
        %6316 = vmatprep.subr.mxu0 0.0
        %6317 = vmatpush1.xpose.msra.mxu0 0.0
        %6318 = vmatprep.subr.mxu0 0.0
        %6319 = vmatpush1.xpose.msra.mxu0 0.0
        %6320 = vmatprep.subr.mxu0 0.0
        %6321 = vmatpush1.xpose.msra.mxu0 0.0
        %6322 = vmatprep.subr.mxu0 0.0
        %6323 = vmatpush1.xpose.msra.mxu0 0.0
        %6324 = vmatprep.subr.mxu0 0.0
        %6325 = vmatpush1.xpose.msra.mxu0 0.0
        %6326 = vmatprep.subr.mxu0 0.0
        %6327 = vmatpush1.xpose.msra.mxu0 0.0
        %6328 = vmatprep.subr.mxu0 0.0
        %6329 = vmatpush1.xpose.msra.mxu0 0.0
        %6330 = vmatprep.subr.mxu0 0.0
        %6331 = vmatpush1.xpose.msra.mxu0 0.0
        %6332 = vmatprep.subr.mxu0 0.0
        %6333 = vmatpush1.xpose.msra.mxu0 0.0
        %6334 = vmatprep.subr.mxu0 0.0
        %6335 = vmatpush1.xpose.msra.mxu0 0.0
        %6336 = vmatprep.subr.mxu0 0.0
        %6337 = vmatpush1.xpose.msra.mxu0 0.0
        %6338 = vmatprep.subr.mxu0 0.0
        %6339 = vmatpush1.xpose.msra.mxu0 0.0
        %6340 = vmatprep.subr.mxu0 0.0
        %6341 = vmatpush1.xpose.msra.mxu0 0.0
        %6342 = vmatprep.subr.mxu0 0.0
        %6343 = vmatpush1.xpose.msra.mxu0 0.0
        %6344 = vmatprep.subr.mxu0 0.0
        %6345 = vmatpush1.xpose.msra.mxu0 0.0
        %6346 = vmatprep.subr.mxu0 0.0
        %6347 = vmatpush1.xpose.msra.mxu0 0.0
        %6348 = vmatprep.subr.mxu0 0.0
        %6349 = vmatpush1.xpose.msra.mxu0 0.0
        %6350 = vmatprep.subr.mxu0 0.0
        %6351 = vmatpush1.xpose.msra.mxu0 0.0
        %6352 = vmatprep.subr.mxu0 0.0
        %6353 = vmatpush1.xpose.msra.mxu0 0.0
        %6354 = vmatprep.subr.mxu0 0.0
        %6355 = vmatpush1.xpose.msra.mxu0 0.0
        %6356 = vmatprep.subr.mxu0 0.0
        %6357 = vmatpush1.xpose.msra.mxu0 0.0
        %6358 = vmatprep.subr.mxu0 0.0
        %6359 = vmatpush1.xpose.msra.mxu0 0.0
        %6360 = vmatprep.subr.mxu0 0.0
        %6361 = vmatpush1.xpose.msra.mxu0 0.0
        %6362 = vmatprep.subr.mxu0 0.0
        %6363 = vmatpush1.xpose.msra.mxu0 0.0
        %6364 = vmatprep.subr.mxu0 0.0
        %6365 = vmatpush1.xpose.msra.mxu0 0.0
        %6366 = vmatprep.subr.mxu0 0.0
        %6367 = vmatpush1.xpose.msra.mxu0 0.0
        %6368 = vmatprep.subr.mxu0 0.0
        %6369 = vmatpush1.xpose.msra.mxu0 0.0
        %6370 = vmatprep.subr.mxu0 0.0
        %6371 = vmatpush1.xpose.msra.mxu0 0.0
        %6372 = vmatprep.subr.mxu0 0.0
        %6373 = vmatpush1.xpose.msra.mxu0 0.0
        %6374 = vmatprep.mubr.f32.mxu0 %v5824
        %6375 = vmatmul.mubr.f32.gmra.mrb[0].mxu0 %v5823
        %v6376 = vpop.f32.mrb[0].mxu0
        %v6377 = vadd.f32 %v6292, %v6376
        %v6378 = vpop.f32.mrb[0].mxu0
        %6379 = vmatprep.mubr.f32.mxu0 %v5832
        %6380 = vmatmul.mubr.f32.gmra.mrb[0].mxu0 %v5831
        %v6381 = vpop.f32.mrb[0].mxu0
        %v6382 = vadd.f32 %v6297, %v6381
        %v6383 = vpop.f32.mrb[0].mxu0
        %6384 = vmatprep.mubr.f32.mxu0 %v5840
        %6385 = vmatmul.mubr.f32.gmra.mrb[0].mxu0 %v5839
        %v6386 = vpop.f32.mrb[0].mxu0
        %v6387 = vadd.f32 %v6302, %v6386
        %v6388 = vpop.f32.mrb[0].mxu0
        %6389 = vmatprep.mubr.f32.mxu0 %v5848
        %6390 = vmatmul.mubr.f32.gmra.mrb[0].mxu0 %v5847
        %v6391 = vpop.f32.mrb[0].mxu0
        %v6392 = vadd.f32 %v6307, %v6391
        %v6393 = vpop.f32.mrb[0].mxu0
        %6394 = vdwg.mxu0
        %6395 = vmatprep.subr.mxu0 %v6138
        %6396 = vmatpush1.xpose.msra.mxu0 %v6136
        %6397 = vmatprep.subr.mxu0 0.0
        %6398 = vmatpush1.xpose.msra.mxu0 0.0
        %6399 = vmatprep.subr.mxu0 0.0
        %6400 = vmatpush1.xpose.msra.mxu0 0.0
        %6401 = vmatprep.subr.mxu0 0.0
        %6402 = vmatpush1.xpose.msra.mxu0 0.0
        %6403 = vmatprep.subr.mxu0 0.0
        %6404 = vmatpush1.xpose.msra.mxu0 0.0
        %6405 = vmatprep.subr.mxu0 0.0
        %6406 = vmatpush1.xpose.msra.mxu0 0.0
        %6407 = vmatprep.subr.mxu0 0.0
        %6408 = vmatpush1.xpose.msra.mxu0 0.0
        %6409 = vmatprep.subr.mxu0 0.0
        %6410 = vmatpush1.xpose.msra.mxu0 0.0
        %6411 = vmatprep.subr.mxu0 0.0
        %6412 = vmatpush1.xpose.msra.mxu0 0.0
        %6413 = vmatprep.subr.mxu0 0.0
        %6414 = vmatpush1.xpose.msra.mxu0 0.0
        %6415 = vmatprep.subr.mxu0 0.0
        %6416 = vmatpush1.xpose.msra.mxu0 0.0
        %6417 = vmatprep.subr.mxu0 0.0
        %6418 = vmatpush1.xpose.msra.mxu0 0.0
        %6419 = vmatprep.subr.mxu0 0.0
        %6420 = vmatpush1.xpose.msra.mxu0 0.0
        %6421 = vmatprep.subr.mxu0 0.0
        %6422 = vmatpush1.xpose.msra.mxu0 0.0
        %6423 = vmatprep.subr.mxu0 0.0
        %6424 = vmatpush1.xpose.msra.mxu0 0.0
        %6425 = vmatprep.subr.mxu0 0.0
        %6426 = vmatpush1.xpose.msra.mxu0 0.0
        %6427 = vmatprep.subr.mxu0 0.0
        %6428 = vmatpush1.xpose.msra.mxu0 0.0
        %6429 = vmatprep.subr.mxu0 0.0
        %6430 = vmatpush1.xpose.msra.mxu0 0.0
        %6431 = vmatprep.subr.mxu0 0.0
        %6432 = vmatpush1.xpose.msra.mxu0 0.0
        %6433 = vmatprep.subr.mxu0 0.0
        %6434 = vmatpush1.xpose.msra.mxu0 0.0
        %6435 = vmatprep.subr.mxu0 0.0
        %6436 = vmatpush1.xpose.msra.mxu0 0.0
        %6437 = vmatprep.subr.mxu0 0.0
        %6438 = vmatpush1.xpose.msra.mxu0 0.0
        %6439 = vmatprep.subr.mxu0 0.0
        %6440 = vmatpush1.xpose.msra.mxu0 0.0
        %6441 = vmatprep.subr.mxu0 0.0
        %6442 = vmatpush1.xpose.msra.mxu0 0.0
        %6443 = vmatprep.subr.mxu0 0.0
        %6444 = vmatpush1.xpose.msra.mxu0 0.0
        %6445 = vmatprep.subr.mxu0 0.0
        %6446 = vmatpush1.xpose.msra.mxu0 0.0
        %6447 = vmatprep.subr.mxu0 0.0
        %6448 = vmatpush1.xpose.msra.mxu0 0.0
        %6449 = vmatprep.subr.mxu0 0.0
        %6450 = vmatpush1.xpose.msra.mxu0 0.0
        %6451 = vmatprep.subr.mxu0 0.0
        %6452 = vmatpush1.xpose.msra.mxu0 0.0
        %6453 = vmatprep.subr.mxu0 0.0
        %6454 = vmatpush1.xpose.msra.mxu0 0.0
        %6455 = vmatprep.subr.mxu0 0.0
        %6456 = vmatpush1.xpose.msra.mxu0 0.0
        %6457 = vmatprep.subr.mxu0 0.0
        %6458 = vmatpush1.xpose.msra.mxu0 0.0
        %6459 = vmatprep.mubr.f32.mxu0 %v5826
        %6460 = vmatmul.mubr.f32.gmra.mrb[0].mxu0 %v5825
        %v6461 = vpop.f32.mrb[0].mxu0
        %v6462 = vadd.f32 %v6377, %v6461
        %v6463 = vpop.f32.mrb[0].mxu0
        %6464 = vmatprep.mubr.f32.mxu0 %v5834
        %6465 = vmatmul.mubr.f32.gmra.mrb[0].mxu0 %v5833
        %v6466 = vpop.f32.mrb[0].mxu0
        %v6467 = vadd.f32 %v6382, %v6466
        %v6468 = vpop.f32.mrb[0].mxu0
        %6469 = vmatprep.mubr.f32.mxu0 %v5842
        %6470 = vmatmul.mubr.f32.gmra.mrb[0].mxu0 %v5841
        %v6471 = vpop.f32.mrb[0].mxu0
        %v6472 = vadd.f32 %v6387, %v6471
        %v6473 = vpop.f32.mrb[0].mxu0
        %6474 = vmatprep.mubr.f32.mxu0 %v5850
        %6475 = vmatmul.mubr.f32.gmra.mrb[0].mxu0 %v5849
        %v6476 = vpop.f32.mrb[0].mxu0
        %v6477 = vadd.f32 %v6392, %v6476
        %v6478 = vpop.f32.mrb[0].mxu0
        %6479 = vdwg.mxu0
        %v6480 = vmul.f32 %v5819, %v5819
        %v6481 = vmul.f32 %v5820, %v5820
        %v6482 = vmul.f32 %v5821, %v5821
        %v6483 = vmul.f32 %v5822, %v5822
        %v6484 = vmul.f32 %v5823, %v5823
        %v6485 = vmul.f32 %v5824, %v5824
        %v6486 = vmul.f32 %v5825, %v5825
        %v6487 = vmul.f32 %v5826, %v5826
        %v6488 = vmul.f32 %v5827, %v5827
        %v6489 = vmul.f32 %v5828, %v5828
        %v6490 = vmul.f32 %v5829, %v5829
        %v6491 = vmul.f32 %v5830, %v5830
        %v6492 = vmul.f32 %v5831, %v5831
        %v6493 = vmul.f32 %v5832, %v5832
        %v6494 = vmul.f32 %v5833, %v5833
        %v6495 = vmul.f32 %v5834, %v5834
        %v6496 = vmul.f32 %v5835, %v5835
        %v6497 = vmul.f32 %v5836, %v5836
        %v6498 = vmul.f32 %v5837, %v5837
        %v6499 = vmul.f32 %v5838, %v5838
        %v6500 = vmul.f32 %v5839, %v5839
        %v6501 = vmul.f32 %v5840, %v5840
        %v6502 = vmul.f32 %v5841, %v5841
        %v6503 = vmul.f32 %v5842, %v5842
        %v6504 = vmul.f32 %v5843, %v5843
        %v6505 = vmul.f32 %v5844, %v5844
        %v6506 = vmul.f32 %v5845, %v5845
        %v6507 = vmul.f32 %v5846, %v5846
        %v6508 = vmul.f32 %v5847, %v5847
        %v6509 = vmul.f32 %v5848, %v5848
        %v6510 = vmul.f32 %v5849, %v5849
        %v6511 = vmul.f32 %v5850, %v5850
        %v6512 = vadd.f32 %v6480, %v6481
        %v6513 = vadd.f32 %v6512, %v6482
        %v6514 = vadd.f32 %v6513, %v6483
        %v6515 = vadd.f32 %v6514, %v6484
        %v6516 = vadd.f32 %v6515, %v6485
        %v6517 = vadd.f32 %v6516, %v6486
        %v6518 = vadd.f32 %v6517, %v6487
        %6519 = vadd.xlane.f32.xlu0 %v6518
        %v6520 = vpop.xlane.xlu0 %6519
        %v6521 = vadd.f32 %v6488, %v6489
        %v6522 = vadd.f32 %v6521, %v6490
        %v6523 = vadd.f32 %v6522, %v6491
        %v6524 = vadd.f32 %v6523, %v6492
        %v6525 = vadd.f32 %v6524, %v6493
        %v6526 = vadd.f32 %v6525, %v6494
        %v6527 = vadd.f32 %v6526, %v6495
        %6528 = vadd.xlane.f32.xlu0 %v6527
        %v6529 = vpop.xlane.xlu0 %6528
        %v6530 = vadd.f32 %v6496, %v6497
        %v6531 = vadd.f32 %v6530, %v6498
        %v6532 = vadd.f32 %v6531, %v6499
        %v6533 = vadd.f32 %v6532, %v6500
        %v6534 = vadd.f32 %v6533, %v6501
        %v6535 = vadd.f32 %v6534, %v6502
        %v6536 = vadd.f32 %v6535, %v6503
        %6537 = vadd.xlane.f32.xlu0 %v6536
        %v6538 = vpop.xlane.xlu0 %6537
        %v6539 = vadd.f32 %v6504, %v6505
        %v6540 = vadd.f32 %v6539, %v6506
        %v6541 = vadd.f32 %v6540, %v6507
        %v6542 = vadd.f32 %v6541, %v6508
        %v6543 = vadd.f32 %v6542, %v6509
        %v6544 = vadd.f32 %v6543, %v6510
        %v6545 = vadd.f32 %v6544, %v6511
        %6546 = vadd.xlane.f32.xlu0 %v6545
        %v6547 = vpop.xlane.xlu0 %6546
        %v6548 = vmul.f32 %v5923, %v5923
        %v6549 = vmul.f32 %v5925, %v5925
        %v6550 = vmul.f32 %v5994, %v5994
        %v6551 = vmul.f32 %v5996, %v5996
        %v6552 = vmul.f32 %v6065, %v6065
        %v6553 = vmul.f32 %v6067, %v6067
        %v6554 = vmul.f32 %v6136, %v6136
        %v6555 = vmul.f32 %v6138, %v6138
        %vm6556 = vcmask 1044480
        %v6557 = vsel %vm6556, %v6548, 0.0
        %v6558 = vsel %vm6556, %v6549, 0.0
        %v6559 = vadd.f32 %v6557, %v6558
        %v6560 = vsel %vm6556, %v6550, 0.0
        %v6561 = vadd.f32 %v6559, %v6560
        %v6562 = vsel %vm6556, %v6551, 0.0
        %v6563 = vadd.f32 %v6561, %v6562
        %v6564 = vsel %vm6556, %v6552, 0.0
        %v6565 = vadd.f32 %v6563, %v6564
        %v6566 = vsel %vm6556, %v6553, 0.0
        %v6567 = vadd.f32 %v6565, %v6566
        %v6568 = vsel %vm6556, %v6554, 0.0
        %v6569 = vadd.f32 %v6567, %v6568
        %v6570 = vsel %vm6556, %v6555, 0.0
        %v6571 = vadd.f32 %v6569, %v6570
        %6572 = vadd.xlane.f32.xlu0 %v6571
        %v6573 = vpop.xlane.xlu0 %6572
        %v6574 = vld [vmem:[#allocation2] sm:$0xff]
        %v6575 = vld [vmem:[#allocation2 + $0x8] sm:$0xff]
        %v6576 = vld [vmem:[#allocation2 + $0x10] sm:$0xff]
        %v6577 = vld [vmem:[#allocation2 + $0x18] sm:$0xff]
        %6578 = vxpose.xlu0.b32.start [1/16] %v6573, 128
        %6579 = vxpose.xlu0.b32.cont [2/16] 0.0, 128
        %6580 = vxpose.xlu0.b32.cont [3/16] 0.0, 128
        %6581 = vxpose.xlu0.b32.cont [4/16] 0.0, 128
        %6582 = vxpose.xlu0.b32.cont [5/16] 0.0, 128
        %6583 = vxpose.xlu0.b32.cont [6/16] 0.0, 128
        %6584 = vxpose.xlu0.b32.cont [7/16] 0.0, 128
        %6585 = vxpose.xlu0.b32.cont [8/16] 0.0, 128
        %6586 = vxpose.xlu0.b32.cont [9/16] 0.0, 128
        %6587 = vxpose.xlu0.b32.cont [10/16] 0.0, 128
        %6588 = vxpose.xlu0.b32.cont [11/16] 0.0, 128
        %6589 = vxpose.xlu0.b32.cont [12/16] 0.0, 128
        %6590 = vxpose.xlu0.b32.cont [13/16] 0.0, 128
        %6591 = vxpose.xlu0.b32.cont [14/16] 0.0, 128
        %6592 = vxpose.xlu0.b32.cont [15/16] 0.0, 128
        %6593 = vxpose.xlu0.b32.end [16/16] 0.0, 128
        %v6594 = vpop.trf.xlu0
        %v6595 = vpop.trf.xlu0
        %v6596 = vpop.trf.xlu0
        %v6597 = vpop.trf.xlu0
        %v6598 = vpop.trf.xlu0
        %v6599 = vpop.trf.xlu0
        %v6600 = vpop.trf.xlu0
        %v6601 = vpop.trf.xlu0
        %v6602 = vpop.trf.xlu0
        %v6603 = vpop.trf.xlu0
        %v6604 = vpop.trf.xlu0
        %v6605 = vpop.trf.xlu0
        %v6606 = vpop.trf.xlu0
        %v6607 = vpop.trf.xlu0
        %v6608 = vpop.trf.xlu0
        %v6609 = vpop.trf.xlu0
        %v6610 = vlaneseq
        %v6611 = vshrl.u32 %v6610, 7
        %v6612 = vsub.s32 0, %v6611
        %v6613 = vrot.slane %v6594, %v6612
        %v6614 = vadd.f32 %v6520, %v6613
        %v6615 = vadd.f32 %v6529, %v6613
        %v6616 = vadd.f32 %v6538, %v6613
        %v6617 = vadd.f32 %v6547, %v6613
        %v6618 = vmul.f32 %v6462, 2.0
        %v6619 = vmul.f32 %v6467, 2.0
        %v6620 = vmul.f32 %v6472, 2.0
        %v6621 = vmul.f32 %v6477, 2.0
        %v6622 = vsub.f32 %v6614, %v6618
        %v6623 = vsub.f32 %v6615, %v6619
        %v6624 = vsub.f32 %v6616, %v6620
        %v6625 = vsub.f32 %v6617, %v6621
        %v6626 = vadd.f32 %v6574, %v6622
        %v6627 = vadd.f32 %v6575, %v6623
        %v6628 = vadd.f32 %v6576, %v6624
        %v6629 = vadd.f32 %v6577, %v6625
        %vm6630 = vcmask 39936
        %6631 = vst.msk [vmem:[#allocation2] sm:$0xff] %vm6630, %v6626
        %6632 = vst.msk [vmem:[#allocation2 + $0x8] sm:$0xff] %vm6630, %v6627
        %6633 = vst.msk [vmem:[#allocation2 + $0x10] sm:$0xff] %vm6630, %v6628
        %6634 = vst.msk [vmem:[#allocation2 + $0x18] sm:$0xff] %vm6630, %v6629
        %p6635 = scmp.eq.s32.totalorder %s17, 1
        // Predicated region
        $region41: #{protonet_forward.1} parent=31 // pred_check
          %p6636 = pneg %p6635
        $region42: #{protonet_forward.1} parent=31 // pred_check_branch
          %6638 = sbr.rel (%p6636) target = $region44
        $region43: #{protonet_forward.1} parent=31 // pred_region
          %v6639 = vld [vmem:[#allocation2] sm:$0xff]
          %v6640 = vld [vmem:[#allocation2 + $0x8] sm:$0xff]
          %v6641 = vld [vmem:[#allocation2 + $0x10] sm:$0xff]
          %v6642 = vld [vmem:[#allocation2 + $0x18] sm:$0xff]
          %v6643 = vsub.f32 0.0, %v6639
          %v6644 = vsub.f32 0.0, %v6640
          %v6645 = vsub.f32 0.0, %v6641
          %v6646 = vsub.f32 0.0, %v6642
          %v6647 = vsel %vm6630, %v6643, -inf
          %6648 = vmax.xlane.f32.xlu0 %v6647
          %v6649 = vpop.xlane.xlu0 %6648
          %v6650 = vsel %vm6630, %v6644, -inf
          %6651 = vmax.xlane.f32.xlu0 %v6650
          %v6652 = vpop.xlane.xlu0 %6651
          %v6653 = vsel %vm6630, %v6645, -inf
          %6654 = vmax.xlane.f32.xlu0 %v6653
          %v6655 = vpop.xlane.xlu0 %6654
          %v6656 = vsel %vm6630, %v6646, -inf
          %6657 = vmax.xlane.f32.xlu0 %v6656
          %v6658 = vpop.xlane.xlu0 %6657
          %v6659 = vsub.f32 %v6643, %v6649
          %v6660 = vsub.f32 %v6644, %v6652
          %v6661 = vsub.f32 %v6645, %v6655
          %v6662 = vsub.f32 %v6646, %v6658
          %v6663 = vmul.f32 %v6659, 1.442695
          %v6664 = vpow.pop %v6663
          %v6665 = vmul.f32 %v6660, 1.442695
          %v6666 = vpow.pop %v6665
          %v6667 = vmul.f32 %v6661, 1.442695
          %v6668 = vpow.pop %v6667
          %v6669 = vmul.f32 %v6662, 1.442695
          %v6670 = vpow.pop %v6669
          %v6671 = vsel %vm6630, %v6664, 0.0
          %6672 = vadd.xlane.f32.xlu0 %v6671
          %v6673 = vpop.xlane.xlu0 %6672
          %v6674 = vsel %vm6630, %v6666, 0.0
          %6675 = vadd.xlane.f32.xlu0 %v6674
          %v6676 = vpop.xlane.xlu0 %6675
          %v6677 = vsel %vm6630, %v6668, 0.0
          %6678 = vadd.xlane.f32.xlu0 %v6677
          %v6679 = vpop.xlane.xlu0 %6678
          %v6680 = vsel %vm6630, %v6670, 0.0
          %6681 = vadd.xlane.f32.xlu0 %v6680
          %v6682 = vpop.xlane.xlu0 %6681
          %v6683 = vlog2.pop %v6673
          %v6684 = vmul.f32 %v6683, 0.6931472
          %v6685 = vlog2.pop %v6676
          %v6686 = vmul.f32 %v6685, 0.6931472
          %v6687 = vlog2.pop %v6679
          %v6688 = vmul.f32 %v6687, 0.6931472
          %v6689 = vlog2.pop %v6682
          %v6690 = vmul.f32 %v6689, 0.6931472
          %v6691 = vadd.f32 %v6684, %v6649
          %v6692 = vadd.f32 %v6686, %v6652
          %v6693 = vadd.f32 %v6688, %v6655
          %v6694 = vadd.f32 %v6690, %v6658
          %v6695 = vsub.f32 %v6643, %v6691
          %v6696 = vsub.f32 %v6644, %v6692
          %v6697 = vsub.f32 %v6645, %v6693
          %v6698 = vsub.f32 %v6646, %v6694
          %6699 = vst.msk [vmem:[%s3] sm:$0xff] %vm6630, %v6695
          %6700 = vst.msk [vmem:[%s3 + $0x8] sm:$0xff] %vm6630, %v6696
          %6701 = vst.msk [vmem:[%s3 + $0x10] sm:$0xff] %vm6630, %v6697
          %6702 = vst.msk [vmem:[%s3 + $0x18] sm:$0xff] %vm6630, %v6698
        $region44: #{protonet_forward.1} parent=31 // pred_fallthru
          _
        // Predicated region
        $region45: #{protonet_forward.1} parent=31 // pred_check
          %p6703 = pneg %p98
        $region46: #{protonet_forward.1} parent=31 // pred_check_branch
          %6705 = sbr.rel (%p6703) target = $region48
        $region47: #{protonet_forward.1} parent=31 // pred_region
          _
        $region48: #{protonet_forward.1} parent=31 // pred_fallthru
          _
        // Predicated region
        $region49: #{protonet_forward.1} parent=31 // pred_check
          %p6706 = pneg %p98
        $region50: #{protonet_forward.1} parent=31 // pred_check_branch
          %6708 = sbr.rel (%p6706) target = $region52
        $region51: #{protonet_forward.1} parent=31 // pred_region
          _
        $region52: #{protonet_forward.1} parent=31 // pred_fallthru
          _
      $region32: #{protonet_forward.1} parent=5 // pred_fallthru
        _
      %p6709 = scmp.le.s32.totalorder 2, %s12
      // Predicated region
      $region53: #{protonet_forward.1} parent=5 // pred_check
        %p6710 = pneg %p6709
      $region54: #{protonet_forward.1} parent=5 // pred_check_branch
        %6712 = sbr.rel (%p6710) target = $region56
      $region55: #{protonet_forward.1} parent=5 // pred_region
        %s6713 = ssub.s32 %s12, 2
      $region56: #{protonet_forward.1} parent=5 // pred_fallthru
        _
    $region6: #{protonet_forward.1} parent=1 // loop_footer
      %s16 = sadd.s32 1, %s12
    $region7: #{protonet_forward.1} parent=1 // loop_footer_branch
      %11 = sbr.rel target = $region3
    $region8: #{protonet_forward.1} parent=1 // loop_exit
      _
    %6714 = vsyncpa [#allocation4], 1
    %s6715 = scalar_lea.sflag [#allocation4], 1
    %6716 = vsyncpa %s6715, 1

</llo_original>
